<compile_context>
chip_gen: v7x
topology: tpu7x:2x2x1
jax: 0.10.0
libtpu: 0.0.40
codegen_flags: <defaults>
</compile_context>

<pallas_src>
import functools
import math

import numpy as np
import jax
import jax.numpy as jnp
from jax.experimental import pallas as pl
from jax.experimental.pallas import tpu as pltpu


LEAKY_SLOPE = 0.2

# Parity bits / tap offsets, enumerated z-major (must match weight packing and glue).
_PARITIES = tuple((pz, py, px) for pz in (0, 1) for py in (0, 1) for px in (0, 1))
_TAPS = tuple((dz, dy, dx) for dz in (0, 1) for dy in (0, 1) for dx in (0, 1))


def _leaky(v):
    return jnp.where(v >= 0, v, LEAKY_SLOPE * v)


def _virtual_cols(din, dp):
    """Number of 'virtual' output columns (padded-radix voxel positions)."""
    return (din - 1) * (dp * dp + dp + 1) + 1


def _vmem_limit(needed_bytes):
    """Generation-aware VMEM request: never more than half the physical VMEM
    (<=32 MiB on v7x), never less than a safe 16 MiB floor."""
    try:
        info = pltpu.get_tpu_info()
        cap = int(getattr(info, "vmem_capacity_bytes", 64 << 20)) // 2
    except Exception:  # interpret mode / query unavailable -> conservative cap
        cap = 32 << 20
    want = max(4 * int(needed_bytes) + (4 << 20), 16 << 20)
    return int(min(want, max(cap, 16 << 20)))


# ----------------------------- Pallas kernels --------------------------------

def _deconv_subpixel_kernel(x_ref, w_ref, b_ref, o_ref, *, dp, u, apply_act):
    """One ConvTranspose3d(4, stride 2, pad 1) layer via the sub-pixel +
    tap-shift ("virtual column") decomposition.

    x_ref: (C_in, dp^3) bf16 -- flattened zero-padded input volume (whole, VMEM)
    w_ref: (64, C_out, C_in) bf16 -- parity-major, tap-minor weight slices
    b_ref: (C_out, 1) f32
    o_ref: (8, C_out, U) -- per-parity outputs over virtual voxel columns
    """
    bias = b_ref[...]
    for p_idx, (bz, by, bx) in enumerate(_PARITIES):
        acc = None
        for d_idx, (dz, dy, dx) in enumerate(_TAPS):
            s = (bz + dz) * dp * dp + (by + dy) * dp + (bx + dx)  # static shift
            contrib = jnp.dot(w_ref[p_idx * 8 + d_idx], x_ref[:, s:s + u],
                              preferred_element_type=jnp.float32)
            acc = contrib if acc is None else acc + contrib
        y = acc + bias
        if apply_act:
            y = _leaky(y)
        o_ref[p_idx] = y.astype(o_ref.dtype)


def _last_deconv_softmax_kernel(x_ref, w_ref, b_ref, prior_ref,
                                delta_ref, dec_ref, *, dp, u):
    """Last deconv (no activation) with fused bias + log(prior) + channel
    softmax.  Same virtual-column decomposition as the middle layers; the
    softmax denominator uses the EUP approx reciprocal."""
    bias = b_ref[...]
    for p_idx, (bz, by, bx) in enumerate(_PARITIES):
        acc = None
        for d_idx, (dz, dy, dx) in enumerate(_TAPS):
            s = (bz + dz) * dp * dp + (by + dy) * dp + (bx + dx)
            contrib = jnp.dot(w_ref[p_idx * 8 + d_idx], x_ref[:, s:s + u],
                              preferred_element_type=jnp.float32)
            acc = contrib if acc is None else acc + contrib
        d = acc + bias
        delta_ref[p_idx] = d
        # priors are strictly positive (the PyTorch module takes their log);
        # invalid virtual columns carry prior==1 -> log 0, discarded host-side.
        z = d + jnp.log(prior_ref[p_idx])
        z = z - jnp.max(z, axis=0, keepdims=True)
        e = jnp.exp(z)
        inv = pl.reciprocal(jnp.sum(e, axis=0, keepdims=True), approx=True)
        dec_ref[p_idx] = e * inv


def deconv_subpixel(xflat, w_taps, bias_col, *, din, apply_act=True,
                    out_dtype=jnp.bfloat16):
    """xflat: (C_in, (din+2)^3) bf16, w_taps: (64, C_out, C_in) bf16,
    bias_col: (C_out, 1) f32 -> (8, C_out, U) out_dtype (LeakyReLU fused)."""
    dp = din + 2
    c_in, flat = xflat.shape
    assert flat == dp ** 3
    c_out = w_taps.shape[1]
    assert w_taps.shape == (64, c_out, c_in) and bias_col.shape == (c_out, 1)
    u = _virtual_cols(din, dp)
    needed = (xflat.size * 2 + w_taps.size * 2 + bias_col.size * 4
              + 8 * c_out * u * jnp.dtype(out_dtype).itemsize)
    return pl.pallas_call(
        functools.partial(_deconv_subpixel_kernel, dp=dp, u=u,
                          apply_act=apply_act),
        out_shape=jax.ShapeDtypeStruct((8, c_out, u), out_dtype),
        in_specs=[pl.BlockSpec(memory_space=pltpu.MemorySpace.VMEM)] * 3,
        out_specs=pl.BlockSpec(memory_space=pltpu.MemorySpace.VMEM),
        compiler_params=pltpu.CompilerParams(
            vmem_limit_bytes=_vmem_limit(needed)),
    )(xflat, w_taps, bias_col)


def last_deconv_softmax(xflat, w_taps, bias_col, prior_virtual, *, din):
    """Last layer with fused softmax.  prior_virtual: (8, C_out, U) f32,
    strictly positive.  Returns (delta, decoded), both (8, C_out, U) f32."""
    dp = din + 2
    c_in, flat = xflat.shape
    assert flat == dp ** 3
    c_out = w_taps.shape[1]
    u = _virtual_cols(din, dp)
    assert w_taps.shape == (64, c_out, c_in) and bias_col.shape == (c_out, 1)
    assert prior_virtual.shape == (8, c_out, u)
    needed = (xflat.size * 2 + w_taps.size * 2 + bias_col.size * 4
              + prior_virtual.size * 4 + 2 * 8 * c_out * u * 4)
    return pl.pallas_call(
        functools.partial(_last_deconv_softmax_kernel, dp=dp, u=u),
        out_shape=(jax.ShapeDtypeStruct((8, c_out, u), jnp.float32),
                   jax.ShapeDtypeStruct((8, c_out, u), jnp.float32)),
        in_specs=[pl.BlockSpec(memory_space=pltpu.MemorySpace.VMEM)] * 4,
        out_specs=(pl.BlockSpec(memory_space=pltpu.MemorySpace.VMEM),
                   pl.BlockSpec(memory_space=pltpu.MemorySpace.VMEM)),
        compiler_params=pltpu.CompilerParams(
            vmem_limit_bytes=_vmem_limit(needed)),
    )(xflat, w_taps, bias_col, prior_virtual)


# -------------------- XLA glue (activation-sized permutations) ---------------

def _pad_flatten(x_cdhw, dtype=jnp.bfloat16):
    """(C, D, D, D) -> (C, (D+2)^3) bf16, zero padding of 1 on every side."""
    c, d = x_cdhw.shape[0], x_cdhw.shape[1]
    xp = jnp.pad(x_cdhw, ((0, 0), (1, 1), (1, 1), (1, 1)))
    return xp.reshape(c, (d + 2) ** 3).astype(dtype)


def _virtual_to_dense(v_all, din, dp):
    """(8, C, U) per-parity virtual columns -> dense (C, 2*din, 2*din, 2*din)."""
    p8, c, u = v_all.shape
    assert p8 == 8 and u == _virtual_cols(din, dp)
    vp = jnp.pad(v_all, ((0, 0), (0, 0), (0, dp ** 3 - u)))
    vol = vp.reshape(8, c, dp, dp, dp)[:, :, :din, :din, :din]
    a = vol.reshape(2, 2, 2, c, din, din, din).transpose(3, 4, 0, 5, 1, 6, 2)
    return a.reshape(c, 2 * din, 2 * din, 2 * din)


def _prior_to_virtual(prior_cdhw, din, dp):
    """(C, 2*din, ...) strictly-positive priors -> (8, C, U) in the kernels'
    virtual-column layout; invalid columns are filled with 1 (log -> 0)."""
    c = prior_cdhw.shape[0]
    u = _virtual_cols(din, dp)
    parts = []
    for pz, py, px in _PARITIES:
        pv = prior_cdhw[:, pz::2, py::2, px::2]                  # (C, din^3)
        pv = jnp.pad(pv, ((0, 0), (0, dp - din), (0, dp - din), (0, dp - din)),
                     constant_values=1.0)
        parts.append(pv.reshape(c, dp ** 3)[:, :u])
    return jnp.stack(parts, axis=0)


def _pack_subpixel_taps(w):
    """w: (C_in, C_out, 4, 4, 4) PyTorch ConvTranspose3d weight ->
    (64, C_out, C_in) bf16, parity-major / tap-minor, matching the kernels.
    Kernel-tap index for parity bit b and tap offset d in {0,1}: k = 3 - b - 2d."""
    k = lambda b, d: 3 - b - 2 * d
    mats = []
    for bz, by, bx in _PARITIES:
        for dz, dy, dx in _TAPS:
            mats.append(jnp.transpose(w[:, :, k(bz, dz), k(by, dy), k(bx, dx)]))
    return jnp.stack(mats, axis=0).astype(jnp.bfloat16)


# --------------------------- Module (parameters) -----------------------------

class MotionWeightVolumeDecoderPallas:
    """Pallas port of MotionWeightVolumeDecoder (ConvDecoder3D decoder):
      Linear(E, hidden) + LeakyReLU(0.2) -> view(-1, hidden, 1, 1, 1)
      -> [ConvTranspose3d(c, c//2, 4, 2, 1) + LeakyReLU(0.2)] x (log2(V) - 1)
      -> ConvTranspose3d(c_last, total_bones + 1, 4, 2, 1)
    followed by softmax(delta + log(priors), dim=1).
    (hidden is 1024 in the original; scaled down for this small demo.)"""

    def __init__(self, key, embedding_size=32, volume_size=8, total_bones=4,
                 mlp_hidden=64):
        assert volume_size >= 4 and volume_size & (volume_size - 1) == 0
        self.embedding_size = embedding_size
        self.volume_size = volume_size
        self.total_bones = total_bones
        self.mlp_hidden = mlp_hidden
        voxel_channels = total_bones + 1
        n_conv = int(math.log2(volume_size))

        scale = 0.05
        keys = jax.random.split(key, 3 + 2 * n_conv)
        self.const_embedding = jax.random.normal(keys[0], (embedding_size,),
                                                 jnp.float32)
        w_mlp = jax.random.normal(keys[1], (embedding_size, mlp_hidden),
                                  jnp.float32) * scale
        self.b_mlp = jax.random.normal(keys[2], (mlp_hidden,), jnp.float32) * scale

        self.conv_w = []          # raw ConvTranspose3d weights (C_in, C_out, 4,4,4), bf16
        self.conv_b = []          # biases, f32
        c_in = mlp_hidden
        for i in range(n_conv):
            last = (i == n_conv - 1)
            c_out = voxel_channels if last else c_in // 2
            w = jax.random.normal(keys[3 + 2 * i], (c_in, c_out, 4, 4, 4),
                                  jnp.float32) * scale
            b = jax.random.normal(keys[4 + 2 * i], (c_out,), jnp.float32) * scale
            self.conv_w.append(w.astype(jnp.bfloat16))
            self.conv_b.append(b)
            c_in = c_out

        # ---- derived operands (bf16 matmul inputs, f32 biases) ----
        self.emb_row = self.const_embedding[None, :].astype(jnp.bfloat16)
        self.w_mlp_bf16 = w_mlp.astype(jnp.bfloat16)
        self.b_mlp_row = self.b_mlp[None, :]

        # first deconv (1x1x1 input) collapses to a dense (hidden, 8*C1) matmul;
        # per-axis parity p uses kernel tap 1 (p=0) / 2 (p=1).
        w0 = self.conv_w[0]
        c1 = w0.shape[1]
        taps = (1, 2)
        self.w_c0 = jnp.stack(
            [w0[:, :, taps[pz], taps[py], taps[px]] for pz, py, px in _PARITIES],
            axis=1).reshape(mlp_hidden, 8 * c1)
        self.b_c0_row = jnp.tile(self.conv_b[0], 8)[None, :]
        self.c1 = c1

        # middle deconvs: (64, C_out, C_in) parity/tap weight slices + bias col
        self.mid_layers = [
            (_pack_subpixel_taps(self.conv_w[i]), self.conv_b[i][:, None])
            for i in range(1, n_conv - 1)
        ]

        # last deconv: same packing, softmax fused in-kernel
        self.w_last_taps = _pack_subpixel_taps(self.conv_w[-1])
        self.b_last_col = self.conv_b[-1][:, None]

    # ------------------------------ forward ----------------------------------
    def forward(self, motion_weights_priors):
        """motion_weights_priors: (1, total_bones+1, V, V, V), strictly positive."""
        # MLP + first deconv (spatial 1 -> 2): M=1 matmuls, plain XLA dots
        # (a pallas_call launch costs more than this math).
        h = jnp.dot(self.emb_row, self.w_mlp_bf16,
                    preferred_element_type=jnp.float32) + self.b_mlp_row
        h = _leaky(h)
        y0 = jnp.dot(h.astype(jnp.bfloat16), self.w_c0,
                     preferred_element_type=jnp.float32) + self.b_c0_row
        y0 = _leaky(y0)
        x = y0.reshape(2, 2, 2, self.c1).transpose(3, 0, 1, 2)   # (C1, 2, 2, 2)

        # middle deconvs: one pallas_call each, bf16 epilogue, no patch HBM traffic
        for w_taps, bias_col in self.mid_layers:
            din = x.shape[1]
            xflat = _pad_flatten(x)                              # (C_in, (din+2)^3) bf16
            v = deconv_subpixel(xflat, w_taps, bias_col, din=din,
                                apply_act=True, out_dtype=jnp.bfloat16)
            x = _virtual_to_dense(v, din, din + 2)               # (C_out, 2*din, ...)

        # last deconv with fused bias + log(prior) + channel softmax
        din = x.shape[1]
        dp = din + 2
        xflat = _pad_flatten(x)
        prior_v = _prior_to_virtual(motion_weights_priors[0], din, dp)
        delta_v, dec_v = last_deconv_softmax(
            xflat, self.w_last_taps, self.b_last_col, prior_v, din=din)
        delta = _virtual_to_dense(delta_v, din, dp)[None]
        decoded_weights = _virtual_to_dense(dec_v, din, dp)[None]
        return decoded_weights, delta

    # ------------- plain-JAX/XLA reference (independent conv lowering) -------
    def forward_ref(self, motion_weights_priors):
        leaky = lambda v: jnp.where(v >= 0, v, LEAKY_SLOPE * v)
        # mirror the bf16 rounding the Pallas path applies to matmul inputs
        bf = lambda a: a.astype(jnp.bfloat16).astype(jnp.float32)

        h = leaky(bf(self.const_embedding)[None, :]
                  @ self.w_mlp_bf16.astype(jnp.float32) + self.b_mlp[None, :])
        x = bf(h).reshape(1, self.mlp_hidden, 1, 1, 1)
        n = len(self.conv_w)
        for i, (w, b) in enumerate(zip(self.conv_w, self.conv_b)):
            # ConvTranspose3d(k=4, s=2, p=1) == dilate(2) + pad 2 + conv with
            # spatially-flipped, channel-swapped kernel.
            w_lax = jnp.flip(w.astype(jnp.float32),
                             axis=(2, 3, 4)).transpose(1, 0, 2, 3, 4)
            y = jax.lax.conv_general_dilated(
                x, w_lax, window_strides=(1, 1, 1), padding=[(2, 2)] * 3,
                lhs_dilation=(2, 2, 2),
                dimension_numbers=('NCDHW', 'OIDHW', 'NCDHW'))
            y = y + b.reshape(1, -1, 1, 1, 1)
            x = bf(leaky(y)) if i < n - 1 else y
        delta = x
        decoded = jax.nn.softmax(delta + jnp.log(motion_weights_priors), axis=1)
        return decoded, delta


# ----------------------------------- main -------------------------------------

if __name__ == "__main__":
    key = jax.random.PRNGKey(0)
    k_params, k_prior = jax.random.split(key)

    EMB, VOL, BONES = 32, 8, 4
    model = MotionWeightVolumeDecoderPallas(k_params, embedding_size=EMB,
                                            volume_size=VOL, total_bones=BONES,
                                            mlp_hidden=64)

    # strictly-positive priors (the module takes log of them)
    motion_weights_priors = jax.random.uniform(
        k_prior, (1, BONES + 1, VOL, VOL, VOL),
        dtype=jnp.float32, minval=0.05, maxval=1.0)

    decoded_weights, delta = model.forward(motion_weights_priors)
    jax.block_until_ready((decoded_weights, delta))

    ref_decoded, ref_delta = model.forward_ref(motion_weights_priors)
    jax.block_until_ready((ref_decoded, ref_delta))

    assert decoded_weights.shape == (1, BONES + 1, VOL, VOL, VOL)
    assert delta.shape == (1, BONES + 1, VOL, VOL, VOL)
    assert bool(jnp.all(jnp.isfinite(decoded_weights)))
    assert bool(jnp.all(jnp.isfinite(delta)))
    # softmax over the channel axis sums to ~1 (approx reciprocal in the kernel)
    assert np.allclose(np.asarray(jnp.sum(decoded_weights, axis=1)), 1.0,
                       atol=5e-3)
    # match the independent XLA ConvTranspose3d reference
    assert np.allclose(np.asarray(delta), np.asarray(ref_delta),
                       rtol=2e-2, atol=2e-3)
    assert np.allclose(np.asarray(decoded_weights), np.asarray(ref_decoded),
                       rtol=2e-2, atol=5e-3)

    print("KERNEL_OK")
</pallas_src>

<mosaic_0001>
module attributes {stable_mosaic.version = 11 : i64} {
  func.func @_deconv_subpixel_kernel(%arg0: memref<32x64xbf16, #tpu.memory_space<vmem>>, %arg1: memref<64x16x32xbf16, #tpu.memory_space<vmem>>, %arg2: memref<16x1xf32, #tpu.memory_space<vmem>>, %arg3: memref<8x16x22xbf16, #tpu.memory_space<vmem>>) attributes {dimension_semantics = [], scalar_prefetch = 0 : i64, scratch_operands = 0 : i64, tpu.core_type = #tpu.core_type<tc>} {
    %c0 = arith.constant 0 : index
    %c0_0 = arith.constant 0 : index
    %0 = vector.load %arg2[%c0, %c0_0] : memref<16x1xf32, #tpu.memory_space<vmem>>, vector<16x1xf32>
    %c0_1 = arith.constant 0 : index
    %c0_2 = arith.constant 0 : index
    %c0_3 = arith.constant 0 : index
    %1 = vector.load %arg1[%c0_1, %c0_2, %c0_3] : memref<64x16x32xbf16, #tpu.memory_space<vmem>>, vector<1x16x32xbf16>
    %2 = vector.shape_cast %1 : vector<1x16x32xbf16> to vector<16x32xbf16>
    %c0_4 = arith.constant 0 : index
    %c0_5 = arith.constant 0 : index
    %3 = vector.load %arg0[%c0_4, %c0_5] : memref<32x64xbf16, #tpu.memory_space<vmem>>, vector<32x22xbf16>
    %cst = arith.constant dense<0.000000e+00> : vector<16x22xf32>
    %4 = tpu.matmul %2, %3, %cst {dimension_numbers = #tpu.dot_dimension_numbers<[1], [0], [0], [1], [0, 0, 1, 1], [], []>} : vector<16x32xbf16>, vector<32x22xbf16>, vector<16x22xf32> -> vector<16x22xf32>
    %c1 = arith.constant 1 : index
    %c0_6 = arith.constant 0 : index
    %c0_7 = arith.constant 0 : index
    %5 = vector.load %arg1[%c1, %c0_6, %c0_7] : memref<64x16x32xbf16, #tpu.memory_space<vmem>>, vector<1x16x32xbf16>
    %6 = vector.shape_cast %5 : vector<1x16x32xbf16> to vector<16x32xbf16>
    %c0_8 = arith.constant 0 : index
    %c1_9 = arith.constant 1 : index
    %7 = vector.load %arg0[%c0_8, %c1_9] : memref<32x64xbf16, #tpu.memory_space<vmem>>, vector<32x22xbf16>
    %cst_10 = arith.constant dense<0.000000e+00> : vector<16x22xf32>
    %8 = tpu.matmul %6, %7, %cst_10 {dimension_numbers = #tpu.dot_dimension_numbers<[1], [0], [0], [1], [0, 0, 1, 1], [], []>} : vector<16x32xbf16>, vector<32x22xbf16>, vector<16x22xf32> -> vector<16x22xf32>
    %9 = arith.addf %4, %8 : vector<16x22xf32>
    %c2 = arith.constant 2 : index
    %c0_11 = arith.constant 0 : index
    %c0_12 = arith.constant 0 : index
    %10 = vector.load %arg1[%c2, %c0_11, %c0_12] : memref<64x16x32xbf16, #tpu.memory_space<vmem>>, vector<1x16x32xbf16>
    %11 = vector.shape_cast %10 : vector<1x16x32xbf16> to vector<16x32xbf16>
    %c0_13 = arith.constant 0 : index
    %c4 = arith.constant 4 : index
    %12 = vector.load %arg0[%c0_13, %c4] : memref<32x64xbf16, #tpu.memory_space<vmem>>, vector<32x22xbf16>
    %cst_14 = arith.constant dense<0.000000e+00> : vector<16x22xf32>
    %13 = tpu.matmul %11, %12, %cst_14 {dimension_numbers = #tpu.dot_dimension_numbers<[1], [0], [0], [1], [0, 0, 1, 1], [], []>} : vector<16x32xbf16>, vector<32x22xbf16>, vector<16x22xf32> -> vector<16x22xf32>
    %14 = arith.addf %9, %13 : vector<16x22xf32>
    %c3 = arith.constant 3 : index
    %c0_15 = arith.constant 0 : index
    %c0_16 = arith.constant 0 : index
    %15 = vector.load %arg1[%c3, %c0_15, %c0_16] : memref<64x16x32xbf16, #tpu.memory_space<vmem>>, vector<1x16x32xbf16>
    %16 = vector.shape_cast %15 : vector<1x16x32xbf16> to vector<16x32xbf16>
    %c0_17 = arith.constant 0 : index
    %c5 = arith.constant 5 : index
    %17 = vector.load %arg0[%c0_17, %c5] : memref<32x64xbf16, #tpu.memory_space<vmem>>, vector<32x22xbf16>
    %cst_18 = arith.constant dense<0.000000e+00> : vector<16x22xf32>
    %18 = tpu.matmul %16, %17, %cst_18 {dimension_numbers = #tpu.dot_dimension_numbers<[1], [0], [0], [1], [0, 0, 1, 1], [], []>} : vector<16x32xbf16>, vector<32x22xbf16>, vector<16x22xf32> -> vector<16x22xf32>
    %19 = arith.addf %14, %18 : vector<16x22xf32>
    %c4_19 = arith.constant 4 : index
    %c0_20 = arith.constant 0 : index
    %c0_21 = arith.constant 0 : index
    %20 = vector.load %arg1[%c4_19, %c0_20, %c0_21] : memref<64x16x32xbf16, #tpu.memory_space<vmem>>, vector<1x16x32xbf16>
    %21 = vector.shape_cast %20 : vector<1x16x32xbf16> to vector<16x32xbf16>
    %c0_22 = arith.constant 0 : index
    %c16 = arith.constant 16 : index
    %22 = vector.load %arg0[%c0_22, %c16] : memref<32x64xbf16, #tpu.memory_space<vmem>>, vector<32x22xbf16>
    %cst_23 = arith.constant dense<0.000000e+00> : vector<16x22xf32>
    %23 = tpu.matmul %21, %22, %cst_23 {dimension_numbers = #tpu.dot_dimension_numbers<[1], [0], [0], [1], [0, 0, 1, 1], [], []>} : vector<16x32xbf16>, vector<32x22xbf16>, vector<16x22xf32> -> vector<16x22xf32>
    %24 = arith.addf %19, %23 : vector<16x22xf32>
    %c5_24 = arith.constant 5 : index
    %c0_25 = arith.constant 0 : index
    %c0_26 = arith.constant 0 : index
    %25 = vector.load %arg1[%c5_24, %c0_25, %c0_26] : memref<64x16x32xbf16, #tpu.memory_space<vmem>>, vector<1x16x32xbf16>
    %26 = vector.shape_cast %25 : vector<1x16x32xbf16> to vector<16x32xbf16>
    %c0_27 = arith.constant 0 : index
    %c17 = arith.constant 17 : index
    %27 = vector.load %arg0[%c0_27, %c17] : memref<32x64xbf16, #tpu.memory_space<vmem>>, vector<32x22xbf16>
    %cst_28 = arith.constant dense<0.000000e+00> : vector<16x22xf32>
    %28 = tpu.matmul %26, %27, %cst_28 {dimension_numbers = #tpu.dot_dimension_numbers<[1], [0], [0], [1], [0, 0, 1, 1], [], []>} : vector<16x32xbf16>, vector<32x22xbf16>, vector<16x22xf32> -> vector<16x22xf32>
    %29 = arith.addf %24, %28 : vector<16x22xf32>
    %c6 = arith.constant 6 : index
    %c0_29 = arith.constant 0 : index
    %c0_30 = arith.constant 0 : index
    %30 = vector.load %arg1[%c6, %c0_29, %c0_30] : memref<64x16x32xbf16, #tpu.memory_space<vmem>>, vector<1x16x32xbf16>
    %31 = vector.shape_cast %30 : vector<1x16x32xbf16> to vector<16x32xbf16>
    %c0_31 = arith.constant 0 : index
    %c20 = arith.constant 20 : index
    %32 = vector.load %arg0[%c0_31, %c20] : memref<32x64xbf16, #tpu.memory_space<vmem>>, vector<32x22xbf16>
    %cst_32 = arith.constant dense<0.000000e+00> : vector<16x22xf32>
    %33 = tpu.matmul %31, %32, %cst_32 {dimension_numbers = #tpu.dot_dimension_numbers<[1], [0], [0], [1], [0, 0, 1, 1], [], []>} : vector<16x32xbf16>, vector<32x22xbf16>, vector<16x22xf32> -> vector<16x22xf32>
    %34 = arith.addf %29, %33 : vector<16x22xf32>
    %c7 = arith.constant 7 : index
    %c0_33 = arith.constant 0 : index
    %c0_34 = arith.constant 0 : index
    %35 = vector.load %arg1[%c7, %c0_33, %c0_34] : memref<64x16x32xbf16, #tpu.memory_space<vmem>>, vector<1x16x32xbf16>
    %36 = vector.shape_cast %35 : vector<1x16x32xbf16> to vector<16x32xbf16>
    %c0_35 = arith.constant 0 : index
    %c21 = arith.constant 21 : index
    %37 = vector.load %arg0[%c0_35, %c21] : memref<32x64xbf16, #tpu.memory_space<vmem>>, vector<32x22xbf16>
    %cst_36 = arith.constant dense<0.000000e+00> : vector<16x22xf32>
    %38 = tpu.matmul %36, %37, %cst_36 {dimension_numbers = #tpu.dot_dimension_numbers<[1], [0], [0], [1], [0, 0, 1, 1], [], []>} : vector<16x32xbf16>, vector<32x22xbf16>, vector<16x22xf32> -> vector<16x22xf32>
    %39 = arith.addf %34, %38 : vector<16x22xf32>
    %40 = vector.broadcast %0 : vector<16x1xf32> to vector<16x22xf32>
    %41 = arith.addf %39, %40 : vector<16x22xf32>
    %cst_37 = arith.constant 0.000000e+00 : f32
    %42 = vector.broadcast %cst_37 : f32 to vector<16x22xf32>
    %43 = arith.cmpf oge, %41, %42 : vector<16x22xf32>
    %cst_38 = arith.constant 2.000000e-01 : f32
    %44 = vector.broadcast %cst_38 : f32 to vector<16x22xf32>
    %45 = arith.mulf %44, %41 : vector<16x22xf32>
    %46 = arith.select %43, %41, %45 : vector<16x22xi1>, vector<16x22xf32>
    %47 = arith.truncf %46 : vector<16x22xf32> to vector<16x22xbf16>
    %c0_39 = arith.constant 0 : index
    %c0_40 = arith.constant 0 : index
    %c0_41 = arith.constant 0 : index
    %48 = vector.load %arg3[%c0_39, %c0_40, %c0_41] : memref<8x16x22xbf16, #tpu.memory_space<vmem>>, vector<1x16x22xbf16>
    %49 = vector.shape_cast %48 : vector<1x16x22xbf16> to vector<16x22xbf16>
    %50 = vector.shape_cast %47 : vector<16x22xbf16> to vector<1x16x22xbf16>
    tpu.vector_store %arg3[%c0_39, %c0_40, %c0_41], %50 {strides = array<i32>} : memref<8x16x22xbf16, #tpu.memory_space<vmem>>, vector<1x16x22xbf16>,
    %c8 = arith.constant 8 : index
    %c0_42 = arith.constant 0 : index
    %c0_43 = arith.constant 0 : index
    %51 = vector.load %arg1[%c8, %c0_42, %c0_43] : memref<64x16x32xbf16, #tpu.memory_space<vmem>>, vector<1x16x32xbf16>
    %52 = vector.shape_cast %51 : vector<1x16x32xbf16> to vector<16x32xbf16>
    %c0_44 = arith.constant 0 : index
    %c1_45 = arith.constant 1 : index
    %53 = vector.load %arg0[%c0_44, %c1_45] : memref<32x64xbf16, #tpu.memory_space<vmem>>, vector<32x22xbf16>
    %cst_46 = arith.constant dense<0.000000e+00> : vector<16x22xf32>
    %54 = tpu.matmul %52, %53, %cst_46 {dimension_numbers = #tpu.dot_dimension_numbers<[1], [0], [0], [1], [0, 0, 1, 1], [], []>} : vector<16x32xbf16>, vector<32x22xbf16>, vector<16x22xf32> -> vector<16x22xf32>
    %c9 = arith.constant 9 : index
    %c0_47 = arith.constant 0 : index
    %c0_48 = arith.constant 0 : index
    %55 = vector.load %arg1[%c9, %c0_47, %c0_48] : memref<64x16x32xbf16, #tpu.memory_space<vmem>>, vector<1x16x32xbf16>
    %56 = vector.shape_cast %55 : vector<1x16x32xbf16> to vector<16x32xbf16>
    %c0_49 = arith.constant 0 : index
    %c2_50 = arith.constant 2 : index
    %57 = vector.load %arg0[%c0_49, %c2_50] : memref<32x64xbf16, #tpu.memory_space<vmem>>, vector<32x22xbf16>
    %cst_51 = arith.constant dense<0.000000e+00> : vector<16x22xf32>
    %58 = tpu.matmul %56, %57, %cst_51 {dimension_numbers = #tpu.dot_dimension_numbers<[1], [0], [0], [1], [0, 0, 1, 1], [], []>} : vector<16x32xbf16>, vector<32x22xbf16>, vector<16x22xf32> -> vector<16x22xf32>
    %59 = arith.addf %54, %58 : vector<16x22xf32>
    %c10 = arith.constant 10 : index
    %c0_52 = arith.constant 0 : index
    %c0_53 = arith.constant 0 : index
    %60 = vector.load %arg1[%c10, %c0_52, %c0_53] : memref<64x16x32xbf16, #tpu.memory_space<vmem>>, vector<1x16x32xbf16>
    %61 = vector.shape_cast %60 : vector<1x16x32xbf16> to vector<16x32xbf16>
    %c0_54 = arith.constant 0 : index
    %c5_55 = arith.constant 5 : index
    %62 = vector.load %arg0[%c0_54, %c5_55] : memref<32x64xbf16, #tpu.memory_space<vmem>>, vector<32x22xbf16>
    %cst_56 = arith.constant dense<0.000000e+00> : vector<16x22xf32>
    %63 = tpu.matmul %61, %62, %cst_56 {dimension_numbers = #tpu.dot_dimension_numbers<[1], [0], [0], [1], [0, 0, 1, 1], [], []>} : vector<16x32xbf16>, vector<32x22xbf16>, vector<16x22xf32> -> vector<16x22xf32>
    %64 = arith.addf %59, %63 : vector<16x22xf32>
    %c11 = arith.constant 11 : index
    %c0_57 = arith.constant 0 : index
    %c0_58 = arith.constant 0 : index
    %65 = vector.load %arg1[%c11, %c0_57, %c0_58] : memref<64x16x32xbf16, #tpu.memory_space<vmem>>, vector<1x16x32xbf16>
    %66 = vector.shape_cast %65 : vector<1x16x32xbf16> to vector<16x32xbf16>
    %c0_59 = arith.constant 0 : index
    %c6_60 = arith.constant 6 : index
    %67 = vector.load %arg0[%c0_59, %c6_60] : memref<32x64xbf16, #tpu.memory_space<vmem>>, vector<32x22xbf16>
    %cst_61 = arith.constant dense<0.000000e+00> : vector<16x22xf32>
    %68 = tpu.matmul %66, %67, %cst_61 {dimension_numbers = #tpu.dot_dimension_numbers<[1], [0], [0], [1], [0, 0, 1, 1], [], []>} : vector<16x32xbf16>, vector<32x22xbf16>, vector<16x22xf32> -> vector<16x22xf32>
    %69 = arith.addf %64, %68 : vector<16x22xf32>
    %c12 = arith.constant 12 : index
    %c0_62 = arith.constant 0 : index
    %c0_63 = arith.constant 0 : index
    %70 = vector.load %arg1[%c12, %c0_62, %c0_63] : memref<64x16x32xbf16, #tpu.memory_space<vmem>>, vector<1x16x32xbf16>
    %71 = vector.shape_cast %70 : vector<1x16x32xbf16> to vector<16x32xbf16>
    %c0_64 = arith.constant 0 : index
    %c17_65 = arith.constant 17 : index
    %72 = vector.load %arg0[%c0_64, %c17_65] : memref<32x64xbf16, #tpu.memory_space<vmem>>, vector<32x22xbf16>
    %cst_66 = arith.constant dense<0.000000e+00> : vector<16x22xf32>
    %73 = tpu.matmul %71, %72, %cst_66 {dimension_numbers = #tpu.dot_dimension_numbers<[1], [0], [0], [1], [0, 0, 1, 1], [], []>} : vector<16x32xbf16>, vector<32x22xbf16>, vector<16x22xf32> -> vector<16x22xf32>
    %74 = arith.addf %69, %73 : vector<16x22xf32>
    %c13 = arith.constant 13 : index
    %c0_67 = arith.constant 0 : index
    %c0_68 = arith.constant 0 : index
    %75 = vector.load %arg1[%c13, %c0_67, %c0_68] : memref<64x16x32xbf16, #tpu.memory_space<vmem>>, vector<1x16x32xbf16>
    %76 = vector.shape_cast %75 : vector<1x16x32xbf16> to vector<16x32xbf16>
    %c0_69 = arith.constant 0 : index
    %c18 = arith.constant 18 : index
    %77 = vector.load %arg0[%c0_69, %c18] : memref<32x64xbf16, #tpu.memory_space<vmem>>, vector<32x22xbf16>
    %cst_70 = arith.constant dense<0.000000e+00> : vector<16x22xf32>
    %78 = tpu.matmul %76, %77, %cst_70 {dimension_numbers = #tpu.dot_dimension_numbers<[1], [0], [0], [1], [0, 0, 1, 1], [], []>} : vector<16x32xbf16>, vector<32x22xbf16>, vector<16x22xf32> -> vector<16x22xf32>
    %79 = arith.addf %74, %78 : vector<16x22xf32>
    %c14 = arith.constant 14 : index
    %c0_71 = arith.constant 0 : index
    %c0_72 = arith.constant 0 : index
    %80 = vector.load %arg1[%c14, %c0_71, %c0_72] : memref<64x16x32xbf16, #tpu.memory_space<vmem>>, vector<1x16x32xbf16>
    %81 = vector.shape_cast %80 : vector<1x16x32xbf16> to vector<16x32xbf16>
    %c0_73 = arith.constant 0 : index
    %c21_74 = arith.constant 21 : index
    %82 = vector.load %arg0[%c0_73, %c21_74] : memref<32x64xbf16, #tpu.memory_space<vmem>>, vector<32x22xbf16>
    %cst_75 = arith.constant dense<0.000000e+00> : vector<16x22xf32>
    %83 = tpu.matmul %81, %82, %cst_75 {dimension_numbers = #tpu.dot_dimension_numbers<[1], [0], [0], [1], [0, 0, 1, 1], [], []>} : vector<16x32xbf16>, vector<32x22xbf16>, vector<16x22xf32> -> vector<16x22xf32>
    %84 = arith.addf %79, %83 : vector<16x22xf32>
    %c15 = arith.constant 15 : index
    %c0_76 = arith.constant 0 : index
    %c0_77 = arith.constant 0 : index
    %85 = vector.load %arg1[%c15, %c0_76, %c0_77] : memref<64x16x32xbf16, #tpu.memory_space<vmem>>, vector<1x16x32xbf16>
    %86 = vector.shape_cast %85 : vector<1x16x32xbf16> to vector<16x32xbf16>
    %c0_78 = arith.constant 0 : index
    %c22 = arith.constant 22 : index
    %87 = vector.load %arg0[%c0_78, %c22] : memref<32x64xbf16, #tpu.memory_space<vmem>>, vector<32x22xbf16>
    %cst_79 = arith.constant dense<0.000000e+00> : vector<16x22xf32>
    %88 = tpu.matmul %86, %87, %cst_79 {dimension_numbers = #tpu.dot_dimension_numbers<[1], [0], [0], [1], [0, 0, 1, 1], [], []>} : vector<16x32xbf16>, vector<32x22xbf16>, vector<16x22xf32> -> vector<16x22xf32>
    %89 = arith.addf %84, %88 : vector<16x22xf32>
    %90 = vector.broadcast %0 : vector<16x1xf32> to vector<16x22xf32>
    %91 = arith.addf %89, %90 : vector<16x22xf32>
    %cst_80 = arith.constant 0.000000e+00 : f32
    %92 = vector.broadcast %cst_80 : f32 to vector<16x22xf32>
    %93 = arith.cmpf oge, %91, %92 : vector<16x22xf32>
    %cst_81 = arith.constant 2.000000e-01 : f32
    %94 = vector.broadcast %cst_81 : f32 to vector<16x22xf32>
    %95 = arith.mulf %94, %91 : vector<16x22xf32>
    %96 = arith.select %93, %91, %95 : vector<16x22xi1>, vector<16x22xf32>
    %97 = arith.truncf %96 : vector<16x22xf32> to vector<16x22xbf16>
    %c1_82 = arith.constant 1 : index
    %c0_83 = arith.constant 0 : index
    %c0_84 = arith.constant 0 : index
    %98 = vector.load %arg3[%c1_82, %c0_83, %c0_84] : memref<8x16x22xbf16, #tpu.memory_space<vmem>>, vector<1x16x22xbf16>
    %99 = vector.shape_cast %98 : vector<1x16x22xbf16> to vector<16x22xbf16>
    %100 = vector.shape_cast %97 : vector<16x22xbf16> to vector<1x16x22xbf16>
    tpu.vector_store %arg3[%c1_82, %c0_83, %c0_84], %100 {strides = array<i32>} : memref<8x16x22xbf16, #tpu.memory_space<vmem>>, vector<1x16x22xbf16>,
    %c16_85 = arith.constant 16 : index
    %c0_86 = arith.constant 0 : index
    %c0_87 = arith.constant 0 : index
    %101 = vector.load %arg1[%c16_85, %c0_86, %c0_87] : memref<64x16x32xbf16, #tpu.memory_space<vmem>>, vector<1x16x32xbf16>
    %102 = vector.shape_cast %101 : vector<1x16x32xbf16> to vector<16x32xbf16>
    %c0_88 = arith.constant 0 : index
    %c4_89 = arith.constant 4 : index
    %103 = vector.load %arg0[%c0_88, %c4_89] : memref<32x64xbf16, #tpu.memory_space<vmem>>, vector<32x22xbf16>
    %cst_90 = arith.constant dense<0.000000e+00> : vector<16x22xf32>
    %104 = tpu.matmul %102, %103, %cst_90 {dimension_numbers = #tpu.dot_dimension_numbers<[1], [0], [0], [1], [0, 0, 1, 1], [], []>} : vector<16x32xbf16>, vector<32x22xbf16>, vector<16x22xf32> -> vector<16x22xf32>
    %c17_91 = arith.constant 17 : index
    %c0_92 = arith.constant 0 : index
    %c0_93 = arith.constant 0 : index
    %105 = vector.load %arg1[%c17_91, %c0_92, %c0_93] : memref<64x16x32xbf16, #tpu.memory_space<vmem>>, vector<1x16x32xbf16>
    %106 = vector.shape_cast %105 : vector<1x16x32xbf16> to vector<16x32xbf16>
    %c0_94 = arith.constant 0 : index
    %c5_95 = arith.constant 5 : index
    %107 = vector.load %arg0[%c0_94, %c5_95] : memref<32x64xbf16, #tpu.memory_space<vmem>>, vector<32x22xbf16>
    %cst_96 = arith.constant dense<0.000000e+00> : vector<16x22xf32>
    %108 = tpu.matmul %106, %107, %cst_96 {dimension_numbers = #tpu.dot_dimension_numbers<[1], [0], [0], [1], [0, 0, 1, 1], [], []>} : vector<16x32xbf16>, vector<32x22xbf16>, vector<16x22xf32> -> vector<16x22xf32>
    %109 = arith.addf %104, %108 : vector<16x22xf32>
    %c18_97 = arith.constant 18 : index
    %c0_98 = arith.constant 0 : index
    %c0_99 = arith.constant 0 : index
    %110 = vector.load %arg1[%c18_97, %c0_98, %c0_99] : memref<64x16x32xbf16, #tpu.memory_space<vmem>>, vector<1x16x32xbf16>
    %111 = vector.shape_cast %110 : vector<1x16x32xbf16> to vector<16x32xbf16>
    %c0_100 = arith.constant 0 : index
    %c8_101 = arith.constant 8 : index
    %112 = vector.load %arg0[%c0_100, %c8_101] : memref<32x64xbf16, #tpu.memory_space<vmem>>, vector<32x22xbf16>
    %cst_102 = arith.constant dense<0.000000e+00> : vector<16x22xf32>
    %113 = tpu.matmul %111, %112, %cst_102 {dimension_numbers = #tpu.dot_dimension_numbers<[1], [0], [0], [1], [0, 0, 1, 1], [], []>} : vector<16x32xbf16>, vector<32x22xbf16>, vector<16x22xf32> -> vector<16x22xf32>
    %114 = arith.addf %109, %113 : vector<16x22xf32>
    %c19 = arith.constant 19 : index
    %c0_103 = arith.constant 0 : index
    %c0_104 = arith.constant 0 : index
    %115 = vector.load %arg1[%c19, %c0_103, %c0_104] : memref<64x16x32xbf16, #tpu.memory_space<vmem>>, vector<1x16x32xbf16>
    %116 = vector.shape_cast %115 : vector<1x16x32xbf16> to vector<16x32xbf16>
    %c0_105 = arith.constant 0 : index
    %c9_106 = arith.constant 9 : index
    %117 = vector.load %arg0[%c0_105, %c9_106] : memref<32x64xbf16, #tpu.memory_space<vmem>>, vector<32x22xbf16>
    %cst_107 = arith.constant dense<0.000000e+00> : vector<16x22xf32>
    %118 = tpu.matmul %116, %117, %cst_107 {dimension_numbers = #tpu.dot_dimension_numbers<[1], [0], [0], [1], [0, 0, 1, 1], [], []>} : vector<16x32xbf16>, vector<32x22xbf16>, vector<16x22xf32> -> vector<16x22xf32>
    %119 = arith.addf %114, %118 : vector<16x22xf32>
    %c20_108 = arith.constant 20 : index
    %c0_109 = arith.constant 0 : index
    %c0_110 = arith.constant 0 : index
    %120 = vector.load %arg1[%c20_108, %c0_109, %c0_110] : memref<64x16x32xbf16, #tpu.memory_space<vmem>>, vector<1x16x32xbf16>
    %121 = vector.shape_cast %120 : vector<1x16x32xbf16> to vector<16x32xbf16>
    %c0_111 = arith.constant 0 : index
    %c20_112 = arith.constant 20 : index
    %122 = vector.load %arg0[%c0_111, %c20_112] : memref<32x64xbf16, #tpu.memory_space<vmem>>, vector<32x22xbf16>
    %cst_113 = arith.constant dense<0.000000e+00> : vector<16x22xf32>
    %123 = tpu.matmul %121, %122, %cst_113 {dimension_numbers = #tpu.dot_dimension_numbers<[1], [0], [0], [1], [0, 0, 1, 1], [], []>} : vector<16x32xbf16>, vector<32x22xbf16>, vector<16x22xf32> -> vector<16x22xf32>
    %124 = arith.addf %119, %123 : vector<16x22xf32>
    %c21_114 = arith.constant 21 : index
    %c0_115 = arith.constant 0 : index
    %c0_116 = arith.constant 0 : index
    %125 = vector.load %arg1[%c21_114, %c0_115, %c0_116] : memref<64x16x32xbf16, #tpu.memory_space<vmem>>, vector<1x16x32xbf16>
    %126 = vector.shape_cast %125 : vector<1x16x32xbf16> to vector<16x32xbf16>
    %c0_117 = arith.constant 0 : index
    %c21_118 = arith.constant 21 : index
    %127 = vector.load %arg0[%c0_117, %c21_118] : memref<32x64xbf16, #tpu.memory_space<vmem>>, vector<32x22xbf16>
    %cst_119 = arith.constant dense<0.000000e+00> : vector<16x22xf32>
    %128 = tpu.matmul %126, %127, %cst_119 {dimension_numbers = #tpu.dot_dimension_numbers<[1], [0], [0], [1], [0, 0, 1, 1], [], []>} : vector<16x32xbf16>, vector<32x22xbf16>, vector<16x22xf32> -> vector<16x22xf32>
    %129 = arith.addf %124, %128 : vector<16x22xf32>
    %c22_120 = arith.constant 22 : index
    %c0_121 = arith.constant 0 : index
    %c0_122 = arith.constant 0 : index
    %130 = vector.load %arg1[%c22_120, %c0_121, %c0_122] : memref<64x16x32xbf16, #tpu.memory_space<vmem>>, vector<1x16x32xbf16>
    %131 = vector.shape_cast %130 : vector<1x16x32xbf16> to vector<16x32xbf16>
    %c0_123 = arith.constant 0 : index
    %c24 = arith.constant 24 : index
    %132 = vector.load %arg0[%c0_123, %c24] : memref<32x64xbf16, #tpu.memory_space<vmem>>, vector<32x22xbf16>
    %cst_124 = arith.constant dense<0.000000e+00> : vector<16x22xf32>
    %133 = tpu.matmul %131, %132, %cst_124 {dimension_numbers = #tpu.dot_dimension_numbers<[1], [0], [0], [1], [0, 0, 1, 1], [], []>} : vector<16x32xbf16>, vector<32x22xbf16>, vector<16x22xf32> -> vector<16x22xf32>
    %134 = arith.addf %129, %133 : vector<16x22xf32>
    %c23 = arith.constant 23 : index
    %c0_125 = arith.constant 0 : index
    %c0_126 = arith.constant 0 : index
    %135 = vector.load %arg1[%c23, %c0_125, %c0_126] : memref<64x16x32xbf16, #tpu.memory_space<vmem>>, vector<1x16x32xbf16>
    %136 = vector.shape_cast %135 : vector<1x16x32xbf16> to vector<16x32xbf16>
    %c0_127 = arith.constant 0 : index
    %c25 = arith.constant 25 : index
    %137 = vector.load %arg0[%c0_127, %c25] : memref<32x64xbf16, #tpu.memory_space<vmem>>, vector<32x22xbf16>
    %cst_128 = arith.constant dense<0.000000e+00> : vector<16x22xf32>
    %138 = tpu.matmul %136, %137, %cst_128 {dimension_numbers = #tpu.dot_dimension_numbers<[1], [0], [0], [1], [0, 0, 1, 1], [], []>} : vector<16x32xbf16>, vector<32x22xbf16>, vector<16x22xf32> -> vector<16x22xf32>
    %139 = arith.addf %134, %138 : vector<16x22xf32>
    %140 = vector.broadcast %0 : vector<16x1xf32> to vector<16x22xf32>
    %141 = arith.addf %139, %140 : vector<16x22xf32>
    %cst_129 = arith.constant 0.000000e+00 : f32
    %142 = vector.broadcast %cst_129 : f32 to vector<16x22xf32>
    %143 = arith.cmpf oge, %141, %142 : vector<16x22xf32>
    %cst_130 = arith.constant 2.000000e-01 : f32
    %144 = vector.broadcast %cst_130 : f32 to vector<16x22xf32>
    %145 = arith.mulf %144, %141 : vector<16x22xf32>
    %146 = arith.select %143, %141, %145 : vector<16x22xi1>, vector<16x22xf32>
    %147 = arith.truncf %146 : vector<16x22xf32> to vector<16x22xbf16>
    %c2_131 = arith.constant 2 : index
    %c0_132 = arith.constant 0 : index
    %c0_133 = arith.constant 0 : index
    %148 = vector.load %arg3[%c2_131, %c0_132, %c0_133] : memref<8x16x22xbf16, #tpu.memory_space<vmem>>, vector<1x16x22xbf16>
    %149 = vector.shape_cast %148 : vector<1x16x22xbf16> to vector<16x22xbf16>
    %150 = vector.shape_cast %147 : vector<16x22xbf16> to vector<1x16x22xbf16>
    tpu.vector_store %arg3[%c2_131, %c0_132, %c0_133], %150 {strides = array<i32>} : memref<8x16x22xbf16, #tpu.memory_space<vmem>>, vector<1x16x22xbf16>,
    %c24_134 = arith.constant 24 : index
    %c0_135 = arith.constant 0 : index
    %c0_136 = arith.constant 0 : index
    %151 = vector.load %arg1[%c24_134, %c0_135, %c0_136] : memref<64x16x32xbf16, #tpu.memory_space<vmem>>, vector<1x16x32xbf16>
    %152 = vector.shape_cast %151 : vector<1x16x32xbf16> to vector<16x32xbf16>
    %c0_137 = arith.constant 0 : index
    %c5_138 = arith.constant 5 : index
    %153 = vector.load %arg0[%c0_137, %c5_138] : memref<32x64xbf16, #tpu.memory_space<vmem>>, vector<32x22xbf16>
    %cst_139 = arith.constant dense<0.000000e+00> : vector<16x22xf32>
    %154 = tpu.matmul %152, %153, %cst_139 {dimension_numbers = #tpu.dot_dimension_numbers<[1], [0], [0], [1], [0, 0, 1, 1], [], []>} : vector<16x32xbf16>, vector<32x22xbf16>, vector<16x22xf32> -> vector<16x22xf32>
    %c25_140 = arith.constant 25 : index
    %c0_141 = arith.constant 0 : index
    %c0_142 = arith.constant 0 : index
    %155 = vector.load %arg1[%c25_140, %c0_141, %c0_142] : memref<64x16x32xbf16, #tpu.memory_space<vmem>>, vector<1x16x32xbf16>
    %156 = vector.shape_cast %155 : vector<1x16x32xbf16> to vector<16x32xbf16>
    %c0_143 = arith.constant 0 : index
    %c6_144 = arith.constant 6 : index
    %157 = vector.load %arg0[%c0_143, %c6_144] : memref<32x64xbf16, #tpu.memory_space<vmem>>, vector<32x22xbf16>
    %cst_145 = arith.constant dense<0.000000e+00> : vector<16x22xf32>
    %158 = tpu.matmul %156, %157, %cst_145 {dimension_numbers = #tpu.dot_dimension_numbers<[1], [0], [0], [1], [0, 0, 1, 1], [], []>} : vector<16x32xbf16>, vector<32x22xbf16>, vector<16x22xf32> -> vector<16x22xf32>
    %159 = arith.addf %154, %158 : vector<16x22xf32>
    %c26 = arith.constant 26 : index
    %c0_146 = arith.constant 0 : index
    %c0_147 = arith.constant 0 : index
    %160 = vector.load %arg1[%c26, %c0_146, %c0_147] : memref<64x16x32xbf16, #tpu.memory_space<vmem>>, vector<1x16x32xbf16>
    %161 = vector.shape_cast %160 : vector<1x16x32xbf16> to vector<16x32xbf16>
    %c0_148 = arith.constant 0 : index
    %c9_149 = arith.constant 9 : index
    %162 = vector.load %arg0[%c0_148, %c9_149] : memref<32x64xbf16, #tpu.memory_space<vmem>>, vector<32x22xbf16>
    %cst_150 = arith.constant dense<0.000000e+00> : vector<16x22xf32>
    %163 = tpu.matmul %161, %162, %cst_150 {dimension_numbers = #tpu.dot_dimension_numbers<[1], [0], [0], [1], [0, 0, 1, 1], [], []>} : vector<16x32xbf16>, vector<32x22xbf16>, vector<16x22xf32> -> vector<16x22xf32>
    %164 = arith.addf %159, %163 : vector<16x22xf32>
    %c27 = arith.constant 27 : index
    %c0_151 = arith.constant 0 : index
    %c0_152 = arith.constant 0 : index
    %165 = vector.load %arg1[%c27, %c0_151, %c0_152] : memref<64x16x32xbf16, #tpu.memory_space<vmem>>, vector<1x16x32xbf16>
    %166 = vector.shape_cast %165 : vector<1x16x32xbf16> to vector<16x32xbf16>
    %c0_153 = arith.constant 0 : index
    %c10_154 = arith.constant 10 : index
    %167 = vector.load %arg0[%c0_153, %c10_154] : memref<32x64xbf16, #tpu.memory_space<vmem>>, vector<32x22xbf16>
    %cst_155 = arith.constant dense<0.000000e+00> : vector<16x22xf32>
    %168 = tpu.matmul %166, %167, %cst_155 {dimension_numbers = #tpu.dot_dimension_numbers<[1], [0], [0], [1], [0, 0, 1, 1], [], []>} : vector<16x32xbf16>, vector<32x22xbf16>, vector<16x22xf32> -> vector<16x22xf32>
    %169 = arith.addf %164, %168 : vector<16x22xf32>
    %c28 = arith.constant 28 : index
    %c0_156 = arith.constant 0 : index
    %c0_157 = arith.constant 0 : index
    %170 = vector.load %arg1[%c28, %c0_156, %c0_157] : memref<64x16x32xbf16, #tpu.memory_space<vmem>>, vector<1x16x32xbf16>
    %171 = vector.shape_cast %170 : vector<1x16x32xbf16> to vector<16x32xbf16>
    %c0_158 = arith.constant 0 : index
    %c21_159 = arith.constant 21 : index
    %172 = vector.load %arg0[%c0_158, %c21_159] : memref<32x64xbf16, #tpu.memory_space<vmem>>, vector<32x22xbf16>
    %cst_160 = arith.constant dense<0.000000e+00> : vector<16x22xf32>
    %173 = tpu.matmul %171, %172, %cst_160 {dimension_numbers = #tpu.dot_dimension_numbers<[1], [0], [0], [1], [0, 0, 1, 1], [], []>} : vector<16x32xbf16>, vector<32x22xbf16>, vector<16x22xf32> -> vector<16x22xf32>
    %174 = arith.addf %169, %173 : vector<16x22xf32>
    %c29 = arith.constant 29 : index
    %c0_161 = arith.constant 0 : index
    %c0_162 = arith.constant 0 : index
    %175 = vector.load %arg1[%c29, %c0_161, %c0_162] : memref<64x16x32xbf16, #tpu.memory_space<vmem>>, vector<1x16x32xbf16>
    %176 = vector.shape_cast %175 : vector<1x16x32xbf16> to vector<16x32xbf16>
    %c0_163 = arith.constant 0 : index
    %c22_164 = arith.constant 22 : index
    %177 = vector.load %arg0[%c0_163, %c22_164] : memref<32x64xbf16, #tpu.memory_space<vmem>>, vector<32x22xbf16>
    %cst_165 = arith.constant dense<0.000000e+00> : vector<16x22xf32>
    %178 = tpu.matmul %176, %177, %cst_165 {dimension_numbers = #tpu.dot_dimension_numbers<[1], [0], [0], [1], [0, 0, 1, 1], [], []>} : vector<16x32xbf16>, vector<32x22xbf16>, vector<16x22xf32> -> vector<16x22xf32>
    %179 = arith.addf %174, %178 : vector<16x22xf32>
    %c30 = arith.constant 30 : index
    %c0_166 = arith.constant 0 : index
    %c0_167 = arith.constant 0 : index
    %180 = vector.load %arg1[%c30, %c0_166, %c0_167] : memref<64x16x32xbf16, #tpu.memory_space<vmem>>, vector<1x16x32xbf16>
    %181 = vector.shape_cast %180 : vector<1x16x32xbf16> to vector<16x32xbf16>
    %c0_168 = arith.constant 0 : index
    %c25_169 = arith.constant 25 : index
    %182 = vector.load %arg0[%c0_168, %c25_169] : memref<32x64xbf16, #tpu.memory_space<vmem>>, vector<32x22xbf16>
    %cst_170 = arith.constant dense<0.000000e+00> : vector<16x22xf32>
    %183 = tpu.matmul %181, %182, %cst_170 {dimension_numbers = #tpu.dot_dimension_numbers<[1], [0], [0], [1], [0, 0, 1, 1], [], []>} : vector<16x32xbf16>, vector<32x22xbf16>, vector<16x22xf32> -> vector<16x22xf32>
    %184 = arith.addf %179, %183 : vector<16x22xf32>
    %c31 = arith.constant 31 : index
    %c0_171 = arith.constant 0 : index
    %c0_172 = arith.constant 0 : index
    %185 = vector.load %arg1[%c31, %c0_171, %c0_172] : memref<64x16x32xbf16, #tpu.memory_space<vmem>>, vector<1x16x32xbf16>
    %186 = vector.shape_cast %185 : vector<1x16x32xbf16> to vector<16x32xbf16>
    %c0_173 = arith.constant 0 : index
    %c26_174 = arith.constant 26 : index
    %187 = vector.load %arg0[%c0_173, %c26_174] : memref<32x64xbf16, #tpu.memory_space<vmem>>, vector<32x22xbf16>
    %cst_175 = arith.constant dense<0.000000e+00> : vector<16x22xf32>
    %188 = tpu.matmul %186, %187, %cst_175 {dimension_numbers = #tpu.dot_dimension_numbers<[1], [0], [0], [1], [0, 0, 1, 1], [], []>} : vector<16x32xbf16>, vector<32x22xbf16>, vector<16x22xf32> -> vector<16x22xf32>
    %189 = arith.addf %184, %188 : vector<16x22xf32>
    %190 = vector.broadcast %0 : vector<16x1xf32> to vector<16x22xf32>
    %191 = arith.addf %189, %190 : vector<16x22xf32>
    %cst_176 = arith.constant 0.000000e+00 : f32
    %192 = vector.broadcast %cst_176 : f32 to vector<16x22xf32>
    %193 = arith.cmpf oge, %191, %192 : vector<16x22xf32>
    %cst_177 = arith.constant 2.000000e-01 : f32
    %194 = vector.broadcast %cst_177 : f32 to vector<16x22xf32>
    %195 = arith.mulf %194, %191 : vector<16x22xf32>
    %196 = arith.select %193, %191, %195 : vector<16x22xi1>, vector<16x22xf32>
    %197 = arith.truncf %196 : vector<16x22xf32> to vector<16x22xbf16>
    %c3_178 = arith.constant 3 : index
    %c0_179 = arith.constant 0 : index
    %c0_180 = arith.constant 0 : index
    %198 = vector.load %arg3[%c3_178, %c0_179, %c0_180] : memref<8x16x22xbf16, #tpu.memory_space<vmem>>, vector<1x16x22xbf16>
    %199 = vector.shape_cast %198 : vector<1x16x22xbf16> to vector<16x22xbf16>
    %200 = vector.shape_cast %197 : vector<16x22xbf16> to vector<1x16x22xbf16>
    tpu.vector_store %arg3[%c3_178, %c0_179, %c0_180], %200 {strides = array<i32>} : memref<8x16x22xbf16, #tpu.memory_space<vmem>>, vector<1x16x22xbf16>,
    %c32 = arith.constant 32 : index
    %c0_181 = arith.constant 0 : index
    %c0_182 = arith.constant 0 : index
    %201 = vector.load %arg1[%c32, %c0_181, %c0_182] : memref<64x16x32xbf16, #tpu.memory_space<vmem>>, vector<1x16x32xbf16>
    %202 = vector.shape_cast %201 : vector<1x16x32xbf16> to vector<16x32xbf16>
    %c0_183 = arith.constant 0 : index
    %c16_184 = arith.constant 16 : index
    %203 = vector.load %arg0[%c0_183, %c16_184] : memref<32x64xbf16, #tpu.memory_space<vmem>>, vector<32x22xbf16>
    %cst_185 = arith.constant dense<0.000000e+00> : vector<16x22xf32>
    %204 = tpu.matmul %202, %203, %cst_185 {dimension_numbers = #tpu.dot_dimension_numbers<[1], [0], [0], [1], [0, 0, 1, 1], [], []>} : vector<16x32xbf16>, vector<32x22xbf16>, vector<16x22xf32> -> vector<16x22xf32>
    %c33 = arith.constant 33 : index
    %c0_186 = arith.constant 0 : index
    %c0_187 = arith.constant 0 : index
    %205 = vector.load %arg1[%c33, %c0_186, %c0_187] : memref<64x16x32xbf16, #tpu.memory_space<vmem>>, vector<1x16x32xbf16>
    %206 = vector.shape_cast %205 : vector<1x16x32xbf16> to vector<16x32xbf16>
    %c0_188 = arith.constant 0 : index
    %c17_189 = arith.constant 17 : index
    %207 = vector.load %arg0[%c0_188, %c17_189] : memref<32x64xbf16, #tpu.memory_space<vmem>>, vector<32x22xbf16>
    %cst_190 = arith.constant dense<0.000000e+00> : vector<16x22xf32>
    %208 = tpu.matmul %206, %207, %cst_190 {dimension_numbers = #tpu.dot_dimension_numbers<[1], [0], [0], [1], [0, 0, 1, 1], [], []>} : vector<16x32xbf16>, vector<32x22xbf16>, vector<16x22xf32> -> vector<16x22xf32>
    %209 = arith.addf %204, %208 : vector<16x22xf32>
    %c34 = arith.constant 34 : index
    %c0_191 = arith.constant 0 : index
    %c0_192 = arith.constant 0 : index
    %210 = vector.load %arg1[%c34, %c0_191, %c0_192] : memref<64x16x32xbf16, #tpu.memory_space<vmem>>, vector<1x16x32xbf16>
    %211 = vector.shape_cast %210 : vector<1x16x32xbf16> to vector<16x32xbf16>
    %c0_193 = arith.constant 0 : index
    %c20_194 = arith.constant 20 : index
    %212 = vector.load %arg0[%c0_193, %c20_194] : memref<32x64xbf16, #tpu.memory_space<vmem>>, vector<32x22xbf16>
    %cst_195 = arith.constant dense<0.000000e+00> : vector<16x22xf32>
    %213 = tpu.matmul %211, %212, %cst_195 {dimension_numbers = #tpu.dot_dimension_numbers<[1], [0], [0], [1], [0, 0, 1, 1], [], []>} : vector<16x32xbf16>, vector<32x22xbf16>, vector<16x22xf32> -> vector<16x22xf32>
    %214 = arith.addf %209, %213 : vector<16x22xf32>
    %c35 = arith.constant 35 : index
    %c0_196 = arith.constant 0 : index
    %c0_197 = arith.constant 0 : index
    %215 = vector.load %arg1[%c35, %c0_196, %c0_197] : memref<64x16x32xbf16, #tpu.memory_space<vmem>>, vector<1x16x32xbf16>
    %216 = vector.shape_cast %215 : vector<1x16x32xbf16> to vector<16x32xbf16>
    %c0_198 = arith.constant 0 : index
    %c21_199 = arith.constant 21 : index
    %217 = vector.load %arg0[%c0_198, %c21_199] : memref<32x64xbf16, #tpu.memory_space<vmem>>, vector<32x22xbf16>
    %cst_200 = arith.constant dense<0.000000e+00> : vector<16x22xf32>
    %218 = tpu.matmul %216, %217, %cst_200 {dimension_numbers = #tpu.dot_dimension_numbers<[1], [0], [0], [1], [0, 0, 1, 1], [], []>} : vector<16x32xbf16>, vector<32x22xbf16>, vector<16x22xf32> -> vector<16x22xf32>
    %219 = arith.addf %214, %218 : vector<16x22xf32>
    %c36 = arith.constant 36 : index
    %c0_201 = arith.constant 0 : index
    %c0_202 = arith.constant 0 : index
    %220 = vector.load %arg1[%c36, %c0_201, %c0_202] : memref<64x16x32xbf16, #tpu.memory_space<vmem>>, vector<1x16x32xbf16>
    %221 = vector.shape_cast %220 : vector<1x16x32xbf16> to vector<16x32xbf16>
    %c0_203 = arith.constant 0 : index
    %c32_204 = arith.constant 32 : index
    %222 = vector.load %arg0[%c0_203, %c32_204] : memref<32x64xbf16, #tpu.memory_space<vmem>>, vector<32x22xbf16>
    %cst_205 = arith.constant dense<0.000000e+00> : vector<16x22xf32>
    %223 = tpu.matmul %221, %222, %cst_205 {dimension_numbers = #tpu.dot_dimension_numbers<[1], [0], [0], [1], [0, 0, 1, 1], [], []>} : vector<16x32xbf16>, vector<32x22xbf16>, vector<16x22xf32> -> vector<16x22xf32>
    %224 = arith.addf %219, %223 : vector<16x22xf32>
    %c37 = arith.constant 37 : index
    %c0_206 = arith.constant 0 : index
    %c0_207 = arith.constant 0 : index
    %225 = vector.load %arg1[%c37, %c0_206, %c0_207] : memref<64x16x32xbf16, #tpu.memory_space<vmem>>, vector<1x16x32xbf16>
    %226 = vector.shape_cast %225 : vector<1x16x32xbf16> to vector<16x32xbf16>
    %c0_208 = arith.constant 0 : index
    %c33_209 = arith.constant 33 : index
    %227 = vector.load %arg0[%c0_208, %c33_209] : memref<32x64xbf16, #tpu.memory_space<vmem>>, vector<32x22xbf16>
    %cst_210 = arith.constant dense<0.000000e+00> : vector<16x22xf32>
    %228 = tpu.matmul %226, %227, %cst_210 {dimension_numbers = #tpu.dot_dimension_numbers<[1], [0], [0], [1], [0, 0, 1, 1], [], []>} : vector<16x32xbf16>, vector<32x22xbf16>, vector<16x22xf32> -> vector<16x22xf32>
    %229 = arith.addf %224, %228 : vector<16x22xf32>
    %c38 = arith.constant 38 : index
    %c0_211 = arith.constant 0 : index
    %c0_212 = arith.constant 0 : index
    %230 = vector.load %arg1[%c38, %c0_211, %c0_212] : memref<64x16x32xbf16, #tpu.memory_space<vmem>>, vector<1x16x32xbf16>
    %231 = vector.shape_cast %230 : vector<1x16x32xbf16> to vector<16x32xbf16>
    %c0_213 = arith.constant 0 : index
    %c36_214 = arith.constant 36 : index
    %232 = vector.load %arg0[%c0_213, %c36_214] : memref<32x64xbf16, #tpu.memory_space<vmem>>, vector<32x22xbf16>
    %cst_215 = arith.constant dense<0.000000e+00> : vector<16x22xf32>
    %233 = tpu.matmul %231, %232, %cst_215 {dimension_numbers = #tpu.dot_dimension_numbers<[1], [0], [0], [1], [0, 0, 1, 1], [], []>} : vector<16x32xbf16>, vector<32x22xbf16>, vector<16x22xf32> -> vector<16x22xf32>
    %234 = arith.addf %229, %233 : vector<16x22xf32>
    %c39 = arith.constant 39 : index
    %c0_216 = arith.constant 0 : index
    %c0_217 = arith.constant 0 : index
    %235 = vector.load %arg1[%c39, %c0_216, %c0_217] : memref<64x16x32xbf16, #tpu.memory_space<vmem>>, vector<1x16x32xbf16>
    %236 = vector.shape_cast %235 : vector<1x16x32xbf16> to vector<16x32xbf16>
    %c0_218 = arith.constant 0 : index
    %c37_219 = arith.constant 37 : index
    %237 = vector.load %arg0[%c0_218, %c37_219] : memref<32x64xbf16, #tpu.memory_space<vmem>>, vector<32x22xbf16>
    %cst_220 = arith.constant dense<0.000000e+00> : vector<16x22xf32>
    %238 = tpu.matmul %236, %237, %cst_220 {dimension_numbers = #tpu.dot_dimension_numbers<[1], [0], [0], [1], [0, 0, 1, 1], [], []>} : vector<16x32xbf16>, vector<32x22xbf16>, vector<16x22xf32> -> vector<16x22xf32>
    %239 = arith.addf %234, %238 : vector<16x22xf32>
    %240 = vector.broadcast %0 : vector<16x1xf32> to vector<16x22xf32>
    %241 = arith.addf %239, %240 : vector<16x22xf32>
    %cst_221 = arith.constant 0.000000e+00 : f32
    %242 = vector.broadcast %cst_221 : f32 to vector<16x22xf32>
    %243 = arith.cmpf oge, %241, %242 : vector<16x22xf32>
    %cst_222 = arith.constant 2.000000e-01 : f32
    %244 = vector.broadcast %cst_222 : f32 to vector<16x22xf32>
    %245 = arith.mulf %244, %241 : vector<16x22xf32>
    %246 = arith.select %243, %241, %245 : vector<16x22xi1>, vector<16x22xf32>
    %247 = arith.truncf %246 : vector<16x22xf32> to vector<16x22xbf16>
    %c4_223 = arith.constant 4 : index
    %c0_224 = arith.constant 0 : index
    %c0_225 = arith.constant 0 : index
    %248 = vector.load %arg3[%c4_223, %c0_224, %c0_225] : memref<8x16x22xbf16, #tpu.memory_space<vmem>>, vector<1x16x22xbf16>
    %249 = vector.shape_cast %248 : vector<1x16x22xbf16> to vector<16x22xbf16>
    %250 = vector.shape_cast %247 : vector<16x22xbf16> to vector<1x16x22xbf16>
    tpu.vector_store %arg3[%c4_223, %c0_224, %c0_225], %250 {strides = array<i32>} : memref<8x16x22xbf16, #tpu.memory_space<vmem>>, vector<1x16x22xbf16>,
    %c40 = arith.constant 40 : index
    %c0_226 = arith.constant 0 : index
    %c0_227 = arith.constant 0 : index
    %251 = vector.load %arg1[%c40, %c0_226, %c0_227] : memref<64x16x32xbf16, #tpu.memory_space<vmem>>, vector<1x16x32xbf16>
    %252 = vector.shape_cast %251 : vector<1x16x32xbf16> to vector<16x32xbf16>
    %c0_228 = arith.constant 0 : index
    %c17_229 = arith.constant 17 : index
    %253 = vector.load %arg0[%c0_228, %c17_229] : memref<32x64xbf16, #tpu.memory_space<vmem>>, vector<32x22xbf16>
    %cst_230 = arith.constant dense<0.000000e+00> : vector<16x22xf32>
    %254 = tpu.matmul %252, %253, %cst_230 {dimension_numbers = #tpu.dot_dimension_numbers<[1], [0], [0], [1], [0, 0, 1, 1], [], []>} : vector<16x32xbf16>, vector<32x22xbf16>, vector<16x22xf32> -> vector<16x22xf32>
    %c41 = arith.constant 41 : index
    %c0_231 = arith.constant 0 : index
    %c0_232 = arith.constant 0 : index
    %255 = vector.load %arg1[%c41, %c0_231, %c0_232] : memref<64x16x32xbf16, #tpu.memory_space<vmem>>, vector<1x16x32xbf16>
    %256 = vector.shape_cast %255 : vector<1x16x32xbf16> to vector<16x32xbf16>
    %c0_233 = arith.constant 0 : index
    %c18_234 = arith.constant 18 : index
    %257 = vector.load %arg0[%c0_233, %c18_234] : memref<32x64xbf16, #tpu.memory_space<vmem>>, vector<32x22xbf16>
    %cst_235 = arith.constant dense<0.000000e+00> : vector<16x22xf32>
    %258 = tpu.matmul %256, %257, %cst_235 {dimension_numbers = #tpu.dot_dimension_numbers<[1], [0], [0], [1], [0, 0, 1, 1], [], []>} : vector<16x32xbf16>, vector<32x22xbf16>, vector<16x22xf32> -> vector<16x22xf32>
    %259 = arith.addf %254, %258 : vector<16x22xf32>
    %c42 = arith.constant 42 : index
    %c0_236 = arith.constant 0 : index
    %c0_237 = arith.constant 0 : index
    %260 = vector.load %arg1[%c42, %c0_236, %c0_237] : memref<64x16x32xbf16, #tpu.memory_space<vmem>>, vector<1x16x32xbf16>
    %261 = vector.shape_cast %260 : vector<1x16x32xbf16> to vector<16x32xbf16>
    %c0_238 = arith.constant 0 : index
    %c21_239 = arith.constant 21 : index
    %262 = vector.load %arg0[%c0_238, %c21_239] : memref<32x64xbf16, #tpu.memory_space<vmem>>, vector<32x22xbf16>
    %cst_240 = arith.constant dense<0.000000e+00> : vector<16x22xf32>
    %263 = tpu.matmul %261, %262, %cst_240 {dimension_numbers = #tpu.dot_dimension_numbers<[1], [0], [0], [1], [0, 0, 1, 1], [], []>} : vector<16x32xbf16>, vector<32x22xbf16>, vector<16x22xf32> -> vector<16x22xf32>
    %264 = arith.addf %259, %263 : vector<16x22xf32>
    %c43 = arith.constant 43 : index
    %c0_241 = arith.constant 0 : index
    %c0_242 = arith.constant 0 : index
    %265 = vector.load %arg1[%c43, %c0_241, %c0_242] : memref<64x16x32xbf16, #tpu.memory_space<vmem>>, vector<1x16x32xbf16>
    %266 = vector.shape_cast %265 : vector<1x16x32xbf16> to vector<16x32xbf16>
    %c0_243 = arith.constant 0 : index
    %c22_244 = arith.constant 22 : index
    %267 = vector.load %arg0[%c0_243, %c22_244] : memref<32x64xbf16, #tpu.memory_space<vmem>>, vector<32x22xbf16>
    %cst_245 = arith.constant dense<0.000000e+00> : vector<16x22xf32>
    %268 = tpu.matmul %266, %267, %cst_245 {dimension_numbers = #tpu.dot_dimension_numbers<[1], [0], [0], [1], [0, 0, 1, 1], [], []>} : vector<16x32xbf16>, vector<32x22xbf16>, vector<16x22xf32> -> vector<16x22xf32>
    %269 = arith.addf %264, %268 : vector<16x22xf32>
    %c44 = arith.constant 44 : index
    %c0_246 = arith.constant 0 : index
    %c0_247 = arith.constant 0 : index
    %270 = vector.load %arg1[%c44, %c0_246, %c0_247] : memref<64x16x32xbf16, #tpu.memory_space<vmem>>, vector<1x16x32xbf16>
    %271 = vector.shape_cast %270 : vector<1x16x32xbf16> to vector<16x32xbf16>
    %c0_248 = arith.constant 0 : index
    %c33_249 = arith.constant 33 : index
    %272 = vector.load %arg0[%c0_248, %c33_249] : memref<32x64xbf16, #tpu.memory_space<vmem>>, vector<32x22xbf16>
    %cst_250 = arith.constant dense<0.000000e+00> : vector<16x22xf32>
    %273 = tpu.matmul %271, %272, %cst_250 {dimension_numbers = #tpu.dot_dimension_numbers<[1], [0], [0], [1], [0, 0, 1, 1], [], []>} : vector<16x32xbf16>, vector<32x22xbf16>, vector<16x22xf32> -> vector<16x22xf32>
    %274 = arith.addf %269, %273 : vector<16x22xf32>
    %c45 = arith.constant 45 : index
    %c0_251 = arith.constant 0 : index
    %c0_252 = arith.constant 0 : index
    %275 = vector.load %arg1[%c45, %c0_251, %c0_252] : memref<64x16x32xbf16, #tpu.memory_space<vmem>>, vector<1x16x32xbf16>
    %276 = vector.shape_cast %275 : vector<1x16x32xbf16> to vector<16x32xbf16>
    %c0_253 = arith.constant 0 : index
    %c34_254 = arith.constant 34 : index
    %277 = vector.load %arg0[%c0_253, %c34_254] : memref<32x64xbf16, #tpu.memory_space<vmem>>, vector<32x22xbf16>
    %cst_255 = arith.constant dense<0.000000e+00> : vector<16x22xf32>
    %278 = tpu.matmul %276, %277, %cst_255 {dimension_numbers = #tpu.dot_dimension_numbers<[1], [0], [0], [1], [0, 0, 1, 1], [], []>} : vector<16x32xbf16>, vector<32x22xbf16>, vector<16x22xf32> -> vector<16x22xf32>
    %279 = arith.addf %274, %278 : vector<16x22xf32>
    %c46 = arith.constant 46 : index
    %c0_256 = arith.constant 0 : index
    %c0_257 = arith.constant 0 : index
    %280 = vector.load %arg1[%c46, %c0_256, %c0_257] : memref<64x16x32xbf16, #tpu.memory_space<vmem>>, vector<1x16x32xbf16>
    %281 = vector.shape_cast %280 : vector<1x16x32xbf16> to vector<16x32xbf16>
    %c0_258 = arith.constant 0 : index
    %c37_259 = arith.constant 37 : index
    %282 = vector.load %arg0[%c0_258, %c37_259] : memref<32x64xbf16, #tpu.memory_space<vmem>>, vector<32x22xbf16>
    %cst_260 = arith.constant dense<0.000000e+00> : vector<16x22xf32>
    %283 = tpu.matmul %281, %282, %cst_260 {dimension_numbers = #tpu.dot_dimension_numbers<[1], [0], [0], [1], [0, 0, 1, 1], [], []>} : vector<16x32xbf16>, vector<32x22xbf16>, vector<16x22xf32> -> vector<16x22xf32>
    %284 = arith.addf %279, %283 : vector<16x22xf32>
    %c47 = arith.constant 47 : index
    %c0_261 = arith.constant 0 : index
    %c0_262 = arith.constant 0 : index
    %285 = vector.load %arg1[%c47, %c0_261, %c0_262] : memref<64x16x32xbf16, #tpu.memory_space<vmem>>, vector<1x16x32xbf16>
    %286 = vector.shape_cast %285 : vector<1x16x32xbf16> to vector<16x32xbf16>
    %c0_263 = arith.constant 0 : index
    %c38_264 = arith.constant 38 : index
    %287 = vector.load %arg0[%c0_263, %c38_264] : memref<32x64xbf16, #tpu.memory_space<vmem>>, vector<32x22xbf16>
    %cst_265 = arith.constant dense<0.000000e+00> : vector<16x22xf32>
    %288 = tpu.matmul %286, %287, %cst_265 {dimension_numbers = #tpu.dot_dimension_numbers<[1], [0], [0], [1], [0, 0, 1, 1], [], []>} : vector<16x32xbf16>, vector<32x22xbf16>, vector<16x22xf32> -> vector<16x22xf32>
    %289 = arith.addf %284, %288 : vector<16x22xf32>
    %290 = vector.broadcast %0 : vector<16x1xf32> to vector<16x22xf32>
    %291 = arith.addf %289, %290 : vector<16x22xf32>
    %cst_266 = arith.constant 0.000000e+00 : f32
    %292 = vector.broadcast %cst_266 : f32 to vector<16x22xf32>
    %293 = arith.cmpf oge, %291, %292 : vector<16x22xf32>
    %cst_267 = arith.constant 2.000000e-01 : f32
    %294 = vector.broadcast %cst_267 : f32 to vector<16x22xf32>
    %295 = arith.mulf %294, %291 : vector<16x22xf32>
    %296 = arith.select %293, %291, %295 : vector<16x22xi1>, vector<16x22xf32>
    %297 = arith.truncf %296 : vector<16x22xf32> to vector<16x22xbf16>
    %c5_268 = arith.constant 5 : index
    %c0_269 = arith.constant 0 : index
    %c0_270 = arith.constant 0 : index
    %298 = vector.load %arg3[%c5_268, %c0_269, %c0_270] : memref<8x16x22xbf16, #tpu.memory_space<vmem>>, vector<1x16x22xbf16>
    %299 = vector.shape_cast %298 : vector<1x16x22xbf16> to vector<16x22xbf16>
    %300 = vector.shape_cast %297 : vector<16x22xbf16> to vector<1x16x22xbf16>
    tpu.vector_store %arg3[%c5_268, %c0_269, %c0_270], %300 {strides = array<i32>} : memref<8x16x22xbf16, #tpu.memory_space<vmem>>, vector<1x16x22xbf16>,
    %c48 = arith.constant 48 : index
    %c0_271 = arith.constant 0 : index
    %c0_272 = arith.constant 0 : index
    %301 = vector.load %arg1[%c48, %c0_271, %c0_272] : memref<64x16x32xbf16, #tpu.memory_space<vmem>>, vector<1x16x32xbf16>
    %302 = vector.shape_cast %301 : vector<1x16x32xbf16> to vector<16x32xbf16>
    %c0_273 = arith.constant 0 : index
    %c20_274 = arith.constant 20 : index
    %303 = vector.load %arg0[%c0_273, %c20_274] : memref<32x64xbf16, #tpu.memory_space<vmem>>, vector<32x22xbf16>
    %cst_275 = arith.constant dense<0.000000e+00> : vector<16x22xf32>
    %304 = tpu.matmul %302, %303, %cst_275 {dimension_numbers = #tpu.dot_dimension_numbers<[1], [0], [0], [1], [0, 0, 1, 1], [], []>} : vector<16x32xbf16>, vector<32x22xbf16>, vector<16x22xf32> -> vector<16x22xf32>
    %c49 = arith.constant 49 : index
    %c0_276 = arith.constant 0 : index
    %c0_277 = arith.constant 0 : index
    %305 = vector.load %arg1[%c49, %c0_276, %c0_277] : memref<64x16x32xbf16, #tpu.memory_space<vmem>>, vector<1x16x32xbf16>
    %306 = vector.shape_cast %305 : vector<1x16x32xbf16> to vector<16x32xbf16>
    %c0_278 = arith.constant 0 : index
    %c21_279 = arith.constant 21 : index
    %307 = vector.load %arg0[%c0_278, %c21_279] : memref<32x64xbf16, #tpu.memory_space<vmem>>, vector<32x22xbf16>
    %cst_280 = arith.constant dense<0.000000e+00> : vector<16x22xf32>
    %308 = tpu.matmul %306, %307, %cst_280 {dimension_numbers = #tpu.dot_dimension_numbers<[1], [0], [0], [1], [0, 0, 1, 1], [], []>} : vector<16x32xbf16>, vector<32x22xbf16>, vector<16x22xf32> -> vector<16x22xf32>
    %309 = arith.addf %304, %308 : vector<16x22xf32>
    %c50 = arith.constant 50 : index
    %c0_281 = arith.constant 0 : index
    %c0_282 = arith.constant 0 : index
    %310 = vector.load %arg1[%c50, %c0_281, %c0_282] : memref<64x16x32xbf16, #tpu.memory_space<vmem>>, vector<1x16x32xbf16>
    %311 = vector.shape_cast %310 : vector<1x16x32xbf16> to vector<16x32xbf16>
    %c0_283 = arith.constant 0 : index
    %c24_284 = arith.constant 24 : index
    %312 = vector.load %arg0[%c0_283, %c24_284] : memref<32x64xbf16, #tpu.memory_space<vmem>>, vector<32x22xbf16>
    %cst_285 = arith.constant dense<0.000000e+00> : vector<16x22xf32>
    %313 = tpu.matmul %311, %312, %cst_285 {dimension_numbers = #tpu.dot_dimension_numbers<[1], [0], [0], [1], [0, 0, 1, 1], [], []>} : vector<16x32xbf16>, vector<32x22xbf16>, vector<16x22xf32> -> vector<16x22xf32>
    %314 = arith.addf %309, %313 : vector<16x22xf32>
    %c51 = arith.constant 51 : index
    %c0_286 = arith.constant 0 : index
    %c0_287 = arith.constant 0 : index
    %315 = vector.load %arg1[%c51, %c0_286, %c0_287] : memref<64x16x32xbf16, #tpu.memory_space<vmem>>, vector<1x16x32xbf16>
    %316 = vector.shape_cast %315 : vector<1x16x32xbf16> to vector<16x32xbf16>
    %c0_288 = arith.constant 0 : index
    %c25_289 = arith.constant 25 : index
    %317 = vector.load %arg0[%c0_288, %c25_289] : memref<32x64xbf16, #tpu.memory_space<vmem>>, vector<32x22xbf16>
    %cst_290 = arith.constant dense<0.000000e+00> : vector<16x22xf32>
    %318 = tpu.matmul %316, %317, %cst_290 {dimension_numbers = #tpu.dot_dimension_numbers<[1], [0], [0], [1], [0, 0, 1, 1], [], []>} : vector<16x32xbf16>, vector<32x22xbf16>, vector<16x22xf32> -> vector<16x22xf32>
    %319 = arith.addf %314, %318 : vector<16x22xf32>
    %c52 = arith.constant 52 : index
    %c0_291 = arith.constant 0 : index
    %c0_292 = arith.constant 0 : index
    %320 = vector.load %arg1[%c52, %c0_291, %c0_292] : memref<64x16x32xbf16, #tpu.memory_space<vmem>>, vector<1x16x32xbf16>
    %321 = vector.shape_cast %320 : vector<1x16x32xbf16> to vector<16x32xbf16>
    %c0_293 = arith.constant 0 : index
    %c36_294 = arith.constant 36 : index
    %322 = vector.load %arg0[%c0_293, %c36_294] : memref<32x64xbf16, #tpu.memory_space<vmem>>, vector<32x22xbf16>
    %cst_295 = arith.constant dense<0.000000e+00> : vector<16x22xf32>
    %323 = tpu.matmul %321, %322, %cst_295 {dimension_numbers = #tpu.dot_dimension_numbers<[1], [0], [0], [1], [0, 0, 1, 1], [], []>} : vector<16x32xbf16>, vector<32x22xbf16>, vector<16x22xf32> -> vector<16x22xf32>
    %324 = arith.addf %319, %323 : vector<16x22xf32>
    %c53 = arith.constant 53 : index
    %c0_296 = arith.constant 0 : index
    %c0_297 = arith.constant 0 : index
    %325 = vector.load %arg1[%c53, %c0_296, %c0_297] : memref<64x16x32xbf16, #tpu.memory_space<vmem>>, vector<1x16x32xbf16>
    %326 = vector.shape_cast %325 : vector<1x16x32xbf16> to vector<16x32xbf16>
    %c0_298 = arith.constant 0 : index
    %c37_299 = arith.constant 37 : index
    %327 = vector.load %arg0[%c0_298, %c37_299] : memref<32x64xbf16, #tpu.memory_space<vmem>>, vector<32x22xbf16>
    %cst_300 = arith.constant dense<0.000000e+00> : vector<16x22xf32>
    %328 = tpu.matmul %326, %327, %cst_300 {dimension_numbers = #tpu.dot_dimension_numbers<[1], [0], [0], [1], [0, 0, 1, 1], [], []>} : vector<16x32xbf16>, vector<32x22xbf16>, vector<16x22xf32> -> vector<16x22xf32>
    %329 = arith.addf %324, %328 : vector<16x22xf32>
    %c54 = arith.constant 54 : index
    %c0_301 = arith.constant 0 : index
    %c0_302 = arith.constant 0 : index
    %330 = vector.load %arg1[%c54, %c0_301, %c0_302] : memref<64x16x32xbf16, #tpu.memory_space<vmem>>, vector<1x16x32xbf16>
    %331 = vector.shape_cast %330 : vector<1x16x32xbf16> to vector<16x32xbf16>
    %c0_303 = arith.constant 0 : index
    %c40_304 = arith.constant 40 : index
    %332 = vector.load %arg0[%c0_303, %c40_304] : memref<32x64xbf16, #tpu.memory_space<vmem>>, vector<32x22xbf16>
    %cst_305 = arith.constant dense<0.000000e+00> : vector<16x22xf32>
    %333 = tpu.matmul %331, %332, %cst_305 {dimension_numbers = #tpu.dot_dimension_numbers<[1], [0], [0], [1], [0, 0, 1, 1], [], []>} : vector<16x32xbf16>, vector<32x22xbf16>, vector<16x22xf32> -> vector<16x22xf32>
    %334 = arith.addf %329, %333 : vector<16x22xf32>
    %c55 = arith.constant 55 : index
    %c0_306 = arith.constant 0 : index
    %c0_307 = arith.constant 0 : index
    %335 = vector.load %arg1[%c55, %c0_306, %c0_307] : memref<64x16x32xbf16, #tpu.memory_space<vmem>>, vector<1x16x32xbf16>
    %336 = vector.shape_cast %335 : vector<1x16x32xbf16> to vector<16x32xbf16>
    %c0_308 = arith.constant 0 : index
    %c41_309 = arith.constant 41 : index
    %337 = vector.load %arg0[%c0_308, %c41_309] : memref<32x64xbf16, #tpu.memory_space<vmem>>, vector<32x22xbf16>
    %cst_310 = arith.constant dense<0.000000e+00> : vector<16x22xf32>
    %338 = tpu.matmul %336, %337, %cst_310 {dimension_numbers = #tpu.dot_dimension_numbers<[1], [0], [0], [1], [0, 0, 1, 1], [], []>} : vector<16x32xbf16>, vector<32x22xbf16>, vector<16x22xf32> -> vector<16x22xf32>
    %339 = arith.addf %334, %338 : vector<16x22xf32>
    %340 = vector.broadcast %0 : vector<16x1xf32> to vector<16x22xf32>
    %341 = arith.addf %339, %340 : vector<16x22xf32>
    %cst_311 = arith.constant 0.000000e+00 : f32
    %342 = vector.broadcast %cst_311 : f32 to vector<16x22xf32>
    %343 = arith.cmpf oge, %341, %342 : vector<16x22xf32>
    %cst_312 = arith.constant 2.000000e-01 : f32
    %344 = vector.broadcast %cst_312 : f32 to vector<16x22xf32>
    %345 = arith.mulf %344, %341 : vector<16x22xf32>
    %346 = arith.select %343, %341, %345 : vector<16x22xi1>, vector<16x22xf32>
    %347 = arith.truncf %346 : vector<16x22xf32> to vector<16x22xbf16>
    %c6_313 = arith.constant 6 : index
    %c0_314 = arith.constant 0 : index
    %c0_315 = arith.constant 0 : index
    %348 = vector.load %arg3[%c6_313, %c0_314, %c0_315] : memref<8x16x22xbf16, #tpu.memory_space<vmem>>, vector<1x16x22xbf16>
    %349 = vector.shape_cast %348 : vector<1x16x22xbf16> to vector<16x22xbf16>
    %350 = vector.shape_cast %347 : vector<16x22xbf16> to vector<1x16x22xbf16>
    tpu.vector_store %arg3[%c6_313, %c0_314, %c0_315], %350 {strides = array<i32>} : memref<8x16x22xbf16, #tpu.memory_space<vmem>>, vector<1x16x22xbf16>,
    %c56 = arith.constant 56 : index
    %c0_316 = arith.constant 0 : index
    %c0_317 = arith.constant 0 : index
    %351 = vector.load %arg1[%c56, %c0_316, %c0_317] : memref<64x16x32xbf16, #tpu.memory_space<vmem>>, vector<1x16x32xbf16>
    %352 = vector.shape_cast %351 : vector<1x16x32xbf16> to vector<16x32xbf16>
    %c0_318 = arith.constant 0 : index
    %c21_319 = arith.constant 21 : index
    %353 = vector.load %arg0[%c0_318, %c21_319] : memref<32x64xbf16, #tpu.memory_space<vmem>>, vector<32x22xbf16>
    %cst_320 = arith.constant dense<0.000000e+00> : vector<16x22xf32>
    %354 = tpu.matmul %352, %353, %cst_320 {dimension_numbers = #tpu.dot_dimension_numbers<[1], [0], [0], [1], [0, 0, 1, 1], [], []>} : vector<16x32xbf16>, vector<32x22xbf16>, vector<16x22xf32> -> vector<16x22xf32>
    %c57 = arith.constant 57 : index
    %c0_321 = arith.constant 0 : index
    %c0_322 = arith.constant 0 : index
    %355 = vector.load %arg1[%c57, %c0_321, %c0_322] : memref<64x16x32xbf16, #tpu.memory_space<vmem>>, vector<1x16x32xbf16>
    %356 = vector.shape_cast %355 : vector<1x16x32xbf16> to vector<16x32xbf16>
    %c0_323 = arith.constant 0 : index
    %c22_324 = arith.constant 22 : index
    %357 = vector.load %arg0[%c0_323, %c22_324] : memref<32x64xbf16, #tpu.memory_space<vmem>>, vector<32x22xbf16>
    %cst_325 = arith.constant dense<0.000000e+00> : vector<16x22xf32>
    %358 = tpu.matmul %356, %357, %cst_325 {dimension_numbers = #tpu.dot_dimension_numbers<[1], [0], [0], [1], [0, 0, 1, 1], [], []>} : vector<16x32xbf16>, vector<32x22xbf16>, vector<16x22xf32> -> vector<16x22xf32>
    %359 = arith.addf %354, %358 : vector<16x22xf32>
    %c58 = arith.constant 58 : index
    %c0_326 = arith.constant 0 : index
    %c0_327 = arith.constant 0 : index
    %360 = vector.load %arg1[%c58, %c0_326, %c0_327] : memref<64x16x32xbf16, #tpu.memory_space<vmem>>, vector<1x16x32xbf16>
    %361 = vector.shape_cast %360 : vector<1x16x32xbf16> to vector<16x32xbf16>
    %c0_328 = arith.constant 0 : index
    %c25_329 = arith.constant 25 : index
    %362 = vector.load %arg0[%c0_328, %c25_329] : memref<32x64xbf16, #tpu.memory_space<vmem>>, vector<32x22xbf16>
    %cst_330 = arith.constant dense<0.000000e+00> : vector<16x22xf32>
    %363 = tpu.matmul %361, %362, %cst_330 {dimension_numbers = #tpu.dot_dimension_numbers<[1], [0], [0], [1], [0, 0, 1, 1], [], []>} : vector<16x32xbf16>, vector<32x22xbf16>, vector<16x22xf32> -> vector<16x22xf32>
    %364 = arith.addf %359, %363 : vector<16x22xf32>
    %c59 = arith.constant 59 : index
    %c0_331 = arith.constant 0 : index
    %c0_332 = arith.constant 0 : index
    %365 = vector.load %arg1[%c59, %c0_331, %c0_332] : memref<64x16x32xbf16, #tpu.memory_space<vmem>>, vector<1x16x32xbf16>
    %366 = vector.shape_cast %365 : vector<1x16x32xbf16> to vector<16x32xbf16>
    %c0_333 = arith.constant 0 : index
    %c26_334 = arith.constant 26 : index
    %367 = vector.load %arg0[%c0_333, %c26_334] : memref<32x64xbf16, #tpu.memory_space<vmem>>, vector<32x22xbf16>
    %cst_335 = arith.constant dense<0.000000e+00> : vector<16x22xf32>
    %368 = tpu.matmul %366, %367, %cst_335 {dimension_numbers = #tpu.dot_dimension_numbers<[1], [0], [0], [1], [0, 0, 1, 1], [], []>} : vector<16x32xbf16>, vector<32x22xbf16>, vector<16x22xf32> -> vector<16x22xf32>
    %369 = arith.addf %364, %368 : vector<16x22xf32>
    %c60 = arith.constant 60 : index
    %c0_336 = arith.constant 0 : index
    %c0_337 = arith.constant 0 : index
    %370 = vector.load %arg1[%c60, %c0_336, %c0_337] : memref<64x16x32xbf16, #tpu.memory_space<vmem>>, vector<1x16x32xbf16>
    %371 = vector.shape_cast %370 : vector<1x16x32xbf16> to vector<16x32xbf16>
    %c0_338 = arith.constant 0 : index
    %c37_339 = arith.constant 37 : index
    %372 = vector.load %arg0[%c0_338, %c37_339] : memref<32x64xbf16, #tpu.memory_space<vmem>>, vector<32x22xbf16>
    %cst_340 = arith.constant dense<0.000000e+00> : vector<16x22xf32>
    %373 = tpu.matmul %371, %372, %cst_340 {dimension_numbers = #tpu.dot_dimension_numbers<[1], [0], [0], [1], [0, 0, 1, 1], [], []>} : vector<16x32xbf16>, vector<32x22xbf16>, vector<16x22xf32> -> vector<16x22xf32>
    %374 = arith.addf %369, %373 : vector<16x22xf32>
    %c61 = arith.constant 61 : index
    %c0_341 = arith.constant 0 : index
    %c0_342 = arith.constant 0 : index
    %375 = vector.load %arg1[%c61, %c0_341, %c0_342] : memref<64x16x32xbf16, #tpu.memory_space<vmem>>, vector<1x16x32xbf16>
    %376 = vector.shape_cast %375 : vector<1x16x32xbf16> to vector<16x32xbf16>
    %c0_343 = arith.constant 0 : index
    %c38_344 = arith.constant 38 : index
    %377 = vector.load %arg0[%c0_343, %c38_344] : memref<32x64xbf16, #tpu.memory_space<vmem>>, vector<32x22xbf16>
    %cst_345 = arith.constant dense<0.000000e+00> : vector<16x22xf32>
    %378 = tpu.matmul %376, %377, %cst_345 {dimension_numbers = #tpu.dot_dimension_numbers<[1], [0], [0], [1], [0, 0, 1, 1], [], []>} : vector<16x32xbf16>, vector<32x22xbf16>, vector<16x22xf32> -> vector<16x22xf32>
    %379 = arith.addf %374, %378 : vector<16x22xf32>
    %c62 = arith.constant 62 : index
    %c0_346 = arith.constant 0 : index
    %c0_347 = arith.constant 0 : index
    %380 = vector.load %arg1[%c62, %c0_346, %c0_347] : memref<64x16x32xbf16, #tpu.memory_space<vmem>>, vector<1x16x32xbf16>
    %381 = vector.shape_cast %380 : vector<1x16x32xbf16> to vector<16x32xbf16>
    %c0_348 = arith.constant 0 : index
    %c41_349 = arith.constant 41 : index
    %382 = vector.load %arg0[%c0_348, %c41_349] : memref<32x64xbf16, #tpu.memory_space<vmem>>, vector<32x22xbf16>
    %cst_350 = arith.constant dense<0.000000e+00> : vector<16x22xf32>
    %383 = tpu.matmul %381, %382, %cst_350 {dimension_numbers = #tpu.dot_dimension_numbers<[1], [0], [0], [1], [0, 0, 1, 1], [], []>} : vector<16x32xbf16>, vector<32x22xbf16>, vector<16x22xf32> -> vector<16x22xf32>
    %384 = arith.addf %379, %383 : vector<16x22xf32>
    %c63 = arith.constant 63 : index
    %c0_351 = arith.constant 0 : index
    %c0_352 = arith.constant 0 : index
    %385 = vector.load %arg1[%c63, %c0_351, %c0_352] : memref<64x16x32xbf16, #tpu.memory_space<vmem>>, vector<1x16x32xbf16>
    %386 = vector.shape_cast %385 : vector<1x16x32xbf16> to vector<16x32xbf16>
    %c0_353 = arith.constant 0 : index
    %c42_354 = arith.constant 42 : index
    %387 = vector.load %arg0[%c0_353, %c42_354] : memref<32x64xbf16, #tpu.memory_space<vmem>>, vector<32x22xbf16>
    %cst_355 = arith.constant dense<0.000000e+00> : vector<16x22xf32>
    %388 = tpu.matmul %386, %387, %cst_355 {dimension_numbers = #tpu.dot_dimension_numbers<[1], [0], [0], [1], [0, 0, 1, 1], [], []>} : vector<16x32xbf16>, vector<32x22xbf16>, vector<16x22xf32> -> vector<16x22xf32>
    %389 = arith.addf %384, %388 : vector<16x22xf32>
    %390 = vector.broadcast %0 : vector<16x1xf32> to vector<16x22xf32>
    %391 = arith.addf %389, %390 : vector<16x22xf32>
    %cst_356 = arith.constant 0.000000e+00 : f32
    %392 = vector.broadcast %cst_356 : f32 to vector<16x22xf32>
    %393 = arith.cmpf oge, %391, %392 : vector<16x22xf32>
    %cst_357 = arith.constant 2.000000e-01 : f32
    %394 = vector.broadcast %cst_357 : f32 to vector<16x22xf32>
    %395 = arith.mulf %394, %391 : vector<16x22xf32>
    %396 = arith.select %393, %391, %395 : vector<16x22xi1>, vector<16x22xf32>
    %397 = arith.truncf %396 : vector<16x22xf32> to vector<16x22xbf16>
    %c7_358 = arith.constant 7 : index
    %c0_359 = arith.constant 0 : index
    %c0_360 = arith.constant 0 : index
    %398 = vector.load %arg3[%c7_358, %c0_359, %c0_360] : memref<8x16x22xbf16, #tpu.memory_space<vmem>>, vector<1x16x22xbf16>
    %399 = vector.shape_cast %398 : vector<1x16x22xbf16> to vector<16x22xbf16>
    %400 = vector.shape_cast %397 : vector<16x22xbf16> to vector<1x16x22xbf16>
    tpu.vector_store %arg3[%c7_358, %c0_359, %c0_360], %400 {strides = array<i32>} : memref<8x16x22xbf16, #tpu.memory_space<vmem>>, vector<1x16x22xbf16>,
    return
  }
}

</mosaic_0001>

<llo_original>
// kernel: tpu_custom_call.1
$region0: #{tpu_custom_call.1}
  #allocation0 [shape = 'u32[]', space=smem, size = 0x4, offset = 0x4, fixed_abs, tag = 'smem constant byte address 0x4 - core index']
  #allocation1 [shape = 'u32[144,128]{1,0:T(1,128)}', space=vmem, size = 0x12000, scoped, tag = 'internal scratch']
  %s0 = inlined_call_operand.vmem [shape: bf16[32,64], index: 0, kind: input, shape index: {}]
  %s1 = inlined_call_operand.vmem [shape: bf16[64,16,32], index: 1, kind: input, shape index: {}]
  %s2 = inlined_call_operand.vmem [shape: f32[16,1], index: 2, kind: input, shape index: {}]
  %s3 = inlined_call_operand.hbm [shape: bf16[8,16,22], index: 3, kind: output, shape index: {}]
  %s4 = sld [smem:[#allocation0]]
  $region22: #{tpu_custom_call.1} parent=0
    _
  %s6 = ssub.s32 1, %s4
  %s7 = scalar_select 0, %s6, %s4
  $region1: #{tpu_custom_call.1} parent=0
    #allocation2 [shape = 'u8[32768]{0}', space=vmem, size = 0x8000, scoped, tag = 'output window, operand 0, single buffered']
    #allocation3 [shape = 's32[1]{0}', space=sflag, size = 0x4, scoped, tag = 'scoped memory for tpu_custom_call.1']
    %8 = vsyncpa [#allocation3], 0
    // Predicated region
    $region2: #{tpu_custom_call.1} parent=1 // pred_check
      _
    $region3: #{tpu_custom_call.1} parent=1 // pred_check_branch
      %10 = sbr.rel (0) target = $region5
    $region4: #{tpu_custom_call.1} parent=1 // pred_region
      _
    $region5: #{tpu_custom_call.1} parent=1 // pred_fallthru
      _
    // Predicated region
    $region6: #{tpu_custom_call.1} parent=1 // pred_check
      _
    $region7: #{tpu_custom_call.1} parent=1 // pred_check_branch
      %12 = sbr.rel (0) target = $region9
    $region8: #{tpu_custom_call.1} parent=1 // pred_region
      _
    $region9: #{tpu_custom_call.1} parent=1 // pred_fallthru
      _
    // Predicated region
    $region10: #{tpu_custom_call.1} parent=1 // pred_check
      _
    $region11: #{tpu_custom_call.1} parent=1 // pred_check_branch
      %14 = sbr.rel (0) target = $region13
    $region12: #{tpu_custom_call.1} parent=1 // pred_region
      _
    $region13: #{tpu_custom_call.1} parent=1 // pred_fallthru
      _
    %v16 = vld [vmem:[%s2] sm:$0xff]
    %v17 = vld [vmem:[%s2 + $0x8] sm:$0xff]
    %v18 = vld [vmem:[%s1] sm:$0xf]
    %v19 = vld [vmem:[%s1 + $0x4] sm:$0xf]
    %v20 = vld [vmem:[%s0] sm:$0xf]
    %v21 = vld [vmem:[%s0 + $0x4] sm:$0xf]
    %v22 = vld [vmem:[%s0 + $0x8] sm:$0xf]
    %v23 = vld [vmem:[%s0 + $0xc] sm:$0xf]
    %s24 = scalar_lea.vmem %s1, 8
    %v25 = vld [vmem:[%s24] sm:$0xf]
    %v26 = vld [vmem:[%s24 + $0x4] sm:$0xf]
    %v29 = vunpack.c.l.b16 %v25
    %v30 = vunpack.c.l.b16 %v26
    %v31 = vpack.c.b16 %v30, %v29
    %v36 = vunpack.c.l.b16 %v20
    %v37 = vunpack.c.l.b16 %v21
    %v38 = vunpack.c.l.b16 %v22
    %v39 = vunpack.c.l.b16 %v23
    %v40 = vpack.c.b16 %v37, %v36
    %v41 = vpack.c.b16 %v39, %v38
    %42 = vrot.lane.b32.xlu0 %v40, 127
    %v43 = vpop.permute.xlu0 %42
    %44 = vrot.lane.b32.xlu0 %v41, 127
    %v45 = vpop.permute.xlu0 %44
    %vm48 = vcmask 261120
    %v50 = vsel %vm48, %v31, 0
    %52 = vmatprep.subr.bf16.mxu0 0
    %53 = vmatpush1.bf16.msra.mxu0 %v43
    %54 = vmatprep.subr.bf16.mxu0 0
    %55 = vmatpush1.bf16.msra.mxu0 %v45
    %56 = vmatprep.subr.bf16.mxu0 0
    %57 = vmatpush1.bf16.msra.mxu0 0
    %58 = vmatprep.subr.bf16.mxu0 0
    %59 = vmatpush1.bf16.msra.mxu0 0
    %60 = vmatprep.subr.bf16.mxu0 0
    %61 = vmatpush1.bf16.msra.mxu0 0
    %62 = vmatprep.subr.bf16.mxu0 0
    %63 = vmatpush1.bf16.msra.mxu0 0
    %64 = vmatprep.subr.bf16.mxu0 0
    %65 = vmatpush1.bf16.msra.mxu0 0
    %66 = vmatprep.subr.bf16.mxu0 0
    %67 = vmatpush1.bf16.msra.mxu0 0
    %68 = vmatprep.subr.bf16.mxu0 0
    %69 = vmatpush1.bf16.msra.mxu0 0
    %70 = vmatprep.subr.bf16.mxu0 0
    %71 = vmatpush1.bf16.msra.mxu0 0
    %72 = vmatprep.subr.bf16.mxu0 0
    %73 = vmatpush1.bf16.msra.mxu0 0
    %74 = vmatprep.subr.bf16.mxu0 0
    %75 = vmatpush1.bf16.msra.mxu0 0
    %76 = vmatprep.subr.bf16.mxu0 0
    %77 = vmatpush1.bf16.msra.mxu0 0
    %78 = vmatprep.subr.bf16.mxu0 0
    %79 = vmatpush1.bf16.msra.mxu0 0
    %80 = vmatprep.subr.bf16.mxu0 0
    %81 = vmatpush1.bf16.msra.mxu0 0
    %82 = vmatprep.subr.bf16.mxu0 0
    %83 = vmatpush1.bf16.msra.mxu0 0
    %84 = vmatprep.mubr.bf16.mxu0 0
    %85 = vmatmul.mubr.bf16.gmra.mrb[0].mxu0 %v50
    %v86 = vpop.f32.mrb[0].mxu0
    %v87 = vadd.f32 0.0, %v86
    %v88 = vpop.f32.mrb[0].mxu0
    %v89 = vpop.f32.mrb[0].mxu0
    %v90 = vadd.f32 0.0, %v89
    %v91 = vpop.f32.mrb[0].mxu0
    %92 = vdwg.mxu0
    %v95 = vunpack.c.l.b16 %v18
    %v96 = vunpack.c.l.b16 %v19
    %v97 = vpack.c.b16 %v96, %v95
    %v101 = vsel %vm48, %v97, 0
    %103 = vmatprep.subr.bf16.mxu0 0
    %104 = vmatpush1.bf16.msra.mxu0 %v40
    %105 = vmatprep.subr.bf16.mxu0 0
    %106 = vmatpush1.bf16.msra.mxu0 %v41
    %107 = vmatprep.subr.bf16.mxu0 0
    %108 = vmatpush1.bf16.msra.mxu0 0
    %109 = vmatprep.subr.bf16.mxu0 0
    %110 = vmatpush1.bf16.msra.mxu0 0
    %111 = vmatprep.subr.bf16.mxu0 0
    %112 = vmatpush1.bf16.msra.mxu0 0
    %113 = vmatprep.subr.bf16.mxu0 0
    %114 = vmatpush1.bf16.msra.mxu0 0
    %115 = vmatprep.subr.bf16.mxu0 0
    %116 = vmatpush1.bf16.msra.mxu0 0
    %117 = vmatprep.subr.bf16.mxu0 0
    %118 = vmatpush1.bf16.msra.mxu0 0
    %119 = vmatprep.subr.bf16.mxu0 0
    %120 = vmatpush1.bf16.msra.mxu0 0
    %121 = vmatprep.subr.bf16.mxu0 0
    %122 = vmatpush1.bf16.msra.mxu0 0
    %123 = vmatprep.subr.bf16.mxu0 0
    %124 = vmatpush1.bf16.msra.mxu0 0
    %125 = vmatprep.subr.bf16.mxu0 0
    %126 = vmatpush1.bf16.msra.mxu0 0
    %127 = vmatprep.subr.bf16.mxu0 0
    %128 = vmatpush1.bf16.msra.mxu0 0
    %129 = vmatprep.subr.bf16.mxu0 0
    %130 = vmatpush1.bf16.msra.mxu0 0
    %131 = vmatprep.subr.bf16.mxu0 0
    %132 = vmatpush1.bf16.msra.mxu0 0
    %133 = vmatprep.subr.bf16.mxu0 0
    %134 = vmatpush1.bf16.msra.mxu0 0
    %135 = vmatprep.mubr.bf16.mxu0 0
    %136 = vmatmul.mubr.bf16.gmra.mrb[0].mxu0 %v101
    %v137 = vpop.f32.mrb[0].mxu0
    %v138 = vadd.f32 %v87, %v137
    %v139 = vpop.f32.mrb[0].mxu0
    %v140 = vpop.f32.mrb[0].mxu0
    %v141 = vadd.f32 %v90, %v140
    %v142 = vpop.f32.mrb[0].mxu0
    %143 = vdwg.mxu0
    %s144 = scalar_lea.vmem %s1, 16
    %v145 = vld [vmem:[%s144] sm:$0xf]
    %v146 = vld [vmem:[%s144 + $0x4] sm:$0xf]
    %v149 = vunpack.c.l.b16 %v145
    %v150 = vunpack.c.l.b16 %v146
    %v151 = vpack.c.b16 %v150, %v149
    %152 = vrot.lane.b32.xlu0 %v40, 124
    %v153 = vpop.permute.xlu0 %152
    %154 = vrot.lane.b32.xlu0 %v41, 124
    %v155 = vpop.permute.xlu0 %154
    %v159 = vsel %vm48, %v151, 0
    %161 = vmatprep.subr.bf16.mxu0 0
    %162 = vmatpush1.bf16.msra.mxu0 %v153
    %163 = vmatprep.subr.bf16.mxu0 0
    %164 = vmatpush1.bf16.msra.mxu0 %v155
    %165 = vmatprep.subr.bf16.mxu0 0
    %166 = vmatpush1.bf16.msra.mxu0 0
    %167 = vmatprep.subr.bf16.mxu0 0
    %168 = vmatpush1.bf16.msra.mxu0 0
    %169 = vmatprep.subr.bf16.mxu0 0
    %170 = vmatpush1.bf16.msra.mxu0 0
    %171 = vmatprep.subr.bf16.mxu0 0
    %172 = vmatpush1.bf16.msra.mxu0 0
    %173 = vmatprep.subr.bf16.mxu0 0
    %174 = vmatpush1.bf16.msra.mxu0 0
    %175 = vmatprep.subr.bf16.mxu0 0
    %176 = vmatpush1.bf16.msra.mxu0 0
    %177 = vmatprep.subr.bf16.mxu0 0
    %178 = vmatpush1.bf16.msra.mxu0 0
    %179 = vmatprep.subr.bf16.mxu0 0
    %180 = vmatpush1.bf16.msra.mxu0 0
    %181 = vmatprep.subr.bf16.mxu0 0
    %182 = vmatpush1.bf16.msra.mxu0 0
    %183 = vmatprep.subr.bf16.mxu0 0
    %184 = vmatpush1.bf16.msra.mxu0 0
    %185 = vmatprep.subr.bf16.mxu0 0
    %186 = vmatpush1.bf16.msra.mxu0 0
    %187 = vmatprep.subr.bf16.mxu0 0
    %188 = vmatpush1.bf16.msra.mxu0 0
    %189 = vmatprep.subr.bf16.mxu0 0
    %190 = vmatpush1.bf16.msra.mxu0 0
    %191 = vmatprep.subr.bf16.mxu0 0
    %192 = vmatpush1.bf16.msra.mxu0 0
    %193 = vmatprep.mubr.bf16.mxu0 0
    %194 = vmatmul.mubr.bf16.gmra.mrb[0].mxu0 %v159
    %v195 = vpop.f32.mrb[0].mxu0
    %v196 = vadd.f32 0.0, %v195
    %v197 = vpop.f32.mrb[0].mxu0
    %v198 = vpop.f32.mrb[0].mxu0
    %v199 = vadd.f32 0.0, %v198
    %v200 = vpop.f32.mrb[0].mxu0
    %201 = vdwg.mxu0
    %v202 = vadd.f32 %v138, %v196
    %v203 = vadd.f32 %v141, %v199
    %s204 = scalar_lea.vmem %s1, 24
    %v205 = vld [vmem:[%s204] sm:$0xf]
    %v206 = vld [vmem:[%s204 + $0x4] sm:$0xf]
    %v209 = vunpack.c.l.b16 %v205
    %v210 = vunpack.c.l.b16 %v206
    %v211 = vpack.c.b16 %v210, %v209
    %212 = vrot.lane.b32.xlu0 %v40, 123
    %v213 = vpop.permute.xlu0 %212
    %214 = vrot.lane.b32.xlu0 %v41, 123
    %v215 = vpop.permute.xlu0 %214
    %v219 = vsel %vm48, %v211, 0
    %221 = vmatprep.subr.bf16.mxu0 0
    %222 = vmatpush1.bf16.msra.mxu0 %v213
    %223 = vmatprep.subr.bf16.mxu0 0
    %224 = vmatpush1.bf16.msra.mxu0 %v215
    %225 = vmatprep.subr.bf16.mxu0 0
    %226 = vmatpush1.bf16.msra.mxu0 0
    %227 = vmatprep.subr.bf16.mxu0 0
    %228 = vmatpush1.bf16.msra.mxu0 0
    %229 = vmatprep.subr.bf16.mxu0 0
    %230 = vmatpush1.bf16.msra.mxu0 0
    %231 = vmatprep.subr.bf16.mxu0 0
    %232 = vmatpush1.bf16.msra.mxu0 0
    %233 = vmatprep.subr.bf16.mxu0 0
    %234 = vmatpush1.bf16.msra.mxu0 0
    %235 = vmatprep.subr.bf16.mxu0 0
    %236 = vmatpush1.bf16.msra.mxu0 0
    %237 = vmatprep.subr.bf16.mxu0 0
    %238 = vmatpush1.bf16.msra.mxu0 0
    %239 = vmatprep.subr.bf16.mxu0 0
    %240 = vmatpush1.bf16.msra.mxu0 0
    %241 = vmatprep.subr.bf16.mxu0 0
    %242 = vmatpush1.bf16.msra.mxu0 0
    %243 = vmatprep.subr.bf16.mxu0 0
    %244 = vmatpush1.bf16.msra.mxu0 0
    %245 = vmatprep.subr.bf16.mxu0 0
    %246 = vmatpush1.bf16.msra.mxu0 0
    %247 = vmatprep.subr.bf16.mxu0 0
    %248 = vmatpush1.bf16.msra.mxu0 0
    %249 = vmatprep.subr.bf16.mxu0 0
    %250 = vmatpush1.bf16.msra.mxu0 0
    %251 = vmatprep.subr.bf16.mxu0 0
    %252 = vmatpush1.bf16.msra.mxu0 0
    %253 = vmatprep.mubr.bf16.mxu0 0
    %254 = vmatmul.mubr.bf16.gmra.mrb[0].mxu0 %v219
    %v255 = vpop.f32.mrb[0].mxu0
    %v256 = vadd.f32 0.0, %v255
    %v257 = vpop.f32.mrb[0].mxu0
    %v258 = vpop.f32.mrb[0].mxu0
    %v259 = vadd.f32 0.0, %v258
    %v260 = vpop.f32.mrb[0].mxu0
    %261 = vdwg.mxu0
    %v262 = vadd.f32 %v202, %v256
    %v263 = vadd.f32 %v203, %v259
    %s264 = scalar_lea.vmem %s1, 32
    %v265 = vld [vmem:[%s264] sm:$0xf]
    %v266 = vld [vmem:[%s264 + $0x4] sm:$0xf]
    %v269 = vunpack.c.l.b16 %v265
    %v270 = vunpack.c.l.b16 %v266
    %v271 = vpack.c.b16 %v270, %v269
    %272 = vrot.lane.b32.xlu0 %v40, 112
    %v273 = vpop.permute.xlu0 %272
    %274 = vrot.lane.b32.xlu0 %v41, 112
    %v275 = vpop.permute.xlu0 %274
    %v279 = vsel %vm48, %v271, 0
    %281 = vmatprep.subr.bf16.mxu0 0
    %282 = vmatpush1.bf16.msra.mxu0 %v273
    %283 = vmatprep.subr.bf16.mxu0 0
    %284 = vmatpush1.bf16.msra.mxu0 %v275
    %285 = vmatprep.subr.bf16.mxu0 0
    %286 = vmatpush1.bf16.msra.mxu0 0
    %287 = vmatprep.subr.bf16.mxu0 0
    %288 = vmatpush1.bf16.msra.mxu0 0
    %289 = vmatprep.subr.bf16.mxu0 0
    %290 = vmatpush1.bf16.msra.mxu0 0
    %291 = vmatprep.subr.bf16.mxu0 0
    %292 = vmatpush1.bf16.msra.mxu0 0
    %293 = vmatprep.subr.bf16.mxu0 0
    %294 = vmatpush1.bf16.msra.mxu0 0
    %295 = vmatprep.subr.bf16.mxu0 0
    %296 = vmatpush1.bf16.msra.mxu0 0
    %297 = vmatprep.subr.bf16.mxu0 0
    %298 = vmatpush1.bf16.msra.mxu0 0
    %299 = vmatprep.subr.bf16.mxu0 0
    %300 = vmatpush1.bf16.msra.mxu0 0
    %301 = vmatprep.subr.bf16.mxu0 0
    %302 = vmatpush1.bf16.msra.mxu0 0
    %303 = vmatprep.subr.bf16.mxu0 0
    %304 = vmatpush1.bf16.msra.mxu0 0
    %305 = vmatprep.subr.bf16.mxu0 0
    %306 = vmatpush1.bf16.msra.mxu0 0
    %307 = vmatprep.subr.bf16.mxu0 0
    %308 = vmatpush1.bf16.msra.mxu0 0
    %309 = vmatprep.subr.bf16.mxu0 0
    %310 = vmatpush1.bf16.msra.mxu0 0
    %311 = vmatprep.subr.bf16.mxu0 0
    %312 = vmatpush1.bf16.msra.mxu0 0
    %313 = vmatprep.mubr.bf16.mxu0 0
    %314 = vmatmul.mubr.bf16.gmra.mrb[0].mxu0 %v279
    %v315 = vpop.f32.mrb[0].mxu0
    %v316 = vadd.f32 0.0, %v315
    %v317 = vpop.f32.mrb[0].mxu0
    %v318 = vpop.f32.mrb[0].mxu0
    %v319 = vadd.f32 0.0, %v318
    %v320 = vpop.f32.mrb[0].mxu0
    %321 = vdwg.mxu0
    %v322 = vadd.f32 %v262, %v316
    %v323 = vadd.f32 %v263, %v319
    %s324 = scalar_lea.vmem %s1, 40
    %v325 = vld [vmem:[%s324] sm:$0xf]
    %v326 = vld [vmem:[%s324 + $0x4] sm:$0xf]
    %v329 = vunpack.c.l.b16 %v325
    %v330 = vunpack.c.l.b16 %v326
    %v331 = vpack.c.b16 %v330, %v329
    %332 = vrot.lane.b32.xlu0 %v40, 111
    %v333 = vpop.permute.xlu0 %332
    %334 = vrot.lane.b32.xlu0 %v41, 111
    %v335 = vpop.permute.xlu0 %334
    %v339 = vsel %vm48, %v331, 0
    %341 = vmatprep.subr.bf16.mxu0 0
    %342 = vmatpush1.bf16.msra.mxu0 %v333
    %343 = vmatprep.subr.bf16.mxu0 0
    %344 = vmatpush1.bf16.msra.mxu0 %v335
    %345 = vmatprep.subr.bf16.mxu0 0
    %346 = vmatpush1.bf16.msra.mxu0 0
    %347 = vmatprep.subr.bf16.mxu0 0
    %348 = vmatpush1.bf16.msra.mxu0 0
    %349 = vmatprep.subr.bf16.mxu0 0
    %350 = vmatpush1.bf16.msra.mxu0 0
    %351 = vmatprep.subr.bf16.mxu0 0
    %352 = vmatpush1.bf16.msra.mxu0 0
    %353 = vmatprep.subr.bf16.mxu0 0
    %354 = vmatpush1.bf16.msra.mxu0 0
    %355 = vmatprep.subr.bf16.mxu0 0
    %356 = vmatpush1.bf16.msra.mxu0 0
    %357 = vmatprep.subr.bf16.mxu0 0
    %358 = vmatpush1.bf16.msra.mxu0 0
    %359 = vmatprep.subr.bf16.mxu0 0
    %360 = vmatpush1.bf16.msra.mxu0 0
    %361 = vmatprep.subr.bf16.mxu0 0
    %362 = vmatpush1.bf16.msra.mxu0 0
    %363 = vmatprep.subr.bf16.mxu0 0
    %364 = vmatpush1.bf16.msra.mxu0 0
    %365 = vmatprep.subr.bf16.mxu0 0
    %366 = vmatpush1.bf16.msra.mxu0 0
    %367 = vmatprep.subr.bf16.mxu0 0
    %368 = vmatpush1.bf16.msra.mxu0 0
    %369 = vmatprep.subr.bf16.mxu0 0
    %370 = vmatpush1.bf16.msra.mxu0 0
    %371 = vmatprep.subr.bf16.mxu0 0
    %372 = vmatpush1.bf16.msra.mxu0 0
    %373 = vmatprep.mubr.bf16.mxu0 0
    %374 = vmatmul.mubr.bf16.gmra.mrb[0].mxu0 %v339
    %v375 = vpop.f32.mrb[0].mxu0
    %v376 = vadd.f32 0.0, %v375
    %v377 = vpop.f32.mrb[0].mxu0
    %v378 = vpop.f32.mrb[0].mxu0
    %v379 = vadd.f32 0.0, %v378
    %v380 = vpop.f32.mrb[0].mxu0
    %381 = vdwg.mxu0
    %v382 = vadd.f32 %v322, %v376
    %v383 = vadd.f32 %v323, %v379
    %s384 = scalar_lea.vmem %s1, 48
    %v385 = vld [vmem:[%s384] sm:$0xf]
    %v386 = vld [vmem:[%s384 + $0x4] sm:$0xf]
    %v389 = vunpack.c.l.b16 %v385
    %v390 = vunpack.c.l.b16 %v386
    %v391 = vpack.c.b16 %v390, %v389
    %392 = vrot.lane.b32.xlu0 %v40, 108
    %v393 = vpop.permute.xlu0 %392
    %394 = vrot.lane.b32.xlu0 %v41, 108
    %v395 = vpop.permute.xlu0 %394
    %v399 = vsel %vm48, %v391, 0
    %401 = vmatprep.subr.bf16.mxu0 0
    %402 = vmatpush1.bf16.msra.mxu0 %v393
    %403 = vmatprep.subr.bf16.mxu0 0
    %404 = vmatpush1.bf16.msra.mxu0 %v395
    %405 = vmatprep.subr.bf16.mxu0 0
    %406 = vmatpush1.bf16.msra.mxu0 0
    %407 = vmatprep.subr.bf16.mxu0 0
    %408 = vmatpush1.bf16.msra.mxu0 0
    %409 = vmatprep.subr.bf16.mxu0 0
    %410 = vmatpush1.bf16.msra.mxu0 0
    %411 = vmatprep.subr.bf16.mxu0 0
    %412 = vmatpush1.bf16.msra.mxu0 0
    %413 = vmatprep.subr.bf16.mxu0 0
    %414 = vmatpush1.bf16.msra.mxu0 0
    %415 = vmatprep.subr.bf16.mxu0 0
    %416 = vmatpush1.bf16.msra.mxu0 0
    %417 = vmatprep.subr.bf16.mxu0 0
    %418 = vmatpush1.bf16.msra.mxu0 0
    %419 = vmatprep.subr.bf16.mxu0 0
    %420 = vmatpush1.bf16.msra.mxu0 0
    %421 = vmatprep.subr.bf16.mxu0 0
    %422 = vmatpush1.bf16.msra.mxu0 0
    %423 = vmatprep.subr.bf16.mxu0 0
    %424 = vmatpush1.bf16.msra.mxu0 0
    %425 = vmatprep.subr.bf16.mxu0 0
    %426 = vmatpush1.bf16.msra.mxu0 0
    %427 = vmatprep.subr.bf16.mxu0 0
    %428 = vmatpush1.bf16.msra.mxu0 0
    %429 = vmatprep.subr.bf16.mxu0 0
    %430 = vmatpush1.bf16.msra.mxu0 0
    %431 = vmatprep.subr.bf16.mxu0 0
    %432 = vmatpush1.bf16.msra.mxu0 0
    %433 = vmatprep.mubr.bf16.mxu0 0
    %434 = vmatmul.mubr.bf16.gmra.mrb[0].mxu0 %v399
    %v435 = vpop.f32.mrb[0].mxu0
    %v436 = vadd.f32 0.0, %v435
    %v437 = vpop.f32.mrb[0].mxu0
    %v438 = vpop.f32.mrb[0].mxu0
    %v439 = vadd.f32 0.0, %v438
    %v440 = vpop.f32.mrb[0].mxu0
    %441 = vdwg.mxu0
    %v442 = vadd.f32 %v382, %v436
    %v443 = vadd.f32 %v383, %v439
    %s444 = scalar_lea.vmem %s1, 56
    %v445 = vld [vmem:[%s444] sm:$0xf]
    %v446 = vld [vmem:[%s444 + $0x4] sm:$0xf]
    %v449 = vunpack.c.l.b16 %v445
    %v450 = vunpack.c.l.b16 %v446
    %v451 = vpack.c.b16 %v450, %v449
    %452 = vrot.lane.b32.xlu0 %v40, 107
    %v453 = vpop.permute.xlu0 %452
    %454 = vrot.lane.b32.xlu0 %v41, 107
    %v455 = vpop.permute.xlu0 %454
    %v459 = vsel %vm48, %v451, 0
    %461 = vmatprep.subr.bf16.mxu0 0
    %462 = vmatpush1.bf16.msra.mxu0 %v453
    %463 = vmatprep.subr.bf16.mxu0 0
    %464 = vmatpush1.bf16.msra.mxu0 %v455
    %465 = vmatprep.subr.bf16.mxu0 0
    %466 = vmatpush1.bf16.msra.mxu0 0
    %467 = vmatprep.subr.bf16.mxu0 0
    %468 = vmatpush1.bf16.msra.mxu0 0
    %469 = vmatprep.subr.bf16.mxu0 0
    %470 = vmatpush1.bf16.msra.mxu0 0
    %471 = vmatprep.subr.bf16.mxu0 0
    %472 = vmatpush1.bf16.msra.mxu0 0
    %473 = vmatprep.subr.bf16.mxu0 0
    %474 = vmatpush1.bf16.msra.mxu0 0
    %475 = vmatprep.subr.bf16.mxu0 0
    %476 = vmatpush1.bf16.msra.mxu0 0
    %477 = vmatprep.subr.bf16.mxu0 0
    %478 = vmatpush1.bf16.msra.mxu0 0
    %479 = vmatprep.subr.bf16.mxu0 0
    %480 = vmatpush1.bf16.msra.mxu0 0
    %481 = vmatprep.subr.bf16.mxu0 0
    %482 = vmatpush1.bf16.msra.mxu0 0
    %483 = vmatprep.subr.bf16.mxu0 0
    %484 = vmatpush1.bf16.msra.mxu0 0
    %485 = vmatprep.subr.bf16.mxu0 0
    %486 = vmatpush1.bf16.msra.mxu0 0
    %487 = vmatprep.subr.bf16.mxu0 0
    %488 = vmatpush1.bf16.msra.mxu0 0
    %489 = vmatprep.subr.bf16.mxu0 0
    %490 = vmatpush1.bf16.msra.mxu0 0
    %491 = vmatprep.subr.bf16.mxu0 0
    %492 = vmatpush1.bf16.msra.mxu0 0
    %493 = vmatprep.mubr.bf16.mxu0 0
    %494 = vmatmul.mubr.bf16.gmra.mrb[0].mxu0 %v459
    %v495 = vpop.f32.mrb[0].mxu0
    %v496 = vadd.f32 0.0, %v495
    %v497 = vpop.f32.mrb[0].mxu0
    %v498 = vpop.f32.mrb[0].mxu0
    %v499 = vadd.f32 0.0, %v498
    %v500 = vpop.f32.mrb[0].mxu0
    %501 = vdwg.mxu0
    %v502 = vadd.f32 %v442, %v496
    %v503 = vadd.f32 %v443, %v499
    %505 = vset.pattern.permute.xlu0 0
    %506 = vperm.xlu0 %505, %v16
    %v507 = vpop.permute.xlu0 %506
    %510 = vset.pattern.permute.xlu0 0
    %511 = vperm.xlu0 %510, %v17
    %v512 = vpop.permute.xlu0 %511
    %v514 = vadd.f32 %v502, %v507
    %v515 = vadd.f32 %v503, %v512
    %vm516 = vcmp.ge.f32.partialorder %v514, 0.0
    %vm517 = vcmp.ge.f32.partialorder %v515, 0.0
    %v518 = vmul.f32 %v514, 0.2
    %v519 = vmul.f32 %v515, 0.2
    %v520 = vsel %vm516, %v514, %v518
    %v521 = vsel %vm517, %v515, %v519
    %v522 = vpack.c.bf16 %v521, %v520
    %v524 = vunpack.c.l.b16 %v522
    %v525 = vunpack.c.h.b16 %v522
    %v526 = vpack.c.b16 %v524, %v524
    %v527 = vpack.c.b16 %v525, %v525
    %vm530 = vcmask 175104
    %531 = vst.msk [vmem:[#allocation2] sm:$0xf] %vm530, %v526
    %532 = vst.msk [vmem:[#allocation2 + $0x4] sm:$0xf] %vm530, %v527
    %s533 = scalar_lea.vmem %s1, 64
    %v534 = vld [vmem:[%s533] sm:$0xf]
    %v535 = vld [vmem:[%s533 + $0x4] sm:$0xf]
    %v536 = vld [vmem:[%s0] sm:$0xf]
    %v537 = vld [vmem:[%s0 + $0x4] sm:$0xf]
    %v538 = vld [vmem:[%s0 + $0x8] sm:$0xf]
    %v539 = vld [vmem:[%s0 + $0xc] sm:$0xf]
    %s540 = scalar_lea.vmem %s1, 72
    %v541 = vld [vmem:[%s540] sm:$0xf]
    %v542 = vld [vmem:[%s540 + $0x4] sm:$0xf]
    %v545 = vunpack.c.l.b16 %v541
    %v546 = vunpack.c.l.b16 %v542
    %v547 = vpack.c.b16 %v546, %v545
    %v552 = vunpack.c.l.b16 %v536
    %v553 = vunpack.c.l.b16 %v537
    %v554 = vunpack.c.l.b16 %v538
    %v555 = vunpack.c.l.b16 %v539
    %v556 = vpack.c.b16 %v553, %v552
    %v557 = vpack.c.b16 %v555, %v554
    %558 = vrot.lane.b32.xlu0 %v556, 126
    %v559 = vpop.permute.xlu0 %558
    %560 = vrot.lane.b32.xlu0 %v557, 126
    %v561 = vpop.permute.xlu0 %560
    %v565 = vsel %vm48, %v547, 0
    %567 = vmatprep.subr.bf16.mxu0 0
    %568 = vmatpush1.bf16.msra.mxu0 %v559
    %569 = vmatprep.subr.bf16.mxu0 0
    %570 = vmatpush1.bf16.msra.mxu0 %v561
    %571 = vmatprep.subr.bf16.mxu0 0
    %572 = vmatpush1.bf16.msra.mxu0 0
    %573 = vmatprep.subr.bf16.mxu0 0
    %574 = vmatpush1.bf16.msra.mxu0 0
    %575 = vmatprep.subr.bf16.mxu0 0
    %576 = vmatpush1.bf16.msra.mxu0 0
    %577 = vmatprep.subr.bf16.mxu0 0
    %578 = vmatpush1.bf16.msra.mxu0 0
    %579 = vmatprep.subr.bf16.mxu0 0
    %580 = vmatpush1.bf16.msra.mxu0 0
    %581 = vmatprep.subr.bf16.mxu0 0
    %582 = vmatpush1.bf16.msra.mxu0 0
    %583 = vmatprep.subr.bf16.mxu0 0
    %584 = vmatpush1.bf16.msra.mxu0 0
    %585 = vmatprep.subr.bf16.mxu0 0
    %586 = vmatpush1.bf16.msra.mxu0 0
    %587 = vmatprep.subr.bf16.mxu0 0
    %588 = vmatpush1.bf16.msra.mxu0 0
    %589 = vmatprep.subr.bf16.mxu0 0
    %590 = vmatpush1.bf16.msra.mxu0 0
    %591 = vmatprep.subr.bf16.mxu0 0
    %592 = vmatpush1.bf16.msra.mxu0 0
    %593 = vmatprep.subr.bf16.mxu0 0
    %594 = vmatpush1.bf16.msra.mxu0 0
    %595 = vmatprep.subr.bf16.mxu0 0
    %596 = vmatpush1.bf16.msra.mxu0 0
    %597 = vmatprep.subr.bf16.mxu0 0
    %598 = vmatpush1.bf16.msra.mxu0 0
    %599 = vmatprep.mubr.bf16.mxu0 0
    %600 = vmatmul.mubr.bf16.gmra.mrb[0].mxu0 %v565
    %v601 = vpop.f32.mrb[0].mxu0
    %v602 = vadd.f32 0.0, %v601
    %v603 = vpop.f32.mrb[0].mxu0
    %v604 = vpop.f32.mrb[0].mxu0
    %v605 = vadd.f32 0.0, %v604
    %v606 = vpop.f32.mrb[0].mxu0
    %607 = vdwg.mxu0
    %v610 = vunpack.c.l.b16 %v534
    %v611 = vunpack.c.l.b16 %v535
    %v612 = vpack.c.b16 %v611, %v610
    %613 = vrot.lane.b32.xlu0 %v556, 127
    %v614 = vpop.permute.xlu0 %613
    %615 = vrot.lane.b32.xlu0 %v557, 127
    %v616 = vpop.permute.xlu0 %615
    %v620 = vsel %vm48, %v612, 0
    %622 = vmatprep.subr.bf16.mxu0 0
    %623 = vmatpush1.bf16.msra.mxu0 %v614
    %624 = vmatprep.subr.bf16.mxu0 0
    %625 = vmatpush1.bf16.msra.mxu0 %v616
    %626 = vmatprep.subr.bf16.mxu0 0
    %627 = vmatpush1.bf16.msra.mxu0 0
    %628 = vmatprep.subr.bf16.mxu0 0
    %629 = vmatpush1.bf16.msra.mxu0 0
    %630 = vmatprep.subr.bf16.mxu0 0
    %631 = vmatpush1.bf16.msra.mxu0 0
    %632 = vmatprep.subr.bf16.mxu0 0
    %633 = vmatpush1.bf16.msra.mxu0 0
    %634 = vmatprep.subr.bf16.mxu0 0
    %635 = vmatpush1.bf16.msra.mxu0 0
    %636 = vmatprep.subr.bf16.mxu0 0
    %637 = vmatpush1.bf16.msra.mxu0 0
    %638 = vmatprep.subr.bf16.mxu0 0
    %639 = vmatpush1.bf16.msra.mxu0 0
    %640 = vmatprep.subr.bf16.mxu0 0
    %641 = vmatpush1.bf16.msra.mxu0 0
    %642 = vmatprep.subr.bf16.mxu0 0
    %643 = vmatpush1.bf16.msra.mxu0 0
    %644 = vmatprep.subr.bf16.mxu0 0
    %645 = vmatpush1.bf16.msra.mxu0 0
    %646 = vmatprep.subr.bf16.mxu0 0
    %647 = vmatpush1.bf16.msra.mxu0 0
    %648 = vmatprep.subr.bf16.mxu0 0
    %649 = vmatpush1.bf16.msra.mxu0 0
    %650 = vmatprep.subr.bf16.mxu0 0
    %651 = vmatpush1.bf16.msra.mxu0 0
    %652 = vmatprep.subr.bf16.mxu0 0
    %653 = vmatpush1.bf16.msra.mxu0 0
    %654 = vmatprep.mubr.bf16.mxu0 0
    %655 = vmatmul.mubr.bf16.gmra.mrb[0].mxu0 %v620
    %v656 = vpop.f32.mrb[0].mxu0
    %v657 = vadd.f32 %v602, %v656
    %v658 = vpop.f32.mrb[0].mxu0
    %v659 = vpop.f32.mrb[0].mxu0
    %v660 = vadd.f32 %v605, %v659
    %v661 = vpop.f32.mrb[0].mxu0
    %662 = vdwg.mxu0
    %s663 = scalar_lea.vmem %s1, 80
    %v664 = vld [vmem:[%s663] sm:$0xf]
    %v665 = vld [vmem:[%s663 + $0x4] sm:$0xf]
    %v668 = vunpack.c.l.b16 %v664
    %v669 = vunpack.c.l.b16 %v665
    %v670 = vpack.c.b16 %v669, %v668
    %671 = vrot.lane.b32.xlu0 %v556, 123
    %v672 = vpop.permute.xlu0 %671
    %673 = vrot.lane.b32.xlu0 %v557, 123
    %v674 = vpop.permute.xlu0 %673
    %v678 = vsel %vm48, %v670, 0
    %680 = vmatprep.subr.bf16.mxu0 0
    %681 = vmatpush1.bf16.msra.mxu0 %v672
    %682 = vmatprep.subr.bf16.mxu0 0
    %683 = vmatpush1.bf16.msra.mxu0 %v674
    %684 = vmatprep.subr.bf16.mxu0 0
    %685 = vmatpush1.bf16.msra.mxu0 0
    %686 = vmatprep.subr.bf16.mxu0 0
    %687 = vmatpush1.bf16.msra.mxu0 0
    %688 = vmatprep.subr.bf16.mxu0 0
    %689 = vmatpush1.bf16.msra.mxu0 0
    %690 = vmatprep.subr.bf16.mxu0 0
    %691 = vmatpush1.bf16.msra.mxu0 0
    %692 = vmatprep.subr.bf16.mxu0 0
    %693 = vmatpush1.bf16.msra.mxu0 0
    %694 = vmatprep.subr.bf16.mxu0 0
    %695 = vmatpush1.bf16.msra.mxu0 0
    %696 = vmatprep.subr.bf16.mxu0 0
    %697 = vmatpush1.bf16.msra.mxu0 0
    %698 = vmatprep.subr.bf16.mxu0 0
    %699 = vmatpush1.bf16.msra.mxu0 0
    %700 = vmatprep.subr.bf16.mxu0 0
    %701 = vmatpush1.bf16.msra.mxu0 0
    %702 = vmatprep.subr.bf16.mxu0 0
    %703 = vmatpush1.bf16.msra.mxu0 0
    %704 = vmatprep.subr.bf16.mxu0 0
    %705 = vmatpush1.bf16.msra.mxu0 0
    %706 = vmatprep.subr.bf16.mxu0 0
    %707 = vmatpush1.bf16.msra.mxu0 0
    %708 = vmatprep.subr.bf16.mxu0 0
    %709 = vmatpush1.bf16.msra.mxu0 0
    %710 = vmatprep.subr.bf16.mxu0 0
    %711 = vmatpush1.bf16.msra.mxu0 0
    %712 = vmatprep.mubr.bf16.mxu0 0
    %713 = vmatmul.mubr.bf16.gmra.mrb[0].mxu0 %v678
    %v714 = vpop.f32.mrb[0].mxu0
    %v715 = vadd.f32 0.0, %v714
    %v716 = vpop.f32.mrb[0].mxu0
    %v717 = vpop.f32.mrb[0].mxu0
    %v718 = vadd.f32 0.0, %v717
    %v719 = vpop.f32.mrb[0].mxu0
    %720 = vdwg.mxu0
    %v721 = vadd.f32 %v657, %v715
    %v722 = vadd.f32 %v660, %v718
    %s723 = scalar_lea.vmem %s1, 88
    %v724 = vld [vmem:[%s723] sm:$0xf]
    %v725 = vld [vmem:[%s723 + $0x4] sm:$0xf]
    %v728 = vunpack.c.l.b16 %v724
    %v729 = vunpack.c.l.b16 %v725
    %v730 = vpack.c.b16 %v729, %v728
    %731 = vrot.lane.b32.xlu0 %v556, 122
    %v732 = vpop.permute.xlu0 %731
    %733 = vrot.lane.b32.xlu0 %v557, 122
    %v734 = vpop.permute.xlu0 %733
    %v738 = vsel %vm48, %v730, 0
    %740 = vmatprep.subr.bf16.mxu0 0
    %741 = vmatpush1.bf16.msra.mxu0 %v732
    %742 = vmatprep.subr.bf16.mxu0 0
    %743 = vmatpush1.bf16.msra.mxu0 %v734
    %744 = vmatprep.subr.bf16.mxu0 0
    %745 = vmatpush1.bf16.msra.mxu0 0
    %746 = vmatprep.subr.bf16.mxu0 0
    %747 = vmatpush1.bf16.msra.mxu0 0
    %748 = vmatprep.subr.bf16.mxu0 0
    %749 = vmatpush1.bf16.msra.mxu0 0
    %750 = vmatprep.subr.bf16.mxu0 0
    %751 = vmatpush1.bf16.msra.mxu0 0
    %752 = vmatprep.subr.bf16.mxu0 0
    %753 = vmatpush1.bf16.msra.mxu0 0
    %754 = vmatprep.subr.bf16.mxu0 0
    %755 = vmatpush1.bf16.msra.mxu0 0
    %756 = vmatprep.subr.bf16.mxu0 0
    %757 = vmatpush1.bf16.msra.mxu0 0
    %758 = vmatprep.subr.bf16.mxu0 0
    %759 = vmatpush1.bf16.msra.mxu0 0
    %760 = vmatprep.subr.bf16.mxu0 0
    %761 = vmatpush1.bf16.msra.mxu0 0
    %762 = vmatprep.subr.bf16.mxu0 0
    %763 = vmatpush1.bf16.msra.mxu0 0
    %764 = vmatprep.subr.bf16.mxu0 0
    %765 = vmatpush1.bf16.msra.mxu0 0
    %766 = vmatprep.subr.bf16.mxu0 0
    %767 = vmatpush1.bf16.msra.mxu0 0
    %768 = vmatprep.subr.bf16.mxu0 0
    %769 = vmatpush1.bf16.msra.mxu0 0
    %770 = vmatprep.subr.bf16.mxu0 0
    %771 = vmatpush1.bf16.msra.mxu0 0
    %772 = vmatprep.mubr.bf16.mxu0 0
    %773 = vmatmul.mubr.bf16.gmra.mrb[0].mxu0 %v738
    %v774 = vpop.f32.mrb[0].mxu0
    %v775 = vadd.f32 0.0, %v774
    %v776 = vpop.f32.mrb[0].mxu0
    %v777 = vpop.f32.mrb[0].mxu0
    %v778 = vadd.f32 0.0, %v777
    %v779 = vpop.f32.mrb[0].mxu0
    %780 = vdwg.mxu0
    %v781 = vadd.f32 %v721, %v775
    %v782 = vadd.f32 %v722, %v778
    %s783 = scalar_lea.vmem %s1, 96
    %v784 = vld [vmem:[%s783] sm:$0xf]
    %v785 = vld [vmem:[%s783 + $0x4] sm:$0xf]
    %v788 = vunpack.c.l.b16 %v784
    %v789 = vunpack.c.l.b16 %v785
    %v790 = vpack.c.b16 %v789, %v788
    %791 = vrot.lane.b32.xlu0 %v556, 111
    %v792 = vpop.permute.xlu0 %791
    %793 = vrot.lane.b32.xlu0 %v557, 111
    %v794 = vpop.permute.xlu0 %793
    %v798 = vsel %vm48, %v790, 0
    %800 = vmatprep.subr.bf16.mxu0 0
    %801 = vmatpush1.bf16.msra.mxu0 %v792
    %802 = vmatprep.subr.bf16.mxu0 0
    %803 = vmatpush1.bf16.msra.mxu0 %v794
    %804 = vmatprep.subr.bf16.mxu0 0
    %805 = vmatpush1.bf16.msra.mxu0 0
    %806 = vmatprep.subr.bf16.mxu0 0
    %807 = vmatpush1.bf16.msra.mxu0 0
    %808 = vmatprep.subr.bf16.mxu0 0
    %809 = vmatpush1.bf16.msra.mxu0 0
    %810 = vmatprep.subr.bf16.mxu0 0
    %811 = vmatpush1.bf16.msra.mxu0 0
    %812 = vmatprep.subr.bf16.mxu0 0
    %813 = vmatpush1.bf16.msra.mxu0 0
    %814 = vmatprep.subr.bf16.mxu0 0
    %815 = vmatpush1.bf16.msra.mxu0 0
    %816 = vmatprep.subr.bf16.mxu0 0
    %817 = vmatpush1.bf16.msra.mxu0 0
    %818 = vmatprep.subr.bf16.mxu0 0
    %819 = vmatpush1.bf16.msra.mxu0 0
    %820 = vmatprep.subr.bf16.mxu0 0
    %821 = vmatpush1.bf16.msra.mxu0 0
    %822 = vmatprep.subr.bf16.mxu0 0
    %823 = vmatpush1.bf16.msra.mxu0 0
    %824 = vmatprep.subr.bf16.mxu0 0
    %825 = vmatpush1.bf16.msra.mxu0 0
    %826 = vmatprep.subr.bf16.mxu0 0
    %827 = vmatpush1.bf16.msra.mxu0 0
    %828 = vmatprep.subr.bf16.mxu0 0
    %829 = vmatpush1.bf16.msra.mxu0 0
    %830 = vmatprep.subr.bf16.mxu0 0
    %831 = vmatpush1.bf16.msra.mxu0 0
    %832 = vmatprep.mubr.bf16.mxu0 0
    %833 = vmatmul.mubr.bf16.gmra.mrb[0].mxu0 %v798
    %v834 = vpop.f32.mrb[0].mxu0
    %v835 = vadd.f32 0.0, %v834
    %v836 = vpop.f32.mrb[0].mxu0
    %v837 = vpop.f32.mrb[0].mxu0
    %v838 = vadd.f32 0.0, %v837
    %v839 = vpop.f32.mrb[0].mxu0
    %840 = vdwg.mxu0
    %v841 = vadd.f32 %v781, %v835
    %v842 = vadd.f32 %v782, %v838
    %s843 = scalar_lea.vmem %s1, 104
    %v844 = vld [vmem:[%s843] sm:$0xf]
    %v845 = vld [vmem:[%s843 + $0x4] sm:$0xf]
    %v848 = vunpack.c.l.b16 %v844
    %v849 = vunpack.c.l.b16 %v845
    %v850 = vpack.c.b16 %v849, %v848
    %851 = vrot.lane.b32.xlu0 %v556, 110
    %v852 = vpop.permute.xlu0 %851
    %853 = vrot.lane.b32.xlu0 %v557, 110
    %v854 = vpop.permute.xlu0 %853
    %v858 = vsel %vm48, %v850, 0
    %860 = vmatprep.subr.bf16.mxu0 0
    %861 = vmatpush1.bf16.msra.mxu0 %v852
    %862 = vmatprep.subr.bf16.mxu0 0
    %863 = vmatpush1.bf16.msra.mxu0 %v854
    %864 = vmatprep.subr.bf16.mxu0 0
    %865 = vmatpush1.bf16.msra.mxu0 0
    %866 = vmatprep.subr.bf16.mxu0 0
    %867 = vmatpush1.bf16.msra.mxu0 0
    %868 = vmatprep.subr.bf16.mxu0 0
    %869 = vmatpush1.bf16.msra.mxu0 0
    %870 = vmatprep.subr.bf16.mxu0 0
    %871 = vmatpush1.bf16.msra.mxu0 0
    %872 = vmatprep.subr.bf16.mxu0 0
    %873 = vmatpush1.bf16.msra.mxu0 0
    %874 = vmatprep.subr.bf16.mxu0 0
    %875 = vmatpush1.bf16.msra.mxu0 0
    %876 = vmatprep.subr.bf16.mxu0 0
    %877 = vmatpush1.bf16.msra.mxu0 0
    %878 = vmatprep.subr.bf16.mxu0 0
    %879 = vmatpush1.bf16.msra.mxu0 0
    %880 = vmatprep.subr.bf16.mxu0 0
    %881 = vmatpush1.bf16.msra.mxu0 0
    %882 = vmatprep.subr.bf16.mxu0 0
    %883 = vmatpush1.bf16.msra.mxu0 0
    %884 = vmatprep.subr.bf16.mxu0 0
    %885 = vmatpush1.bf16.msra.mxu0 0
    %886 = vmatprep.subr.bf16.mxu0 0
    %887 = vmatpush1.bf16.msra.mxu0 0
    %888 = vmatprep.subr.bf16.mxu0 0
    %889 = vmatpush1.bf16.msra.mxu0 0
    %890 = vmatprep.subr.bf16.mxu0 0
    %891 = vmatpush1.bf16.msra.mxu0 0
    %892 = vmatprep.mubr.bf16.mxu0 0
    %893 = vmatmul.mubr.bf16.gmra.mrb[0].mxu0 %v858
    %v894 = vpop.f32.mrb[0].mxu0
    %v895 = vadd.f32 0.0, %v894
    %v896 = vpop.f32.mrb[0].mxu0
    %v897 = vpop.f32.mrb[0].mxu0
    %v898 = vadd.f32 0.0, %v897
    %v899 = vpop.f32.mrb[0].mxu0
    %900 = vdwg.mxu0
    %v901 = vadd.f32 %v841, %v895
    %v902 = vadd.f32 %v842, %v898
    %s903 = scalar_lea.vmem %s1, 112
    %v904 = vld [vmem:[%s903] sm:$0xf]
    %v905 = vld [vmem:[%s903 + $0x4] sm:$0xf]
    %v908 = vunpack.c.l.b16 %v904
    %v909 = vunpack.c.l.b16 %v905
    %v910 = vpack.c.b16 %v909, %v908
    %911 = vrot.lane.b32.xlu0 %v556, 107
    %v912 = vpop.permute.xlu0 %911
    %913 = vrot.lane.b32.xlu0 %v557, 107
    %v914 = vpop.permute.xlu0 %913
    %v918 = vsel %vm48, %v910, 0
    %920 = vmatprep.subr.bf16.mxu0 0
    %921 = vmatpush1.bf16.msra.mxu0 %v912
    %922 = vmatprep.subr.bf16.mxu0 0
    %923 = vmatpush1.bf16.msra.mxu0 %v914
    %924 = vmatprep.subr.bf16.mxu0 0
    %925 = vmatpush1.bf16.msra.mxu0 0
    %926 = vmatprep.subr.bf16.mxu0 0
    %927 = vmatpush1.bf16.msra.mxu0 0
    %928 = vmatprep.subr.bf16.mxu0 0
    %929 = vmatpush1.bf16.msra.mxu0 0
    %930 = vmatprep.subr.bf16.mxu0 0
    %931 = vmatpush1.bf16.msra.mxu0 0
    %932 = vmatprep.subr.bf16.mxu0 0
    %933 = vmatpush1.bf16.msra.mxu0 0
    %934 = vmatprep.subr.bf16.mxu0 0
    %935 = vmatpush1.bf16.msra.mxu0 0
    %936 = vmatprep.subr.bf16.mxu0 0
    %937 = vmatpush1.bf16.msra.mxu0 0
    %938 = vmatprep.subr.bf16.mxu0 0
    %939 = vmatpush1.bf16.msra.mxu0 0
    %940 = vmatprep.subr.bf16.mxu0 0
    %941 = vmatpush1.bf16.msra.mxu0 0
    %942 = vmatprep.subr.bf16.mxu0 0
    %943 = vmatpush1.bf16.msra.mxu0 0
    %944 = vmatprep.subr.bf16.mxu0 0
    %945 = vmatpush1.bf16.msra.mxu0 0
    %946 = vmatprep.subr.bf16.mxu0 0
    %947 = vmatpush1.bf16.msra.mxu0 0
    %948 = vmatprep.subr.bf16.mxu0 0
    %949 = vmatpush1.bf16.msra.mxu0 0
    %950 = vmatprep.subr.bf16.mxu0 0
    %951 = vmatpush1.bf16.msra.mxu0 0
    %952 = vmatprep.mubr.bf16.mxu0 0
    %953 = vmatmul.mubr.bf16.gmra.mrb[0].mxu0 %v918
    %v954 = vpop.f32.mrb[0].mxu0
    %v955 = vadd.f32 0.0, %v954
    %v956 = vpop.f32.mrb[0].mxu0
    %v957 = vpop.f32.mrb[0].mxu0
    %v958 = vadd.f32 0.0, %v957
    %v959 = vpop.f32.mrb[0].mxu0
    %960 = vdwg.mxu0
    %v961 = vadd.f32 %v901, %v955
    %v962 = vadd.f32 %v902, %v958
    %s963 = scalar_lea.vmem %s1, 120
    %v964 = vld [vmem:[%s963] sm:$0xf]
    %v965 = vld [vmem:[%s963 + $0x4] sm:$0xf]
    %v968 = vunpack.c.l.b16 %v964
    %v969 = vunpack.c.l.b16 %v965
    %v970 = vpack.c.b16 %v969, %v968
    %971 = vrot.lane.b32.xlu0 %v556, 106
    %v972 = vpop.permute.xlu0 %971
    %973 = vrot.lane.b32.xlu0 %v557, 106
    %v974 = vpop.permute.xlu0 %973
    %v978 = vsel %vm48, %v970, 0
    %980 = vmatprep.subr.bf16.mxu0 0
    %981 = vmatpush1.bf16.msra.mxu0 %v972
    %982 = vmatprep.subr.bf16.mxu0 0
    %983 = vmatpush1.bf16.msra.mxu0 %v974
    %984 = vmatprep.subr.bf16.mxu0 0
    %985 = vmatpush1.bf16.msra.mxu0 0
    %986 = vmatprep.subr.bf16.mxu0 0
    %987 = vmatpush1.bf16.msra.mxu0 0
    %988 = vmatprep.subr.bf16.mxu0 0
    %989 = vmatpush1.bf16.msra.mxu0 0
    %990 = vmatprep.subr.bf16.mxu0 0
    %991 = vmatpush1.bf16.msra.mxu0 0
    %992 = vmatprep.subr.bf16.mxu0 0
    %993 = vmatpush1.bf16.msra.mxu0 0
    %994 = vmatprep.subr.bf16.mxu0 0
    %995 = vmatpush1.bf16.msra.mxu0 0
    %996 = vmatprep.subr.bf16.mxu0 0
    %997 = vmatpush1.bf16.msra.mxu0 0
    %998 = vmatprep.subr.bf16.mxu0 0
    %999 = vmatpush1.bf16.msra.mxu0 0
    %1000 = vmatprep.subr.bf16.mxu0 0
    %1001 = vmatpush1.bf16.msra.mxu0 0
    %1002 = vmatprep.subr.bf16.mxu0 0
    %1003 = vmatpush1.bf16.msra.mxu0 0
    %1004 = vmatprep.subr.bf16.mxu0 0
    %1005 = vmatpush1.bf16.msra.mxu0 0
    %1006 = vmatprep.subr.bf16.mxu0 0
    %1007 = vmatpush1.bf16.msra.mxu0 0
    %1008 = vmatprep.subr.bf16.mxu0 0
    %1009 = vmatpush1.bf16.msra.mxu0 0
    %1010 = vmatprep.subr.bf16.mxu0 0
    %1011 = vmatpush1.bf16.msra.mxu0 0
    %1012 = vmatprep.mubr.bf16.mxu0 0
    %1013 = vmatmul.mubr.bf16.gmra.mrb[0].mxu0 %v978
    %v1014 = vpop.f32.mrb[0].mxu0
    %v1015 = vadd.f32 0.0, %v1014
    %v1016 = vpop.f32.mrb[0].mxu0
    %v1017 = vpop.f32.mrb[0].mxu0
    %v1018 = vadd.f32 0.0, %v1017
    %v1019 = vpop.f32.mrb[0].mxu0
    %1020 = vdwg.mxu0
    %v1021 = vadd.f32 %v961, %v1015
    %v1022 = vadd.f32 %v962, %v1018
    %v1023 = vadd.f32 %v1021, %v507
    %v1024 = vadd.f32 %v1022, %v512
    %vm1025 = vcmp.ge.f32.partialorder %v1023, 0.0
    %vm1026 = vcmp.ge.f32.partialorder %v1024, 0.0
    %v1027 = vmul.f32 %v1023, 0.2
    %v1028 = vmul.f32 %v1024, 0.2
    %v1029 = vsel %vm1025, %v1023, %v1027
    %v1030 = vsel %vm1026, %v1024, %v1028
    %v1031 = vpack.c.bf16 %v1030, %v1029
    %v1033 = vunpack.c.l.b16 %v1031
    %v1034 = vunpack.c.h.b16 %v1031
    %v1035 = vpack.c.b16 %v1033, %v1033
    %v1036 = vpack.c.b16 %v1034, %v1034
    %s1039 = scalar_lea.vmem [#allocation2], 8
    %1040 = vst.msk [vmem:[%s1039] sm:$0xf] %vm530, %v1035
    %1041 = vst.msk [vmem:[%s1039 + $0x4] sm:$0xf] %vm530, %v1036
    %s1042 = scalar_lea.vmem %s1, 128
    %v1043 = vld [vmem:[%s1042] sm:$0xf]
    %v1044 = vld [vmem:[%s1042 + $0x4] sm:$0xf]
    %v1045 = vld [vmem:[%s0] sm:$0xf]
    %v1046 = vld [vmem:[%s0 + $0x4] sm:$0xf]
    %v1047 = vld [vmem:[%s0 + $0x8] sm:$0xf]
    %v1048 = vld [vmem:[%s0 + $0xc] sm:$0xf]
    %s1049 = scalar_lea.vmem %s1, 136
    %v1050 = vld [vmem:[%s1049] sm:$0xf]
    %v1051 = vld [vmem:[%s1049 + $0x4] sm:$0xf]
    %v1054 = vunpack.c.l.b16 %v1050
    %v1055 = vunpack.c.l.b16 %v1051
    %v1056 = vpack.c.b16 %v1055, %v1054
    %v1061 = vunpack.c.l.b16 %v1045
    %v1062 = vunpack.c.l.b16 %v1046
    %v1063 = vunpack.c.l.b16 %v1047
    %v1064 = vunpack.c.l.b16 %v1048
    %v1065 = vpack.c.b16 %v1062, %v1061
    %v1066 = vpack.c.b16 %v1064, %v1063
    %1067 = vrot.lane.b32.xlu0 %v1065, 123
    %v1068 = vpop.permute.xlu0 %1067
    %1069 = vrot.lane.b32.xlu0 %v1066, 123
    %v1070 = vpop.permute.xlu0 %1069
    %v1074 = vsel %vm48, %v1056, 0
    %1076 = vmatprep.subr.bf16.mxu0 0
    %1077 = vmatpush1.bf16.msra.mxu0 %v1068
    %1078 = vmatprep.subr.bf16.mxu0 0
    %1079 = vmatpush1.bf16.msra.mxu0 %v1070
    %1080 = vmatprep.subr.bf16.mxu0 0
    %1081 = vmatpush1.bf16.msra.mxu0 0
    %1082 = vmatprep.subr.bf16.mxu0 0
    %1083 = vmatpush1.bf16.msra.mxu0 0
    %1084 = vmatprep.subr.bf16.mxu0 0
    %1085 = vmatpush1.bf16.msra.mxu0 0
    %1086 = vmatprep.subr.bf16.mxu0 0
    %1087 = vmatpush1.bf16.msra.mxu0 0
    %1088 = vmatprep.subr.bf16.mxu0 0
    %1089 = vmatpush1.bf16.msra.mxu0 0
    %1090 = vmatprep.subr.bf16.mxu0 0
    %1091 = vmatpush1.bf16.msra.mxu0 0
    %1092 = vmatprep.subr.bf16.mxu0 0
    %1093 = vmatpush1.bf16.msra.mxu0 0
    %1094 = vmatprep.subr.bf16.mxu0 0
    %1095 = vmatpush1.bf16.msra.mxu0 0
    %1096 = vmatprep.subr.bf16.mxu0 0
    %1097 = vmatpush1.bf16.msra.mxu0 0
    %1098 = vmatprep.subr.bf16.mxu0 0
    %1099 = vmatpush1.bf16.msra.mxu0 0
    %1100 = vmatprep.subr.bf16.mxu0 0
    %1101 = vmatpush1.bf16.msra.mxu0 0
    %1102 = vmatprep.subr.bf16.mxu0 0
    %1103 = vmatpush1.bf16.msra.mxu0 0
    %1104 = vmatprep.subr.bf16.mxu0 0
    %1105 = vmatpush1.bf16.msra.mxu0 0
    %1106 = vmatprep.subr.bf16.mxu0 0
    %1107 = vmatpush1.bf16.msra.mxu0 0
    %1108 = vmatprep.mubr.bf16.mxu0 0
    %1109 = vmatmul.mubr.bf16.gmra.mrb[0].mxu0 %v1074
    %v1110 = vpop.f32.mrb[0].mxu0
    %v1111 = vadd.f32 0.0, %v1110
    %v1112 = vpop.f32.mrb[0].mxu0
    %v1113 = vpop.f32.mrb[0].mxu0
    %v1114 = vadd.f32 0.0, %v1113
    %v1115 = vpop.f32.mrb[0].mxu0
    %1116 = vdwg.mxu0
    %v1119 = vunpack.c.l.b16 %v1043
    %v1120 = vunpack.c.l.b16 %v1044
    %v1121 = vpack.c.b16 %v1120, %v1119
    %1122 = vrot.lane.b32.xlu0 %v1065, 124
    %v1123 = vpop.permute.xlu0 %1122
    %1124 = vrot.lane.b32.xlu0 %v1066, 124
    %v1125 = vpop.permute.xlu0 %1124
    %v1129 = vsel %vm48, %v1121, 0
    %1131 = vmatprep.subr.bf16.mxu0 0
    %1132 = vmatpush1.bf16.msra.mxu0 %v1123
    %1133 = vmatprep.subr.bf16.mxu0 0
    %1134 = vmatpush1.bf16.msra.mxu0 %v1125
    %1135 = vmatprep.subr.bf16.mxu0 0
    %1136 = vmatpush1.bf16.msra.mxu0 0
    %1137 = vmatprep.subr.bf16.mxu0 0
    %1138 = vmatpush1.bf16.msra.mxu0 0
    %1139 = vmatprep.subr.bf16.mxu0 0
    %1140 = vmatpush1.bf16.msra.mxu0 0
    %1141 = vmatprep.subr.bf16.mxu0 0
    %1142 = vmatpush1.bf16.msra.mxu0 0
    %1143 = vmatprep.subr.bf16.mxu0 0
    %1144 = vmatpush1.bf16.msra.mxu0 0
    %1145 = vmatprep.subr.bf16.mxu0 0
    %1146 = vmatpush1.bf16.msra.mxu0 0
    %1147 = vmatprep.subr.bf16.mxu0 0
    %1148 = vmatpush1.bf16.msra.mxu0 0
    %1149 = vmatprep.subr.bf16.mxu0 0
    %1150 = vmatpush1.bf16.msra.mxu0 0
    %1151 = vmatprep.subr.bf16.mxu0 0
    %1152 = vmatpush1.bf16.msra.mxu0 0
    %1153 = vmatprep.subr.bf16.mxu0 0
    %1154 = vmatpush1.bf16.msra.mxu0 0
    %1155 = vmatprep.subr.bf16.mxu0 0
    %1156 = vmatpush1.bf16.msra.mxu0 0
    %1157 = vmatprep.subr.bf16.mxu0 0
    %1158 = vmatpush1.bf16.msra.mxu0 0
    %1159 = vmatprep.subr.bf16.mxu0 0
    %1160 = vmatpush1.bf16.msra.mxu0 0
    %1161 = vmatprep.subr.bf16.mxu0 0
    %1162 = vmatpush1.bf16.msra.mxu0 0
    %1163 = vmatprep.mubr.bf16.mxu0 0
    %1164 = vmatmul.mubr.bf16.gmra.mrb[0].mxu0 %v1129
    %v1165 = vpop.f32.mrb[0].mxu0
    %v1166 = vadd.f32 %v1111, %v1165
    %v1167 = vpop.f32.mrb[0].mxu0
    %v1168 = vpop.f32.mrb[0].mxu0
    %v1169 = vadd.f32 %v1114, %v1168
    %v1170 = vpop.f32.mrb[0].mxu0
    %1171 = vdwg.mxu0
    %s1172 = scalar_lea.vmem %s1, 144
    %v1173 = vld [vmem:[%s1172] sm:$0xf]
    %v1174 = vld [vmem:[%s1172 + $0x4] sm:$0xf]
    %v1177 = vunpack.c.l.b16 %v1173
    %v1178 = vunpack.c.l.b16 %v1174
    %v1179 = vpack.c.b16 %v1178, %v1177
    %1180 = vrot.lane.b32.xlu0 %v1065, 120
    %v1181 = vpop.permute.xlu0 %1180
    %1182 = vrot.lane.b32.xlu0 %v1066, 120
    %v1183 = vpop.permute.xlu0 %1182
    %v1187 = vsel %vm48, %v1179, 0
    %1189 = vmatprep.subr.bf16.mxu0 0
    %1190 = vmatpush1.bf16.msra.mxu0 %v1181
    %1191 = vmatprep.subr.bf16.mxu0 0
    %1192 = vmatpush1.bf16.msra.mxu0 %v1183
    %1193 = vmatprep.subr.bf16.mxu0 0
    %1194 = vmatpush1.bf16.msra.mxu0 0
    %1195 = vmatprep.subr.bf16.mxu0 0
    %1196 = vmatpush1.bf16.msra.mxu0 0
    %1197 = vmatprep.subr.bf16.mxu0 0
    %1198 = vmatpush1.bf16.msra.mxu0 0
    %1199 = vmatprep.subr.bf16.mxu0 0
    %1200 = vmatpush1.bf16.msra.mxu0 0
    %1201 = vmatprep.subr.bf16.mxu0 0
    %1202 = vmatpush1.bf16.msra.mxu0 0
    %1203 = vmatprep.subr.bf16.mxu0 0
    %1204 = vmatpush1.bf16.msra.mxu0 0
    %1205 = vmatprep.subr.bf16.mxu0 0
    %1206 = vmatpush1.bf16.msra.mxu0 0
    %1207 = vmatprep.subr.bf16.mxu0 0
    %1208 = vmatpush1.bf16.msra.mxu0 0
    %1209 = vmatprep.subr.bf16.mxu0 0
    %1210 = vmatpush1.bf16.msra.mxu0 0
    %1211 = vmatprep.subr.bf16.mxu0 0
    %1212 = vmatpush1.bf16.msra.mxu0 0
    %1213 = vmatprep.subr.bf16.mxu0 0
    %1214 = vmatpush1.bf16.msra.mxu0 0
    %1215 = vmatprep.subr.bf16.mxu0 0
    %1216 = vmatpush1.bf16.msra.mxu0 0
    %1217 = vmatprep.subr.bf16.mxu0 0
    %1218 = vmatpush1.bf16.msra.mxu0 0
    %1219 = vmatprep.subr.bf16.mxu0 0
    %1220 = vmatpush1.bf16.msra.mxu0 0
    %1221 = vmatprep.mubr.bf16.mxu0 0
    %1222 = vmatmul.mubr.bf16.gmra.mrb[0].mxu0 %v1187
    %v1223 = vpop.f32.mrb[0].mxu0
    %v1224 = vadd.f32 0.0, %v1223
    %v1225 = vpop.f32.mrb[0].mxu0
    %v1226 = vpop.f32.mrb[0].mxu0
    %v1227 = vadd.f32 0.0, %v1226
    %v1228 = vpop.f32.mrb[0].mxu0
    %1229 = vdwg.mxu0
    %v1230 = vadd.f32 %v1166, %v1224
    %v1231 = vadd.f32 %v1169, %v1227
    %s1232 = scalar_lea.vmem %s1, 152
    %v1233 = vld [vmem:[%s1232] sm:$0xf]
    %v1234 = vld [vmem:[%s1232 + $0x4] sm:$0xf]
    %v1237 = vunpack.c.l.b16 %v1233
    %v1238 = vunpack.c.l.b16 %v1234
    %v1239 = vpack.c.b16 %v1238, %v1237
    %1240 = vrot.lane.b32.xlu0 %v1065, 119
    %v1241 = vpop.permute.xlu0 %1240
    %1242 = vrot.lane.b32.xlu0 %v1066, 119
    %v1243 = vpop.permute.xlu0 %1242
    %v1247 = vsel %vm48, %v1239, 0
    %1249 = vmatprep.subr.bf16.mxu0 0
    %1250 = vmatpush1.bf16.msra.mxu0 %v1241
    %1251 = vmatprep.subr.bf16.mxu0 0
    %1252 = vmatpush1.bf16.msra.mxu0 %v1243
    %1253 = vmatprep.subr.bf16.mxu0 0
    %1254 = vmatpush1.bf16.msra.mxu0 0
    %1255 = vmatprep.subr.bf16.mxu0 0
    %1256 = vmatpush1.bf16.msra.mxu0 0
    %1257 = vmatprep.subr.bf16.mxu0 0
    %1258 = vmatpush1.bf16.msra.mxu0 0
    %1259 = vmatprep.subr.bf16.mxu0 0
    %1260 = vmatpush1.bf16.msra.mxu0 0
    %1261 = vmatprep.subr.bf16.mxu0 0
    %1262 = vmatpush1.bf16.msra.mxu0 0
    %1263 = vmatprep.subr.bf16.mxu0 0
    %1264 = vmatpush1.bf16.msra.mxu0 0
    %1265 = vmatprep.subr.bf16.mxu0 0
    %1266 = vmatpush1.bf16.msra.mxu0 0
    %1267 = vmatprep.subr.bf16.mxu0 0
    %1268 = vmatpush1.bf16.msra.mxu0 0
    %1269 = vmatprep.subr.bf16.mxu0 0
    %1270 = vmatpush1.bf16.msra.mxu0 0
    %1271 = vmatprep.subr.bf16.mxu0 0
    %1272 = vmatpush1.bf16.msra.mxu0 0
    %1273 = vmatprep.subr.bf16.mxu0 0
    %1274 = vmatpush1.bf16.msra.mxu0 0
    %1275 = vmatprep.subr.bf16.mxu0 0
    %1276 = vmatpush1.bf16.msra.mxu0 0
    %1277 = vmatprep.subr.bf16.mxu0 0
    %1278 = vmatpush1.bf16.msra.mxu0 0
    %1279 = vmatprep.subr.bf16.mxu0 0
    %1280 = vmatpush1.bf16.msra.mxu0 0
    %1281 = vmatprep.mubr.bf16.mxu0 0
    %1282 = vmatmul.mubr.bf16.gmra.mrb[0].mxu0 %v1247
    %v1283 = vpop.f32.mrb[0].mxu0
    %v1284 = vadd.f32 0.0, %v1283
    %v1285 = vpop.f32.mrb[0].mxu0
    %v1286 = vpop.f32.mrb[0].mxu0
    %v1287 = vadd.f32 0.0, %v1286
    %v1288 = vpop.f32.mrb[0].mxu0
    %1289 = vdwg.mxu0
    %v1290 = vadd.f32 %v1230, %v1284
    %v1291 = vadd.f32 %v1231, %v1287
    %s1292 = scalar_lea.vmem %s1, 160
    %v1293 = vld [vmem:[%s1292] sm:$0xf]
    %v1294 = vld [vmem:[%s1292 + $0x4] sm:$0xf]
    %v1297 = vunpack.c.l.b16 %v1293
    %v1298 = vunpack.c.l.b16 %v1294
    %v1299 = vpack.c.b16 %v1298, %v1297
    %1300 = vrot.lane.b32.xlu0 %v1065, 108
    %v1301 = vpop.permute.xlu0 %1300
    %1302 = vrot.lane.b32.xlu0 %v1066, 108
    %v1303 = vpop.permute.xlu0 %1302
    %v1307 = vsel %vm48, %v1299, 0
    %1309 = vmatprep.subr.bf16.mxu0 0
    %1310 = vmatpush1.bf16.msra.mxu0 %v1301
    %1311 = vmatprep.subr.bf16.mxu0 0
    %1312 = vmatpush1.bf16.msra.mxu0 %v1303
    %1313 = vmatprep.subr.bf16.mxu0 0
    %1314 = vmatpush1.bf16.msra.mxu0 0
    %1315 = vmatprep.subr.bf16.mxu0 0
    %1316 = vmatpush1.bf16.msra.mxu0 0
    %1317 = vmatprep.subr.bf16.mxu0 0
    %1318 = vmatpush1.bf16.msra.mxu0 0
    %1319 = vmatprep.subr.bf16.mxu0 0
    %1320 = vmatpush1.bf16.msra.mxu0 0
    %1321 = vmatprep.subr.bf16.mxu0 0
    %1322 = vmatpush1.bf16.msra.mxu0 0
    %1323 = vmatprep.subr.bf16.mxu0 0
    %1324 = vmatpush1.bf16.msra.mxu0 0
    %1325 = vmatprep.subr.bf16.mxu0 0
    %1326 = vmatpush1.bf16.msra.mxu0 0
    %1327 = vmatprep.subr.bf16.mxu0 0
    %1328 = vmatpush1.bf16.msra.mxu0 0
    %1329 = vmatprep.subr.bf16.mxu0 0
    %1330 = vmatpush1.bf16.msra.mxu0 0
    %1331 = vmatprep.subr.bf16.mxu0 0
    %1332 = vmatpush1.bf16.msra.mxu0 0
    %1333 = vmatprep.subr.bf16.mxu0 0
    %1334 = vmatpush1.bf16.msra.mxu0 0
    %1335 = vmatprep.subr.bf16.mxu0 0
    %1336 = vmatpush1.bf16.msra.mxu0 0
    %1337 = vmatprep.subr.bf16.mxu0 0
    %1338 = vmatpush1.bf16.msra.mxu0 0
    %1339 = vmatprep.subr.bf16.mxu0 0
    %1340 = vmatpush1.bf16.msra.mxu0 0
    %1341 = vmatprep.mubr.bf16.mxu0 0
    %1342 = vmatmul.mubr.bf16.gmra.mrb[0].mxu0 %v1307
    %v1343 = vpop.f32.mrb[0].mxu0
    %v1344 = vadd.f32 0.0, %v1343
    %v1345 = vpop.f32.mrb[0].mxu0
    %v1346 = vpop.f32.mrb[0].mxu0
    %v1347 = vadd.f32 0.0, %v1346
    %v1348 = vpop.f32.mrb[0].mxu0
    %1349 = vdwg.mxu0
    %v1350 = vadd.f32 %v1290, %v1344
    %v1351 = vadd.f32 %v1291, %v1347
    %s1352 = scalar_lea.vmem %s1, 168
    %v1353 = vld [vmem:[%s1352] sm:$0xf]
    %v1354 = vld [vmem:[%s1352 + $0x4] sm:$0xf]
    %v1357 = vunpack.c.l.b16 %v1353
    %v1358 = vunpack.c.l.b16 %v1354
    %v1359 = vpack.c.b16 %v1358, %v1357
    %1360 = vrot.lane.b32.xlu0 %v1065, 107
    %v1361 = vpop.permute.xlu0 %1360
    %1362 = vrot.lane.b32.xlu0 %v1066, 107
    %v1363 = vpop.permute.xlu0 %1362
    %v1367 = vsel %vm48, %v1359, 0
    %1369 = vmatprep.subr.bf16.mxu0 0
    %1370 = vmatpush1.bf16.msra.mxu0 %v1361
    %1371 = vmatprep.subr.bf16.mxu0 0
    %1372 = vmatpush1.bf16.msra.mxu0 %v1363
    %1373 = vmatprep.subr.bf16.mxu0 0
    %1374 = vmatpush1.bf16.msra.mxu0 0
    %1375 = vmatprep.subr.bf16.mxu0 0
    %1376 = vmatpush1.bf16.msra.mxu0 0
    %1377 = vmatprep.subr.bf16.mxu0 0
    %1378 = vmatpush1.bf16.msra.mxu0 0
    %1379 = vmatprep.subr.bf16.mxu0 0
    %1380 = vmatpush1.bf16.msra.mxu0 0
    %1381 = vmatprep.subr.bf16.mxu0 0
    %1382 = vmatpush1.bf16.msra.mxu0 0
    %1383 = vmatprep.subr.bf16.mxu0 0
    %1384 = vmatpush1.bf16.msra.mxu0 0
    %1385 = vmatprep.subr.bf16.mxu0 0
    %1386 = vmatpush1.bf16.msra.mxu0 0
    %1387 = vmatprep.subr.bf16.mxu0 0
    %1388 = vmatpush1.bf16.msra.mxu0 0
    %1389 = vmatprep.subr.bf16.mxu0 0
    %1390 = vmatpush1.bf16.msra.mxu0 0
    %1391 = vmatprep.subr.bf16.mxu0 0
    %1392 = vmatpush1.bf16.msra.mxu0 0
    %1393 = vmatprep.subr.bf16.mxu0 0
    %1394 = vmatpush1.bf16.msra.mxu0 0
    %1395 = vmatprep.subr.bf16.mxu0 0
    %1396 = vmatpush1.bf16.msra.mxu0 0
    %1397 = vmatprep.subr.bf16.mxu0 0
    %1398 = vmatpush1.bf16.msra.mxu0 0
    %1399 = vmatprep.subr.bf16.mxu0 0
    %1400 = vmatpush1.bf16.msra.mxu0 0
    %1401 = vmatprep.mubr.bf16.mxu0 0
    %1402 = vmatmul.mubr.bf16.gmra.mrb[0].mxu0 %v1367
    %v1403 = vpop.f32.mrb[0].mxu0
    %v1404 = vadd.f32 0.0, %v1403
    %v1405 = vpop.f32.mrb[0].mxu0
    %v1406 = vpop.f32.mrb[0].mxu0
    %v1407 = vadd.f32 0.0, %v1406
    %v1408 = vpop.f32.mrb[0].mxu0
    %1409 = vdwg.mxu0
    %v1410 = vadd.f32 %v1350, %v1404
    %v1411 = vadd.f32 %v1351, %v1407
    %s1412 = scalar_lea.vmem %s1, 176
    %v1413 = vld [vmem:[%s1412] sm:$0xf]
    %v1414 = vld [vmem:[%s1412 + $0x4] sm:$0xf]
    %v1417 = vunpack.c.l.b16 %v1413
    %v1418 = vunpack.c.l.b16 %v1414
    %v1419 = vpack.c.b16 %v1418, %v1417
    %1420 = vrot.lane.b32.xlu0 %v1065, 104
    %v1421 = vpop.permute.xlu0 %1420
    %1422 = vrot.lane.b32.xlu0 %v1066, 104
    %v1423 = vpop.permute.xlu0 %1422
    %v1427 = vsel %vm48, %v1419, 0
    %1429 = vmatprep.subr.bf16.mxu0 0
    %1430 = vmatpush1.bf16.msra.mxu0 %v1421
    %1431 = vmatprep.subr.bf16.mxu0 0
    %1432 = vmatpush1.bf16.msra.mxu0 %v1423
    %1433 = vmatprep.subr.bf16.mxu0 0
    %1434 = vmatpush1.bf16.msra.mxu0 0
    %1435 = vmatprep.subr.bf16.mxu0 0
    %1436 = vmatpush1.bf16.msra.mxu0 0
    %1437 = vmatprep.subr.bf16.mxu0 0
    %1438 = vmatpush1.bf16.msra.mxu0 0
    %1439 = vmatprep.subr.bf16.mxu0 0
    %1440 = vmatpush1.bf16.msra.mxu0 0
    %1441 = vmatprep.subr.bf16.mxu0 0
    %1442 = vmatpush1.bf16.msra.mxu0 0
    %1443 = vmatprep.subr.bf16.mxu0 0
    %1444 = vmatpush1.bf16.msra.mxu0 0
    %1445 = vmatprep.subr.bf16.mxu0 0
    %1446 = vmatpush1.bf16.msra.mxu0 0
    %1447 = vmatprep.subr.bf16.mxu0 0
    %1448 = vmatpush1.bf16.msra.mxu0 0
    %1449 = vmatprep.subr.bf16.mxu0 0
    %1450 = vmatpush1.bf16.msra.mxu0 0
    %1451 = vmatprep.subr.bf16.mxu0 0
    %1452 = vmatpush1.bf16.msra.mxu0 0
    %1453 = vmatprep.subr.bf16.mxu0 0
    %1454 = vmatpush1.bf16.msra.mxu0 0
    %1455 = vmatprep.subr.bf16.mxu0 0
    %1456 = vmatpush1.bf16.msra.mxu0 0
    %1457 = vmatprep.subr.bf16.mxu0 0
    %1458 = vmatpush1.bf16.msra.mxu0 0
    %1459 = vmatprep.subr.bf16.mxu0 0
    %1460 = vmatpush1.bf16.msra.mxu0 0
    %1461 = vmatprep.mubr.bf16.mxu0 0
    %1462 = vmatmul.mubr.bf16.gmra.mrb[0].mxu0 %v1427
    %v1463 = vpop.f32.mrb[0].mxu0
    %v1464 = vadd.f32 0.0, %v1463
    %v1465 = vpop.f32.mrb[0].mxu0
    %v1466 = vpop.f32.mrb[0].mxu0
    %v1467 = vadd.f32 0.0, %v1466
    %v1468 = vpop.f32.mrb[0].mxu0
    %1469 = vdwg.mxu0
    %v1470 = vadd.f32 %v1410, %v1464
    %v1471 = vadd.f32 %v1411, %v1467
    %s1472 = scalar_lea.vmem %s1, 184
    %v1473 = vld [vmem:[%s1472] sm:$0xf]
    %v1474 = vld [vmem:[%s1472 + $0x4] sm:$0xf]
    %v1477 = vunpack.c.l.b16 %v1473
    %v1478 = vunpack.c.l.b16 %v1474
    %v1479 = vpack.c.b16 %v1478, %v1477
    %1480 = vrot.lane.b32.xlu0 %v1065, 103
    %v1481 = vpop.permute.xlu0 %1480
    %1482 = vrot.lane.b32.xlu0 %v1066, 103
    %v1483 = vpop.permute.xlu0 %1482
    %v1487 = vsel %vm48, %v1479, 0
    %1489 = vmatprep.subr.bf16.mxu0 0
    %1490 = vmatpush1.bf16.msra.mxu0 %v1481
    %1491 = vmatprep.subr.bf16.mxu0 0
    %1492 = vmatpush1.bf16.msra.mxu0 %v1483
    %1493 = vmatprep.subr.bf16.mxu0 0
    %1494 = vmatpush1.bf16.msra.mxu0 0
    %1495 = vmatprep.subr.bf16.mxu0 0
    %1496 = vmatpush1.bf16.msra.mxu0 0
    %1497 = vmatprep.subr.bf16.mxu0 0
    %1498 = vmatpush1.bf16.msra.mxu0 0
    %1499 = vmatprep.subr.bf16.mxu0 0
    %1500 = vmatpush1.bf16.msra.mxu0 0
    %1501 = vmatprep.subr.bf16.mxu0 0
    %1502 = vmatpush1.bf16.msra.mxu0 0
    %1503 = vmatprep.subr.bf16.mxu0 0
    %1504 = vmatpush1.bf16.msra.mxu0 0
    %1505 = vmatprep.subr.bf16.mxu0 0
    %1506 = vmatpush1.bf16.msra.mxu0 0
    %1507 = vmatprep.subr.bf16.mxu0 0
    %1508 = vmatpush1.bf16.msra.mxu0 0
    %1509 = vmatprep.subr.bf16.mxu0 0
    %1510 = vmatpush1.bf16.msra.mxu0 0
    %1511 = vmatprep.subr.bf16.mxu0 0
    %1512 = vmatpush1.bf16.msra.mxu0 0
    %1513 = vmatprep.subr.bf16.mxu0 0
    %1514 = vmatpush1.bf16.msra.mxu0 0
    %1515 = vmatprep.subr.bf16.mxu0 0
    %1516 = vmatpush1.bf16.msra.mxu0 0
    %1517 = vmatprep.subr.bf16.mxu0 0
    %1518 = vmatpush1.bf16.msra.mxu0 0
    %1519 = vmatprep.subr.bf16.mxu0 0
    %1520 = vmatpush1.bf16.msra.mxu0 0
    %1521 = vmatprep.mubr.bf16.mxu0 0
    %1522 = vmatmul.mubr.bf16.gmra.mrb[0].mxu0 %v1487
    %v1523 = vpop.f32.mrb[0].mxu0
    %v1524 = vadd.f32 0.0, %v1523
    %v1525 = vpop.f32.mrb[0].mxu0
    %v1526 = vpop.f32.mrb[0].mxu0
    %v1527 = vadd.f32 0.0, %v1526
    %v1528 = vpop.f32.mrb[0].mxu0
    %1529 = vdwg.mxu0
    %v1530 = vadd.f32 %v1470, %v1524
    %v1531 = vadd.f32 %v1471, %v1527
    %v1532 = vadd.f32 %v1530, %v507
    %v1533 = vadd.f32 %v1531, %v512
    %vm1534 = vcmp.ge.f32.partialorder %v1532, 0.0
    %vm1535 = vcmp.ge.f32.partialorder %v1533, 0.0
    %v1536 = vmul.f32 %v1532, 0.2
    %v1537 = vmul.f32 %v1533, 0.2
    %v1538 = vsel %vm1534, %v1532, %v1536
    %v1539 = vsel %vm1535, %v1533, %v1537
    %v1540 = vpack.c.bf16 %v1539, %v1538
    %v1542 = vunpack.c.l.b16 %v1540
    %v1543 = vunpack.c.h.b16 %v1540
    %v1544 = vpack.c.b16 %v1542, %v1542
    %v1545 = vpack.c.b16 %v1543, %v1543
    %s1548 = scalar_lea.vmem [#allocation2], 16
    %1549 = vst.msk [vmem:[%s1548] sm:$0xf] %vm530, %v1544
    %1550 = vst.msk [vmem:[%s1548 + $0x4] sm:$0xf] %vm530, %v1545
    %s1551 = scalar_lea.vmem %s1, 192
    %v1552 = vld [vmem:[%s1551] sm:$0xf]
    %v1553 = vld [vmem:[%s1551 + $0x4] sm:$0xf]
    %v1554 = vld [vmem:[%s0] sm:$0xf]
    %v1555 = vld [vmem:[%s0 + $0x4] sm:$0xf]
    %v1556 = vld [vmem:[%s0 + $0x8] sm:$0xf]
    %v1557 = vld [vmem:[%s0 + $0xc] sm:$0xf]
    %s1558 = scalar_lea.vmem %s1, 200
    %v1559 = vld [vmem:[%s1558] sm:$0xf]
    %v1560 = vld [vmem:[%s1558 + $0x4] sm:$0xf]
    %v1563 = vunpack.c.l.b16 %v1559
    %v1564 = vunpack.c.l.b16 %v1560
    %v1565 = vpack.c.b16 %v1564, %v1563
    %v1570 = vunpack.c.l.b16 %v1554
    %v1571 = vunpack.c.l.b16 %v1555
    %v1572 = vunpack.c.l.b16 %v1556
    %v1573 = vunpack.c.l.b16 %v1557
    %v1574 = vpack.c.b16 %v1571, %v1570
    %v1575 = vpack.c.b16 %v1573, %v1572
    %1576 = vrot.lane.b32.xlu0 %v1574, 122
    %v1577 = vpop.permute.xlu0 %1576
    %1578 = vrot.lane.b32.xlu0 %v1575, 122
    %v1579 = vpop.permute.xlu0 %1578
    %v1583 = vsel %vm48, %v1565, 0
    %1585 = vmatprep.subr.bf16.mxu0 0
    %1586 = vmatpush1.bf16.msra.mxu0 %v1577
    %1587 = vmatprep.subr.bf16.mxu0 0
    %1588 = vmatpush1.bf16.msra.mxu0 %v1579
    %1589 = vmatprep.subr.bf16.mxu0 0
    %1590 = vmatpush1.bf16.msra.mxu0 0
    %1591 = vmatprep.subr.bf16.mxu0 0
    %1592 = vmatpush1.bf16.msra.mxu0 0
    %1593 = vmatprep.subr.bf16.mxu0 0
    %1594 = vmatpush1.bf16.msra.mxu0 0
    %1595 = vmatprep.subr.bf16.mxu0 0
    %1596 = vmatpush1.bf16.msra.mxu0 0
    %1597 = vmatprep.subr.bf16.mxu0 0
    %1598 = vmatpush1.bf16.msra.mxu0 0
    %1599 = vmatprep.subr.bf16.mxu0 0
    %1600 = vmatpush1.bf16.msra.mxu0 0
    %1601 = vmatprep.subr.bf16.mxu0 0
    %1602 = vmatpush1.bf16.msra.mxu0 0
    %1603 = vmatprep.subr.bf16.mxu0 0
    %1604 = vmatpush1.bf16.msra.mxu0 0
    %1605 = vmatprep.subr.bf16.mxu0 0
    %1606 = vmatpush1.bf16.msra.mxu0 0
    %1607 = vmatprep.subr.bf16.mxu0 0
    %1608 = vmatpush1.bf16.msra.mxu0 0
    %1609 = vmatprep.subr.bf16.mxu0 0
    %1610 = vmatpush1.bf16.msra.mxu0 0
    %1611 = vmatprep.subr.bf16.mxu0 0
    %1612 = vmatpush1.bf16.msra.mxu0 0
    %1613 = vmatprep.subr.bf16.mxu0 0
    %1614 = vmatpush1.bf16.msra.mxu0 0
    %1615 = vmatprep.subr.bf16.mxu0 0
    %1616 = vmatpush1.bf16.msra.mxu0 0
    %1617 = vmatprep.mubr.bf16.mxu0 0
    %1618 = vmatmul.mubr.bf16.gmra.mrb[0].mxu0 %v1583
    %v1619 = vpop.f32.mrb[0].mxu0
    %v1620 = vadd.f32 0.0, %v1619
    %v1621 = vpop.f32.mrb[0].mxu0
    %v1622 = vpop.f32.mrb[0].mxu0
    %v1623 = vadd.f32 0.0, %v1622
    %v1624 = vpop.f32.mrb[0].mxu0
    %1625 = vdwg.mxu0
    %v1628 = vunpack.c.l.b16 %v1552
    %v1629 = vunpack.c.l.b16 %v1553
    %v1630 = vpack.c.b16 %v1629, %v1628
    %1631 = vrot.lane.b32.xlu0 %v1574, 123
    %v1632 = vpop.permute.xlu0 %1631
    %1633 = vrot.lane.b32.xlu0 %v1575, 123
    %v1634 = vpop.permute.xlu0 %1633
    %v1638 = vsel %vm48, %v1630, 0
    %1640 = vmatprep.subr.bf16.mxu0 0
    %1641 = vmatpush1.bf16.msra.mxu0 %v1632
    %1642 = vmatprep.subr.bf16.mxu0 0
    %1643 = vmatpush1.bf16.msra.mxu0 %v1634
    %1644 = vmatprep.subr.bf16.mxu0 0
    %1645 = vmatpush1.bf16.msra.mxu0 0
    %1646 = vmatprep.subr.bf16.mxu0 0
    %1647 = vmatpush1.bf16.msra.mxu0 0
    %1648 = vmatprep.subr.bf16.mxu0 0
    %1649 = vmatpush1.bf16.msra.mxu0 0
    %1650 = vmatprep.subr.bf16.mxu0 0
    %1651 = vmatpush1.bf16.msra.mxu0 0
    %1652 = vmatprep.subr.bf16.mxu0 0
    %1653 = vmatpush1.bf16.msra.mxu0 0
    %1654 = vmatprep.subr.bf16.mxu0 0
    %1655 = vmatpush1.bf16.msra.mxu0 0
    %1656 = vmatprep.subr.bf16.mxu0 0
    %1657 = vmatpush1.bf16.msra.mxu0 0
    %1658 = vmatprep.subr.bf16.mxu0 0
    %1659 = vmatpush1.bf16.msra.mxu0 0
    %1660 = vmatprep.subr.bf16.mxu0 0
    %1661 = vmatpush1.bf16.msra.mxu0 0
    %1662 = vmatprep.subr.bf16.mxu0 0
    %1663 = vmatpush1.bf16.msra.mxu0 0
    %1664 = vmatprep.subr.bf16.mxu0 0
    %1665 = vmatpush1.bf16.msra.mxu0 0
    %1666 = vmatprep.subr.bf16.mxu0 0
    %1667 = vmatpush1.bf16.msra.mxu0 0
    %1668 = vmatprep.subr.bf16.mxu0 0
    %1669 = vmatpush1.bf16.msra.mxu0 0
    %1670 = vmatprep.subr.bf16.mxu0 0
    %1671 = vmatpush1.bf16.msra.mxu0 0
    %1672 = vmatprep.mubr.bf16.mxu0 0
    %1673 = vmatmul.mubr.bf16.gmra.mrb[0].mxu0 %v1638
    %v1674 = vpop.f32.mrb[0].mxu0
    %v1675 = vadd.f32 %v1620, %v1674
    %v1676 = vpop.f32.mrb[0].mxu0
    %v1677 = vpop.f32.mrb[0].mxu0
    %v1678 = vadd.f32 %v1623, %v1677
    %v1679 = vpop.f32.mrb[0].mxu0
    %1680 = vdwg.mxu0
    %s1681 = scalar_lea.vmem %s1, 208
    %v1682 = vld [vmem:[%s1681] sm:$0xf]
    %v1683 = vld [vmem:[%s1681 + $0x4] sm:$0xf]
    %v1686 = vunpack.c.l.b16 %v1682
    %v1687 = vunpack.c.l.b16 %v1683
    %v1688 = vpack.c.b16 %v1687, %v1686
    %1689 = vrot.lane.b32.xlu0 %v1574, 119
    %v1690 = vpop.permute.xlu0 %1689
    %1691 = vrot.lane.b32.xlu0 %v1575, 119
    %v1692 = vpop.permute.xlu0 %1691
    %v1696 = vsel %vm48, %v1688, 0
    %1698 = vmatprep.subr.bf16.mxu0 0
    %1699 = vmatpush1.bf16.msra.mxu0 %v1690
    %1700 = vmatprep.subr.bf16.mxu0 0
    %1701 = vmatpush1.bf16.msra.mxu0 %v1692
    %1702 = vmatprep.subr.bf16.mxu0 0
    %1703 = vmatpush1.bf16.msra.mxu0 0
    %1704 = vmatprep.subr.bf16.mxu0 0
    %1705 = vmatpush1.bf16.msra.mxu0 0
    %1706 = vmatprep.subr.bf16.mxu0 0
    %1707 = vmatpush1.bf16.msra.mxu0 0
    %1708 = vmatprep.subr.bf16.mxu0 0
    %1709 = vmatpush1.bf16.msra.mxu0 0
    %1710 = vmatprep.subr.bf16.mxu0 0
    %1711 = vmatpush1.bf16.msra.mxu0 0
    %1712 = vmatprep.subr.bf16.mxu0 0
    %1713 = vmatpush1.bf16.msra.mxu0 0
    %1714 = vmatprep.subr.bf16.mxu0 0
    %1715 = vmatpush1.bf16.msra.mxu0 0
    %1716 = vmatprep.subr.bf16.mxu0 0
    %1717 = vmatpush1.bf16.msra.mxu0 0
    %1718 = vmatprep.subr.bf16.mxu0 0
    %1719 = vmatpush1.bf16.msra.mxu0 0
    %1720 = vmatprep.subr.bf16.mxu0 0
    %1721 = vmatpush1.bf16.msra.mxu0 0
    %1722 = vmatprep.subr.bf16.mxu0 0
    %1723 = vmatpush1.bf16.msra.mxu0 0
    %1724 = vmatprep.subr.bf16.mxu0 0
    %1725 = vmatpush1.bf16.msra.mxu0 0
    %1726 = vmatprep.subr.bf16.mxu0 0
    %1727 = vmatpush1.bf16.msra.mxu0 0
    %1728 = vmatprep.subr.bf16.mxu0 0
    %1729 = vmatpush1.bf16.msra.mxu0 0
    %1730 = vmatprep.mubr.bf16.mxu0 0
    %1731 = vmatmul.mubr.bf16.gmra.mrb[0].mxu0 %v1696
    %v1732 = vpop.f32.mrb[0].mxu0
    %v1733 = vadd.f32 0.0, %v1732
    %v1734 = vpop.f32.mrb[0].mxu0
    %v1735 = vpop.f32.mrb[0].mxu0
    %v1736 = vadd.f32 0.0, %v1735
    %v1737 = vpop.f32.mrb[0].mxu0
    %1738 = vdwg.mxu0
    %v1739 = vadd.f32 %v1675, %v1733
    %v1740 = vadd.f32 %v1678, %v1736
    %s1741 = scalar_lea.vmem %s1, 216
    %v1742 = vld [vmem:[%s1741] sm:$0xf]
    %v1743 = vld [vmem:[%s1741 + $0x4] sm:$0xf]
    %v1746 = vunpack.c.l.b16 %v1742
    %v1747 = vunpack.c.l.b16 %v1743
    %v1748 = vpack.c.b16 %v1747, %v1746
    %1749 = vrot.lane.b32.xlu0 %v1574, 118
    %v1750 = vpop.permute.xlu0 %1749
    %1751 = vrot.lane.b32.xlu0 %v1575, 118
    %v1752 = vpop.permute.xlu0 %1751
    %v1756 = vsel %vm48, %v1748, 0
    %1758 = vmatprep.subr.bf16.mxu0 0
    %1759 = vmatpush1.bf16.msra.mxu0 %v1750
    %1760 = vmatprep.subr.bf16.mxu0 0
    %1761 = vmatpush1.bf16.msra.mxu0 %v1752
    %1762 = vmatprep.subr.bf16.mxu0 0
    %1763 = vmatpush1.bf16.msra.mxu0 0
    %1764 = vmatprep.subr.bf16.mxu0 0
    %1765 = vmatpush1.bf16.msra.mxu0 0
    %1766 = vmatprep.subr.bf16.mxu0 0
    %1767 = vmatpush1.bf16.msra.mxu0 0
    %1768 = vmatprep.subr.bf16.mxu0 0
    %1769 = vmatpush1.bf16.msra.mxu0 0
    %1770 = vmatprep.subr.bf16.mxu0 0
    %1771 = vmatpush1.bf16.msra.mxu0 0
    %1772 = vmatprep.subr.bf16.mxu0 0
    %1773 = vmatpush1.bf16.msra.mxu0 0
    %1774 = vmatprep.subr.bf16.mxu0 0
    %1775 = vmatpush1.bf16.msra.mxu0 0
    %1776 = vmatprep.subr.bf16.mxu0 0
    %1777 = vmatpush1.bf16.msra.mxu0 0
    %1778 = vmatprep.subr.bf16.mxu0 0
    %1779 = vmatpush1.bf16.msra.mxu0 0
    %1780 = vmatprep.subr.bf16.mxu0 0
    %1781 = vmatpush1.bf16.msra.mxu0 0
    %1782 = vmatprep.subr.bf16.mxu0 0
    %1783 = vmatpush1.bf16.msra.mxu0 0
    %1784 = vmatprep.subr.bf16.mxu0 0
    %1785 = vmatpush1.bf16.msra.mxu0 0
    %1786 = vmatprep.subr.bf16.mxu0 0
    %1787 = vmatpush1.bf16.msra.mxu0 0
    %1788 = vmatprep.subr.bf16.mxu0 0
    %1789 = vmatpush1.bf16.msra.mxu0 0
    %1790 = vmatprep.mubr.bf16.mxu0 0
    %1791 = vmatmul.mubr.bf16.gmra.mrb[0].mxu0 %v1756
    %v1792 = vpop.f32.mrb[0].mxu0
    %v1793 = vadd.f32 0.0, %v1792
    %v1794 = vpop.f32.mrb[0].mxu0
    %v1795 = vpop.f32.mrb[0].mxu0
    %v1796 = vadd.f32 0.0, %v1795
    %v1797 = vpop.f32.mrb[0].mxu0
    %1798 = vdwg.mxu0
    %v1799 = vadd.f32 %v1739, %v1793
    %v1800 = vadd.f32 %v1740, %v1796
    %s1801 = scalar_lea.vmem %s1, 224
    %v1802 = vld [vmem:[%s1801] sm:$0xf]
    %v1803 = vld [vmem:[%s1801 + $0x4] sm:$0xf]
    %v1806 = vunpack.c.l.b16 %v1802
    %v1807 = vunpack.c.l.b16 %v1803
    %v1808 = vpack.c.b16 %v1807, %v1806
    %1809 = vrot.lane.b32.xlu0 %v1574, 107
    %v1810 = vpop.permute.xlu0 %1809
    %1811 = vrot.lane.b32.xlu0 %v1575, 107
    %v1812 = vpop.permute.xlu0 %1811
    %v1816 = vsel %vm48, %v1808, 0
    %1818 = vmatprep.subr.bf16.mxu0 0
    %1819 = vmatpush1.bf16.msra.mxu0 %v1810
    %1820 = vmatprep.subr.bf16.mxu0 0
    %1821 = vmatpush1.bf16.msra.mxu0 %v1812
    %1822 = vmatprep.subr.bf16.mxu0 0
    %1823 = vmatpush1.bf16.msra.mxu0 0
    %1824 = vmatprep.subr.bf16.mxu0 0
    %1825 = vmatpush1.bf16.msra.mxu0 0
    %1826 = vmatprep.subr.bf16.mxu0 0
    %1827 = vmatpush1.bf16.msra.mxu0 0
    %1828 = vmatprep.subr.bf16.mxu0 0
    %1829 = vmatpush1.bf16.msra.mxu0 0
    %1830 = vmatprep.subr.bf16.mxu0 0
    %1831 = vmatpush1.bf16.msra.mxu0 0
    %1832 = vmatprep.subr.bf16.mxu0 0
    %1833 = vmatpush1.bf16.msra.mxu0 0
    %1834 = vmatprep.subr.bf16.mxu0 0
    %1835 = vmatpush1.bf16.msra.mxu0 0
    %1836 = vmatprep.subr.bf16.mxu0 0
    %1837 = vmatpush1.bf16.msra.mxu0 0
    %1838 = vmatprep.subr.bf16.mxu0 0
    %1839 = vmatpush1.bf16.msra.mxu0 0
    %1840 = vmatprep.subr.bf16.mxu0 0
    %1841 = vmatpush1.bf16.msra.mxu0 0
    %1842 = vmatprep.subr.bf16.mxu0 0
    %1843 = vmatpush1.bf16.msra.mxu0 0
    %1844 = vmatprep.subr.bf16.mxu0 0
    %1845 = vmatpush1.bf16.msra.mxu0 0
    %1846 = vmatprep.subr.bf16.mxu0 0
    %1847 = vmatpush1.bf16.msra.mxu0 0
    %1848 = vmatprep.subr.bf16.mxu0 0
    %1849 = vmatpush1.bf16.msra.mxu0 0
    %1850 = vmatprep.mubr.bf16.mxu0 0
    %1851 = vmatmul.mubr.bf16.gmra.mrb[0].mxu0 %v1816
    %v1852 = vpop.f32.mrb[0].mxu0
    %v1853 = vadd.f32 0.0, %v1852
    %v1854 = vpop.f32.mrb[0].mxu0
    %v1855 = vpop.f32.mrb[0].mxu0
    %v1856 = vadd.f32 0.0, %v1855
    %v1857 = vpop.f32.mrb[0].mxu0
    %1858 = vdwg.mxu0
    %v1859 = vadd.f32 %v1799, %v1853
    %v1860 = vadd.f32 %v1800, %v1856
    %s1861 = scalar_lea.vmem %s1, 232
    %v1862 = vld [vmem:[%s1861] sm:$0xf]
    %v1863 = vld [vmem:[%s1861 + $0x4] sm:$0xf]
    %v1866 = vunpack.c.l.b16 %v1862
    %v1867 = vunpack.c.l.b16 %v1863
    %v1868 = vpack.c.b16 %v1867, %v1866
    %1869 = vrot.lane.b32.xlu0 %v1574, 106
    %v1870 = vpop.permute.xlu0 %1869
    %1871 = vrot.lane.b32.xlu0 %v1575, 106
    %v1872 = vpop.permute.xlu0 %1871
    %v1876 = vsel %vm48, %v1868, 0
    %1878 = vmatprep.subr.bf16.mxu0 0
    %1879 = vmatpush1.bf16.msra.mxu0 %v1870
    %1880 = vmatprep.subr.bf16.mxu0 0
    %1881 = vmatpush1.bf16.msra.mxu0 %v1872
    %1882 = vmatprep.subr.bf16.mxu0 0
    %1883 = vmatpush1.bf16.msra.mxu0 0
    %1884 = vmatprep.subr.bf16.mxu0 0
    %1885 = vmatpush1.bf16.msra.mxu0 0
    %1886 = vmatprep.subr.bf16.mxu0 0
    %1887 = vmatpush1.bf16.msra.mxu0 0
    %1888 = vmatprep.subr.bf16.mxu0 0
    %1889 = vmatpush1.bf16.msra.mxu0 0
    %1890 = vmatprep.subr.bf16.mxu0 0
    %1891 = vmatpush1.bf16.msra.mxu0 0
    %1892 = vmatprep.subr.bf16.mxu0 0
    %1893 = vmatpush1.bf16.msra.mxu0 0
    %1894 = vmatprep.subr.bf16.mxu0 0
    %1895 = vmatpush1.bf16.msra.mxu0 0
    %1896 = vmatprep.subr.bf16.mxu0 0
    %1897 = vmatpush1.bf16.msra.mxu0 0
    %1898 = vmatprep.subr.bf16.mxu0 0
    %1899 = vmatpush1.bf16.msra.mxu0 0
    %1900 = vmatprep.subr.bf16.mxu0 0
    %1901 = vmatpush1.bf16.msra.mxu0 0
    %1902 = vmatprep.subr.bf16.mxu0 0
    %1903 = vmatpush1.bf16.msra.mxu0 0
    %1904 = vmatprep.subr.bf16.mxu0 0
    %1905 = vmatpush1.bf16.msra.mxu0 0
    %1906 = vmatprep.subr.bf16.mxu0 0
    %1907 = vmatpush1.bf16.msra.mxu0 0
    %1908 = vmatprep.subr.bf16.mxu0 0
    %1909 = vmatpush1.bf16.msra.mxu0 0
    %1910 = vmatprep.mubr.bf16.mxu0 0
    %1911 = vmatmul.mubr.bf16.gmra.mrb[0].mxu0 %v1876
    %v1912 = vpop.f32.mrb[0].mxu0
    %v1913 = vadd.f32 0.0, %v1912
    %v1914 = vpop.f32.mrb[0].mxu0
    %v1915 = vpop.f32.mrb[0].mxu0
    %v1916 = vadd.f32 0.0, %v1915
    %v1917 = vpop.f32.mrb[0].mxu0
    %1918 = vdwg.mxu0
    %v1919 = vadd.f32 %v1859, %v1913
    %v1920 = vadd.f32 %v1860, %v1916
    %s1921 = scalar_lea.vmem %s1, 240
    %v1922 = vld [vmem:[%s1921] sm:$0xf]
    %v1923 = vld [vmem:[%s1921 + $0x4] sm:$0xf]
    %v1926 = vunpack.c.l.b16 %v1922
    %v1927 = vunpack.c.l.b16 %v1923
    %v1928 = vpack.c.b16 %v1927, %v1926
    %1929 = vrot.lane.b32.xlu0 %v1574, 103
    %v1930 = vpop.permute.xlu0 %1929
    %1931 = vrot.lane.b32.xlu0 %v1575, 103
    %v1932 = vpop.permute.xlu0 %1931
    %v1936 = vsel %vm48, %v1928, 0
    %1938 = vmatprep.subr.bf16.mxu0 0
    %1939 = vmatpush1.bf16.msra.mxu0 %v1930
    %1940 = vmatprep.subr.bf16.mxu0 0
    %1941 = vmatpush1.bf16.msra.mxu0 %v1932
    %1942 = vmatprep.subr.bf16.mxu0 0
    %1943 = vmatpush1.bf16.msra.mxu0 0
    %1944 = vmatprep.subr.bf16.mxu0 0
    %1945 = vmatpush1.bf16.msra.mxu0 0
    %1946 = vmatprep.subr.bf16.mxu0 0
    %1947 = vmatpush1.bf16.msra.mxu0 0
    %1948 = vmatprep.subr.bf16.mxu0 0
    %1949 = vmatpush1.bf16.msra.mxu0 0
    %1950 = vmatprep.subr.bf16.mxu0 0
    %1951 = vmatpush1.bf16.msra.mxu0 0
    %1952 = vmatprep.subr.bf16.mxu0 0
    %1953 = vmatpush1.bf16.msra.mxu0 0
    %1954 = vmatprep.subr.bf16.mxu0 0
    %1955 = vmatpush1.bf16.msra.mxu0 0
    %1956 = vmatprep.subr.bf16.mxu0 0
    %1957 = vmatpush1.bf16.msra.mxu0 0
    %1958 = vmatprep.subr.bf16.mxu0 0
    %1959 = vmatpush1.bf16.msra.mxu0 0
    %1960 = vmatprep.subr.bf16.mxu0 0
    %1961 = vmatpush1.bf16.msra.mxu0 0
    %1962 = vmatprep.subr.bf16.mxu0 0
    %1963 = vmatpush1.bf16.msra.mxu0 0
    %1964 = vmatprep.subr.bf16.mxu0 0
    %1965 = vmatpush1.bf16.msra.mxu0 0
    %1966 = vmatprep.subr.bf16.mxu0 0
    %1967 = vmatpush1.bf16.msra.mxu0 0
    %1968 = vmatprep.subr.bf16.mxu0 0
    %1969 = vmatpush1.bf16.msra.mxu0 0
    %1970 = vmatprep.mubr.bf16.mxu0 0
    %1971 = vmatmul.mubr.bf16.gmra.mrb[0].mxu0 %v1936
    %v1972 = vpop.f32.mrb[0].mxu0
    %v1973 = vadd.f32 0.0, %v1972
    %v1974 = vpop.f32.mrb[0].mxu0
    %v1975 = vpop.f32.mrb[0].mxu0
    %v1976 = vadd.f32 0.0, %v1975
    %v1977 = vpop.f32.mrb[0].mxu0
    %1978 = vdwg.mxu0
    %v1979 = vadd.f32 %v1919, %v1973
    %v1980 = vadd.f32 %v1920, %v1976
    %s1981 = scalar_lea.vmem %s1, 248
    %v1982 = vld [vmem:[%s1981] sm:$0xf]
    %v1983 = vld [vmem:[%s1981 + $0x4] sm:$0xf]
    %v1986 = vunpack.c.l.b16 %v1982
    %v1987 = vunpack.c.l.b16 %v1983
    %v1988 = vpack.c.b16 %v1987, %v1986
    %1989 = vrot.lane.b32.xlu0 %v1574, 102
    %v1990 = vpop.permute.xlu0 %1989
    %1991 = vrot.lane.b32.xlu0 %v1575, 102
    %v1992 = vpop.permute.xlu0 %1991
    %v1996 = vsel %vm48, %v1988, 0
    %1998 = vmatprep.subr.bf16.mxu0 0
    %1999 = vmatpush1.bf16.msra.mxu0 %v1990
    %2000 = vmatprep.subr.bf16.mxu0 0
    %2001 = vmatpush1.bf16.msra.mxu0 %v1992
    %2002 = vmatprep.subr.bf16.mxu0 0
    %2003 = vmatpush1.bf16.msra.mxu0 0
    %2004 = vmatprep.subr.bf16.mxu0 0
    %2005 = vmatpush1.bf16.msra.mxu0 0
    %2006 = vmatprep.subr.bf16.mxu0 0
    %2007 = vmatpush1.bf16.msra.mxu0 0
    %2008 = vmatprep.subr.bf16.mxu0 0
    %2009 = vmatpush1.bf16.msra.mxu0 0
    %2010 = vmatprep.subr.bf16.mxu0 0
    %2011 = vmatpush1.bf16.msra.mxu0 0
    %2012 = vmatprep.subr.bf16.mxu0 0
    %2013 = vmatpush1.bf16.msra.mxu0 0
    %2014 = vmatprep.subr.bf16.mxu0 0
    %2015 = vmatpush1.bf16.msra.mxu0 0
    %2016 = vmatprep.subr.bf16.mxu0 0
    %2017 = vmatpush1.bf16.msra.mxu0 0
    %2018 = vmatprep.subr.bf16.mxu0 0
    %2019 = vmatpush1.bf16.msra.mxu0 0
    %2020 = vmatprep.subr.bf16.mxu0 0
    %2021 = vmatpush1.bf16.msra.mxu0 0
    %2022 = vmatprep.subr.bf16.mxu0 0
    %2023 = vmatpush1.bf16.msra.mxu0 0
    %2024 = vmatprep.subr.bf16.mxu0 0
    %2025 = vmatpush1.bf16.msra.mxu0 0
    %2026 = vmatprep.subr.bf16.mxu0 0
    %2027 = vmatpush1.bf16.msra.mxu0 0
    %2028 = vmatprep.subr.bf16.mxu0 0
    %2029 = vmatpush1.bf16.msra.mxu0 0
    %2030 = vmatprep.mubr.bf16.mxu0 0
    %2031 = vmatmul.mubr.bf16.gmra.mrb[0].mxu0 %v1996
    %v2032 = vpop.f32.mrb[0].mxu0
    %v2033 = vadd.f32 0.0, %v2032
    %v2034 = vpop.f32.mrb[0].mxu0
    %v2035 = vpop.f32.mrb[0].mxu0
    %v2036 = vadd.f32 0.0, %v2035
    %v2037 = vpop.f32.mrb[0].mxu0
    %2038 = vdwg.mxu0
    %v2039 = vadd.f32 %v1979, %v2033
    %v2040 = vadd.f32 %v1980, %v2036
    %v2041 = vadd.f32 %v2039, %v507
    %v2042 = vadd.f32 %v2040, %v512
    %vm2043 = vcmp.ge.f32.partialorder %v2041, 0.0
    %vm2044 = vcmp.ge.f32.partialorder %v2042, 0.0
    %v2045 = vmul.f32 %v2041, 0.2
    %v2046 = vmul.f32 %v2042, 0.2
    %v2047 = vsel %vm2043, %v2041, %v2045
    %v2048 = vsel %vm2044, %v2042, %v2046
    %v2049 = vpack.c.bf16 %v2048, %v2047
    %v2051 = vunpack.c.l.b16 %v2049
    %v2052 = vunpack.c.h.b16 %v2049
    %v2053 = vpack.c.b16 %v2051, %v2051
    %v2054 = vpack.c.b16 %v2052, %v2052
    %s2057 = scalar_lea.vmem [#allocation2], 24
    %2058 = vst.msk [vmem:[%s2057] sm:$0xf] %vm530, %v2053
    %2059 = vst.msk [vmem:[%s2057 + $0x4] sm:$0xf] %vm530, %v2054
    %s2060 = scalar_lea.vmem %s1, 256
    %v2061 = vld [vmem:[%s2060] sm:$0xf]
    %v2062 = vld [vmem:[%s2060 + $0x4] sm:$0xf]
    %v2063 = vld [vmem:[%s0] sm:$0xf]
    %v2064 = vld [vmem:[%s0 + $0x4] sm:$0xf]
    %v2065 = vld [vmem:[%s0 + $0x8] sm:$0xf]
    %v2066 = vld [vmem:[%s0 + $0xc] sm:$0xf]
    %s2067 = scalar_lea.vmem %s1, 264
    %v2068 = vld [vmem:[%s2067] sm:$0xf]
    %v2069 = vld [vmem:[%s2067 + $0x4] sm:$0xf]
    %v2072 = vunpack.c.l.b16 %v2068
    %v2073 = vunpack.c.l.b16 %v2069
    %v2074 = vpack.c.b16 %v2073, %v2072
    %v2079 = vunpack.c.l.b16 %v2063
    %v2080 = vunpack.c.l.b16 %v2064
    %v2081 = vunpack.c.l.b16 %v2065
    %v2082 = vunpack.c.l.b16 %v2066
    %v2083 = vpack.c.b16 %v2080, %v2079
    %v2084 = vpack.c.b16 %v2082, %v2081
    %2085 = vrot.lane.b32.xlu0 %v2083, 111
    %v2086 = vpop.permute.xlu0 %2085
    %2087 = vrot.lane.b32.xlu0 %v2084, 111
    %v2088 = vpop.permute.xlu0 %2087
    %v2092 = vsel %vm48, %v2074, 0
    %2094 = vmatprep.subr.bf16.mxu0 0
    %2095 = vmatpush1.bf16.msra.mxu0 %v2086
    %2096 = vmatprep.subr.bf16.mxu0 0
    %2097 = vmatpush1.bf16.msra.mxu0 %v2088
    %2098 = vmatprep.subr.bf16.mxu0 0
    %2099 = vmatpush1.bf16.msra.mxu0 0
    %2100 = vmatprep.subr.bf16.mxu0 0
    %2101 = vmatpush1.bf16.msra.mxu0 0
    %2102 = vmatprep.subr.bf16.mxu0 0
    %2103 = vmatpush1.bf16.msra.mxu0 0
    %2104 = vmatprep.subr.bf16.mxu0 0
    %2105 = vmatpush1.bf16.msra.mxu0 0
    %2106 = vmatprep.subr.bf16.mxu0 0
    %2107 = vmatpush1.bf16.msra.mxu0 0
    %2108 = vmatprep.subr.bf16.mxu0 0
    %2109 = vmatpush1.bf16.msra.mxu0 0
    %2110 = vmatprep.subr.bf16.mxu0 0
    %2111 = vmatpush1.bf16.msra.mxu0 0
    %2112 = vmatprep.subr.bf16.mxu0 0
    %2113 = vmatpush1.bf16.msra.mxu0 0
    %2114 = vmatprep.subr.bf16.mxu0 0
    %2115 = vmatpush1.bf16.msra.mxu0 0
    %2116 = vmatprep.subr.bf16.mxu0 0
    %2117 = vmatpush1.bf16.msra.mxu0 0
    %2118 = vmatprep.subr.bf16.mxu0 0
    %2119 = vmatpush1.bf16.msra.mxu0 0
    %2120 = vmatprep.subr.bf16.mxu0 0
    %2121 = vmatpush1.bf16.msra.mxu0 0
    %2122 = vmatprep.subr.bf16.mxu0 0
    %2123 = vmatpush1.bf16.msra.mxu0 0
    %2124 = vmatprep.subr.bf16.mxu0 0
    %2125 = vmatpush1.bf16.msra.mxu0 0
    %2126 = vmatprep.mubr.bf16.mxu0 0
    %2127 = vmatmul.mubr.bf16.gmra.mrb[0].mxu0 %v2092
    %v2128 = vpop.f32.mrb[0].mxu0
    %v2129 = vadd.f32 0.0, %v2128
    %v2130 = vpop.f32.mrb[0].mxu0
    %v2131 = vpop.f32.mrb[0].mxu0
    %v2132 = vadd.f32 0.0, %v2131
    %v2133 = vpop.f32.mrb[0].mxu0
    %2134 = vdwg.mxu0
    %v2137 = vunpack.c.l.b16 %v2061
    %v2138 = vunpack.c.l.b16 %v2062
    %v2139 = vpack.c.b16 %v2138, %v2137
    %2140 = vrot.lane.b32.xlu0 %v2083, 112
    %v2141 = vpop.permute.xlu0 %2140
    %2142 = vrot.lane.b32.xlu0 %v2084, 112
    %v2143 = vpop.permute.xlu0 %2142
    %v2147 = vsel %vm48, %v2139, 0
    %2149 = vmatprep.subr.bf16.mxu0 0
    %2150 = vmatpush1.bf16.msra.mxu0 %v2141
    %2151 = vmatprep.subr.bf16.mxu0 0
    %2152 = vmatpush1.bf16.msra.mxu0 %v2143
    %2153 = vmatprep.subr.bf16.mxu0 0
    %2154 = vmatpush1.bf16.msra.mxu0 0
    %2155 = vmatprep.subr.bf16.mxu0 0
    %2156 = vmatpush1.bf16.msra.mxu0 0
    %2157 = vmatprep.subr.bf16.mxu0 0
    %2158 = vmatpush1.bf16.msra.mxu0 0
    %2159 = vmatprep.subr.bf16.mxu0 0
    %2160 = vmatpush1.bf16.msra.mxu0 0
    %2161 = vmatprep.subr.bf16.mxu0 0
    %2162 = vmatpush1.bf16.msra.mxu0 0
    %2163 = vmatprep.subr.bf16.mxu0 0
    %2164 = vmatpush1.bf16.msra.mxu0 0
    %2165 = vmatprep.subr.bf16.mxu0 0
    %2166 = vmatpush1.bf16.msra.mxu0 0
    %2167 = vmatprep.subr.bf16.mxu0 0
    %2168 = vmatpush1.bf16.msra.mxu0 0
    %2169 = vmatprep.subr.bf16.mxu0 0
    %2170 = vmatpush1.bf16.msra.mxu0 0
    %2171 = vmatprep.subr.bf16.mxu0 0
    %2172 = vmatpush1.bf16.msra.mxu0 0
    %2173 = vmatprep.subr.bf16.mxu0 0
    %2174 = vmatpush1.bf16.msra.mxu0 0
    %2175 = vmatprep.subr.bf16.mxu0 0
    %2176 = vmatpush1.bf16.msra.mxu0 0
    %2177 = vmatprep.subr.bf16.mxu0 0
    %2178 = vmatpush1.bf16.msra.mxu0 0
    %2179 = vmatprep.subr.bf16.mxu0 0
    %2180 = vmatpush1.bf16.msra.mxu0 0
    %2181 = vmatprep.mubr.bf16.mxu0 0
    %2182 = vmatmul.mubr.bf16.gmra.mrb[0].mxu0 %v2147
    %v2183 = vpop.f32.mrb[0].mxu0
    %v2184 = vadd.f32 %v2129, %v2183
    %v2185 = vpop.f32.mrb[0].mxu0
    %v2186 = vpop.f32.mrb[0].mxu0
    %v2187 = vadd.f32 %v2132, %v2186
    %v2188 = vpop.f32.mrb[0].mxu0
    %2189 = vdwg.mxu0
    %s2190 = scalar_lea.vmem %s1, 272
    %v2191 = vld [vmem:[%s2190] sm:$0xf]
    %v2192 = vld [vmem:[%s2190 + $0x4] sm:$0xf]
    %v2195 = vunpack.c.l.b16 %v2191
    %v2196 = vunpack.c.l.b16 %v2192
    %v2197 = vpack.c.b16 %v2196, %v2195
    %2198 = vrot.lane.b32.xlu0 %v2083, 108
    %v2199 = vpop.permute.xlu0 %2198
    %2200 = vrot.lane.b32.xlu0 %v2084, 108
    %v2201 = vpop.permute.xlu0 %2200
    %v2205 = vsel %vm48, %v2197, 0
    %2207 = vmatprep.subr.bf16.mxu0 0
    %2208 = vmatpush1.bf16.msra.mxu0 %v2199
    %2209 = vmatprep.subr.bf16.mxu0 0
    %2210 = vmatpush1.bf16.msra.mxu0 %v2201
    %2211 = vmatprep.subr.bf16.mxu0 0
    %2212 = vmatpush1.bf16.msra.mxu0 0
    %2213 = vmatprep.subr.bf16.mxu0 0
    %2214 = vmatpush1.bf16.msra.mxu0 0
    %2215 = vmatprep.subr.bf16.mxu0 0
    %2216 = vmatpush1.bf16.msra.mxu0 0
    %2217 = vmatprep.subr.bf16.mxu0 0
    %2218 = vmatpush1.bf16.msra.mxu0 0
    %2219 = vmatprep.subr.bf16.mxu0 0
    %2220 = vmatpush1.bf16.msra.mxu0 0
    %2221 = vmatprep.subr.bf16.mxu0 0
    %2222 = vmatpush1.bf16.msra.mxu0 0
    %2223 = vmatprep.subr.bf16.mxu0 0
    %2224 = vmatpush1.bf16.msra.mxu0 0
    %2225 = vmatprep.subr.bf16.mxu0 0
    %2226 = vmatpush1.bf16.msra.mxu0 0
    %2227 = vmatprep.subr.bf16.mxu0 0
    %2228 = vmatpush1.bf16.msra.mxu0 0
    %2229 = vmatprep.subr.bf16.mxu0 0
    %2230 = vmatpush1.bf16.msra.mxu0 0
    %2231 = vmatprep.subr.bf16.mxu0 0
    %2232 = vmatpush1.bf16.msra.mxu0 0
    %2233 = vmatprep.subr.bf16.mxu0 0
    %2234 = vmatpush1.bf16.msra.mxu0 0
    %2235 = vmatprep.subr.bf16.mxu0 0
    %2236 = vmatpush1.bf16.msra.mxu0 0
    %2237 = vmatprep.subr.bf16.mxu0 0
    %2238 = vmatpush1.bf16.msra.mxu0 0
    %2239 = vmatprep.mubr.bf16.mxu0 0
    %2240 = vmatmul.mubr.bf16.gmra.mrb[0].mxu0 %v2205
    %v2241 = vpop.f32.mrb[0].mxu0
    %v2242 = vadd.f32 0.0, %v2241
    %v2243 = vpop.f32.mrb[0].mxu0
    %v2244 = vpop.f32.mrb[0].mxu0
    %v2245 = vadd.f32 0.0, %v2244
    %v2246 = vpop.f32.mrb[0].mxu0
    %2247 = vdwg.mxu0
    %v2248 = vadd.f32 %v2184, %v2242
    %v2249 = vadd.f32 %v2187, %v2245
    %s2250 = scalar_lea.vmem %s1, 280
    %v2251 = vld [vmem:[%s2250] sm:$0xf]
    %v2252 = vld [vmem:[%s2250 + $0x4] sm:$0xf]
    %v2255 = vunpack.c.l.b16 %v2251
    %v2256 = vunpack.c.l.b16 %v2252
    %v2257 = vpack.c.b16 %v2256, %v2255
    %2258 = vrot.lane.b32.xlu0 %v2083, 107
    %v2259 = vpop.permute.xlu0 %2258
    %2260 = vrot.lane.b32.xlu0 %v2084, 107
    %v2261 = vpop.permute.xlu0 %2260
    %v2265 = vsel %vm48, %v2257, 0
    %2267 = vmatprep.subr.bf16.mxu0 0
    %2268 = vmatpush1.bf16.msra.mxu0 %v2259
    %2269 = vmatprep.subr.bf16.mxu0 0
    %2270 = vmatpush1.bf16.msra.mxu0 %v2261
    %2271 = vmatprep.subr.bf16.mxu0 0
    %2272 = vmatpush1.bf16.msra.mxu0 0
    %2273 = vmatprep.subr.bf16.mxu0 0
    %2274 = vmatpush1.bf16.msra.mxu0 0
    %2275 = vmatprep.subr.bf16.mxu0 0
    %2276 = vmatpush1.bf16.msra.mxu0 0
    %2277 = vmatprep.subr.bf16.mxu0 0
    %2278 = vmatpush1.bf16.msra.mxu0 0
    %2279 = vmatprep.subr.bf16.mxu0 0
    %2280 = vmatpush1.bf16.msra.mxu0 0
    %2281 = vmatprep.subr.bf16.mxu0 0
    %2282 = vmatpush1.bf16.msra.mxu0 0
    %2283 = vmatprep.subr.bf16.mxu0 0
    %2284 = vmatpush1.bf16.msra.mxu0 0
    %2285 = vmatprep.subr.bf16.mxu0 0
    %2286 = vmatpush1.bf16.msra.mxu0 0
    %2287 = vmatprep.subr.bf16.mxu0 0
    %2288 = vmatpush1.bf16.msra.mxu0 0
    %2289 = vmatprep.subr.bf16.mxu0 0
    %2290 = vmatpush1.bf16.msra.mxu0 0
    %2291 = vmatprep.subr.bf16.mxu0 0
    %2292 = vmatpush1.bf16.msra.mxu0 0
    %2293 = vmatprep.subr.bf16.mxu0 0
    %2294 = vmatpush1.bf16.msra.mxu0 0
    %2295 = vmatprep.subr.bf16.mxu0 0
    %2296 = vmatpush1.bf16.msra.mxu0 0
    %2297 = vmatprep.subr.bf16.mxu0 0
    %2298 = vmatpush1.bf16.msra.mxu0 0
    %2299 = vmatprep.mubr.bf16.mxu0 0
    %2300 = vmatmul.mubr.bf16.gmra.mrb[0].mxu0 %v2265
    %v2301 = vpop.f32.mrb[0].mxu0
    %v2302 = vadd.f32 0.0, %v2301
    %v2303 = vpop.f32.mrb[0].mxu0
    %v2304 = vpop.f32.mrb[0].mxu0
    %v2305 = vadd.f32 0.0, %v2304
    %v2306 = vpop.f32.mrb[0].mxu0
    %2307 = vdwg.mxu0
    %v2308 = vadd.f32 %v2248, %v2302
    %v2309 = vadd.f32 %v2249, %v2305
    %s2310 = scalar_lea.vmem %s1, 288
    %v2311 = vld [vmem:[%s2310] sm:$0xf]
    %v2312 = vld [vmem:[%s2310 + $0x4] sm:$0xf]
    %v2315 = vunpack.c.l.b16 %v2311
    %v2316 = vunpack.c.l.b16 %v2312
    %v2317 = vpack.c.b16 %v2316, %v2315
    %2318 = vrot.lane.b32.xlu0 %v2083, 96
    %v2319 = vpop.permute.xlu0 %2318
    %2320 = vrot.lane.b32.xlu0 %v2084, 96
    %v2321 = vpop.permute.xlu0 %2320
    %v2325 = vsel %vm48, %v2317, 0
    %2327 = vmatprep.subr.bf16.mxu0 0
    %2328 = vmatpush1.bf16.msra.mxu0 %v2319
    %2329 = vmatprep.subr.bf16.mxu0 0
    %2330 = vmatpush1.bf16.msra.mxu0 %v2321
    %2331 = vmatprep.subr.bf16.mxu0 0
    %2332 = vmatpush1.bf16.msra.mxu0 0
    %2333 = vmatprep.subr.bf16.mxu0 0
    %2334 = vmatpush1.bf16.msra.mxu0 0
    %2335 = vmatprep.subr.bf16.mxu0 0
    %2336 = vmatpush1.bf16.msra.mxu0 0
    %2337 = vmatprep.subr.bf16.mxu0 0
    %2338 = vmatpush1.bf16.msra.mxu0 0
    %2339 = vmatprep.subr.bf16.mxu0 0
    %2340 = vmatpush1.bf16.msra.mxu0 0
    %2341 = vmatprep.subr.bf16.mxu0 0
    %2342 = vmatpush1.bf16.msra.mxu0 0
    %2343 = vmatprep.subr.bf16.mxu0 0
    %2344 = vmatpush1.bf16.msra.mxu0 0
    %2345 = vmatprep.subr.bf16.mxu0 0
    %2346 = vmatpush1.bf16.msra.mxu0 0
    %2347 = vmatprep.subr.bf16.mxu0 0
    %2348 = vmatpush1.bf16.msra.mxu0 0
    %2349 = vmatprep.subr.bf16.mxu0 0
    %2350 = vmatpush1.bf16.msra.mxu0 0
    %2351 = vmatprep.subr.bf16.mxu0 0
    %2352 = vmatpush1.bf16.msra.mxu0 0
    %2353 = vmatprep.subr.bf16.mxu0 0
    %2354 = vmatpush1.bf16.msra.mxu0 0
    %2355 = vmatprep.subr.bf16.mxu0 0
    %2356 = vmatpush1.bf16.msra.mxu0 0
    %2357 = vmatprep.subr.bf16.mxu0 0
    %2358 = vmatpush1.bf16.msra.mxu0 0
    %2359 = vmatprep.mubr.bf16.mxu0 0
    %2360 = vmatmul.mubr.bf16.gmra.mrb[0].mxu0 %v2325
    %v2361 = vpop.f32.mrb[0].mxu0
    %v2362 = vadd.f32 0.0, %v2361
    %v2363 = vpop.f32.mrb[0].mxu0
    %v2364 = vpop.f32.mrb[0].mxu0
    %v2365 = vadd.f32 0.0, %v2364
    %v2366 = vpop.f32.mrb[0].mxu0
    %2367 = vdwg.mxu0
    %v2368 = vadd.f32 %v2308, %v2362
    %v2369 = vadd.f32 %v2309, %v2365
    %s2370 = scalar_lea.vmem %s1, 296
    %v2371 = vld [vmem:[%s2370] sm:$0xf]
    %v2372 = vld [vmem:[%s2370 + $0x4] sm:$0xf]
    %v2375 = vunpack.c.l.b16 %v2371
    %v2376 = vunpack.c.l.b16 %v2372
    %v2377 = vpack.c.b16 %v2376, %v2375
    %2378 = vrot.lane.b32.xlu0 %v2083, 95
    %v2379 = vpop.permute.xlu0 %2378
    %2380 = vrot.lane.b32.xlu0 %v2084, 95
    %v2381 = vpop.permute.xlu0 %2380
    %v2385 = vsel %vm48, %v2377, 0
    %2387 = vmatprep.subr.bf16.mxu0 0
    %2388 = vmatpush1.bf16.msra.mxu0 %v2379
    %2389 = vmatprep.subr.bf16.mxu0 0
    %2390 = vmatpush1.bf16.msra.mxu0 %v2381
    %2391 = vmatprep.subr.bf16.mxu0 0
    %2392 = vmatpush1.bf16.msra.mxu0 0
    %2393 = vmatprep.subr.bf16.mxu0 0
    %2394 = vmatpush1.bf16.msra.mxu0 0
    %2395 = vmatprep.subr.bf16.mxu0 0
    %2396 = vmatpush1.bf16.msra.mxu0 0
    %2397 = vmatprep.subr.bf16.mxu0 0
    %2398 = vmatpush1.bf16.msra.mxu0 0
    %2399 = vmatprep.subr.bf16.mxu0 0
    %2400 = vmatpush1.bf16.msra.mxu0 0
    %2401 = vmatprep.subr.bf16.mxu0 0
    %2402 = vmatpush1.bf16.msra.mxu0 0
    %2403 = vmatprep.subr.bf16.mxu0 0
    %2404 = vmatpush1.bf16.msra.mxu0 0
    %2405 = vmatprep.subr.bf16.mxu0 0
    %2406 = vmatpush1.bf16.msra.mxu0 0
    %2407 = vmatprep.subr.bf16.mxu0 0
    %2408 = vmatpush1.bf16.msra.mxu0 0
    %2409 = vmatprep.subr.bf16.mxu0 0
    %2410 = vmatpush1.bf16.msra.mxu0 0
    %2411 = vmatprep.subr.bf16.mxu0 0
    %2412 = vmatpush1.bf16.msra.mxu0 0
    %2413 = vmatprep.subr.bf16.mxu0 0
    %2414 = vmatpush1.bf16.msra.mxu0 0
    %2415 = vmatprep.subr.bf16.mxu0 0
    %2416 = vmatpush1.bf16.msra.mxu0 0
    %2417 = vmatprep.subr.bf16.mxu0 0
    %2418 = vmatpush1.bf16.msra.mxu0 0
    %2419 = vmatprep.mubr.bf16.mxu0 0
    %2420 = vmatmul.mubr.bf16.gmra.mrb[0].mxu0 %v2385
    %v2421 = vpop.f32.mrb[0].mxu0
    %v2422 = vadd.f32 0.0, %v2421
    %v2423 = vpop.f32.mrb[0].mxu0
    %v2424 = vpop.f32.mrb[0].mxu0
    %v2425 = vadd.f32 0.0, %v2424
    %v2426 = vpop.f32.mrb[0].mxu0
    %2427 = vdwg.mxu0
    %v2428 = vadd.f32 %v2368, %v2422
    %v2429 = vadd.f32 %v2369, %v2425
    %s2430 = scalar_lea.vmem %s1, 304
    %v2431 = vld [vmem:[%s2430] sm:$0xf]
    %v2432 = vld [vmem:[%s2430 + $0x4] sm:$0xf]
    %v2435 = vunpack.c.l.b16 %v2431
    %v2436 = vunpack.c.l.b16 %v2432
    %v2437 = vpack.c.b16 %v2436, %v2435
    %2438 = vrot.lane.b32.xlu0 %v2083, 92
    %v2439 = vpop.permute.xlu0 %2438
    %2440 = vrot.lane.b32.xlu0 %v2084, 92
    %v2441 = vpop.permute.xlu0 %2440
    %v2445 = vsel %vm48, %v2437, 0
    %2447 = vmatprep.subr.bf16.mxu0 0
    %2448 = vmatpush1.bf16.msra.mxu0 %v2439
    %2449 = vmatprep.subr.bf16.mxu0 0
    %2450 = vmatpush1.bf16.msra.mxu0 %v2441
    %2451 = vmatprep.subr.bf16.mxu0 0
    %2452 = vmatpush1.bf16.msra.mxu0 0
    %2453 = vmatprep.subr.bf16.mxu0 0
    %2454 = vmatpush1.bf16.msra.mxu0 0
    %2455 = vmatprep.subr.bf16.mxu0 0
    %2456 = vmatpush1.bf16.msra.mxu0 0
    %2457 = vmatprep.subr.bf16.mxu0 0
    %2458 = vmatpush1.bf16.msra.mxu0 0
    %2459 = vmatprep.subr.bf16.mxu0 0
    %2460 = vmatpush1.bf16.msra.mxu0 0
    %2461 = vmatprep.subr.bf16.mxu0 0
    %2462 = vmatpush1.bf16.msra.mxu0 0
    %2463 = vmatprep.subr.bf16.mxu0 0
    %2464 = vmatpush1.bf16.msra.mxu0 0
    %2465 = vmatprep.subr.bf16.mxu0 0
    %2466 = vmatpush1.bf16.msra.mxu0 0
    %2467 = vmatprep.subr.bf16.mxu0 0
    %2468 = vmatpush1.bf16.msra.mxu0 0
    %2469 = vmatprep.subr.bf16.mxu0 0
    %2470 = vmatpush1.bf16.msra.mxu0 0
    %2471 = vmatprep.subr.bf16.mxu0 0
    %2472 = vmatpush1.bf16.msra.mxu0 0
    %2473 = vmatprep.subr.bf16.mxu0 0
    %2474 = vmatpush1.bf16.msra.mxu0 0
    %2475 = vmatprep.subr.bf16.mxu0 0
    %2476 = vmatpush1.bf16.msra.mxu0 0
    %2477 = vmatprep.subr.bf16.mxu0 0
    %2478 = vmatpush1.bf16.msra.mxu0 0
    %2479 = vmatprep.mubr.bf16.mxu0 0
    %2480 = vmatmul.mubr.bf16.gmra.mrb[0].mxu0 %v2445
    %v2481 = vpop.f32.mrb[0].mxu0
    %v2482 = vadd.f32 0.0, %v2481
    %v2483 = vpop.f32.mrb[0].mxu0
    %v2484 = vpop.f32.mrb[0].mxu0
    %v2485 = vadd.f32 0.0, %v2484
    %v2486 = vpop.f32.mrb[0].mxu0
    %2487 = vdwg.mxu0
    %v2488 = vadd.f32 %v2428, %v2482
    %v2489 = vadd.f32 %v2429, %v2485
    %s2490 = scalar_lea.vmem %s1, 312
    %v2491 = vld [vmem:[%s2490] sm:$0xf]
    %v2492 = vld [vmem:[%s2490 + $0x4] sm:$0xf]
    %v2495 = vunpack.c.l.b16 %v2491
    %v2496 = vunpack.c.l.b16 %v2492
    %v2497 = vpack.c.b16 %v2496, %v2495
    %2498 = vrot.lane.b32.xlu0 %v2083, 91
    %v2499 = vpop.permute.xlu0 %2498
    %2500 = vrot.lane.b32.xlu0 %v2084, 91
    %v2501 = vpop.permute.xlu0 %2500
    %v2505 = vsel %vm48, %v2497, 0
    %2507 = vmatprep.subr.bf16.mxu0 0
    %2508 = vmatpush1.bf16.msra.mxu0 %v2499
    %2509 = vmatprep.subr.bf16.mxu0 0
    %2510 = vmatpush1.bf16.msra.mxu0 %v2501
    %2511 = vmatprep.subr.bf16.mxu0 0
    %2512 = vmatpush1.bf16.msra.mxu0 0
    %2513 = vmatprep.subr.bf16.mxu0 0
    %2514 = vmatpush1.bf16.msra.mxu0 0
    %2515 = vmatprep.subr.bf16.mxu0 0
    %2516 = vmatpush1.bf16.msra.mxu0 0
    %2517 = vmatprep.subr.bf16.mxu0 0
    %2518 = vmatpush1.bf16.msra.mxu0 0
    %2519 = vmatprep.subr.bf16.mxu0 0
    %2520 = vmatpush1.bf16.msra.mxu0 0
    %2521 = vmatprep.subr.bf16.mxu0 0
    %2522 = vmatpush1.bf16.msra.mxu0 0
    %2523 = vmatprep.subr.bf16.mxu0 0
    %2524 = vmatpush1.bf16.msra.mxu0 0
    %2525 = vmatprep.subr.bf16.mxu0 0
    %2526 = vmatpush1.bf16.msra.mxu0 0
    %2527 = vmatprep.subr.bf16.mxu0 0
    %2528 = vmatpush1.bf16.msra.mxu0 0
    %2529 = vmatprep.subr.bf16.mxu0 0
    %2530 = vmatpush1.bf16.msra.mxu0 0
    %2531 = vmatprep.subr.bf16.mxu0 0
    %2532 = vmatpush1.bf16.msra.mxu0 0
    %2533 = vmatprep.subr.bf16.mxu0 0
    %2534 = vmatpush1.bf16.msra.mxu0 0
    %2535 = vmatprep.subr.bf16.mxu0 0
    %2536 = vmatpush1.bf16.msra.mxu0 0
    %2537 = vmatprep.subr.bf16.mxu0 0
    %2538 = vmatpush1.bf16.msra.mxu0 0
    %2539 = vmatprep.mubr.bf16.mxu0 0
    %2540 = vmatmul.mubr.bf16.gmra.mrb[0].mxu0 %v2505
    %v2541 = vpop.f32.mrb[0].mxu0
    %v2542 = vadd.f32 0.0, %v2541
    %v2543 = vpop.f32.mrb[0].mxu0
    %v2544 = vpop.f32.mrb[0].mxu0
    %v2545 = vadd.f32 0.0, %v2544
    %v2546 = vpop.f32.mrb[0].mxu0
    %2547 = vdwg.mxu0
    %v2548 = vadd.f32 %v2488, %v2542
    %v2549 = vadd.f32 %v2489, %v2545
    %v2550 = vadd.f32 %v2548, %v507
    %v2551 = vadd.f32 %v2549, %v512
    %vm2552 = vcmp.ge.f32.partialorder %v2550, 0.0
    %vm2553 = vcmp.ge.f32.partialorder %v2551, 0.0
    %v2554 = vmul.f32 %v2550, 0.2
    %v2555 = vmul.f32 %v2551, 0.2
    %v2556 = vsel %vm2552, %v2550, %v2554
    %v2557 = vsel %vm2553, %v2551, %v2555
    %v2558 = vpack.c.bf16 %v2557, %v2556
    %v2560 = vunpack.c.l.b16 %v2558
    %v2561 = vunpack.c.h.b16 %v2558
    %v2562 = vpack.c.b16 %v2560, %v2560
    %v2563 = vpack.c.b16 %v2561, %v2561
    %s2566 = scalar_lea.vmem [#allocation2], 32
    %2567 = vst.msk [vmem:[%s2566] sm:$0xf] %vm530, %v2562
    %2568 = vst.msk [vmem:[%s2566 + $0x4] sm:$0xf] %vm530, %v2563
    %s2569 = scalar_lea.vmem %s1, 320
    %v2570 = vld [vmem:[%s2569] sm:$0xf]
    %v2571 = vld [vmem:[%s2569 + $0x4] sm:$0xf]
    %v2572 = vld [vmem:[%s0] sm:$0xf]
    %v2573 = vld [vmem:[%s0 + $0x4] sm:$0xf]
    %v2574 = vld [vmem:[%s0 + $0x8] sm:$0xf]
    %v2575 = vld [vmem:[%s0 + $0xc] sm:$0xf]
    %s2576 = scalar_lea.vmem %s1, 328
    %v2577 = vld [vmem:[%s2576] sm:$0xf]
    %v2578 = vld [vmem:[%s2576 + $0x4] sm:$0xf]
    %v2581 = vunpack.c.l.b16 %v2577
    %v2582 = vunpack.c.l.b16 %v2578
    %v2583 = vpack.c.b16 %v2582, %v2581
    %v2588 = vunpack.c.l.b16 %v2572
    %v2589 = vunpack.c.l.b16 %v2573
    %v2590 = vunpack.c.l.b16 %v2574
    %v2591 = vunpack.c.l.b16 %v2575
    %v2592 = vpack.c.b16 %v2589, %v2588
    %v2593 = vpack.c.b16 %v2591, %v2590
    %2594 = vrot.lane.b32.xlu0 %v2592, 110
    %v2595 = vpop.permute.xlu0 %2594
    %2596 = vrot.lane.b32.xlu0 %v2593, 110
    %v2597 = vpop.permute.xlu0 %2596
    %v2601 = vsel %vm48, %v2583, 0
    %2603 = vmatprep.subr.bf16.mxu0 0
    %2604 = vmatpush1.bf16.msra.mxu0 %v2595
    %2605 = vmatprep.subr.bf16.mxu0 0
    %2606 = vmatpush1.bf16.msra.mxu0 %v2597
    %2607 = vmatprep.subr.bf16.mxu0 0
    %2608 = vmatpush1.bf16.msra.mxu0 0
    %2609 = vmatprep.subr.bf16.mxu0 0
    %2610 = vmatpush1.bf16.msra.mxu0 0
    %2611 = vmatprep.subr.bf16.mxu0 0
    %2612 = vmatpush1.bf16.msra.mxu0 0
    %2613 = vmatprep.subr.bf16.mxu0 0
    %2614 = vmatpush1.bf16.msra.mxu0 0
    %2615 = vmatprep.subr.bf16.mxu0 0
    %2616 = vmatpush1.bf16.msra.mxu0 0
    %2617 = vmatprep.subr.bf16.mxu0 0
    %2618 = vmatpush1.bf16.msra.mxu0 0
    %2619 = vmatprep.subr.bf16.mxu0 0
    %2620 = vmatpush1.bf16.msra.mxu0 0
    %2621 = vmatprep.subr.bf16.mxu0 0
    %2622 = vmatpush1.bf16.msra.mxu0 0
    %2623 = vmatprep.subr.bf16.mxu0 0
    %2624 = vmatpush1.bf16.msra.mxu0 0
    %2625 = vmatprep.subr.bf16.mxu0 0
    %2626 = vmatpush1.bf16.msra.mxu0 0
    %2627 = vmatprep.subr.bf16.mxu0 0
    %2628 = vmatpush1.bf16.msra.mxu0 0
    %2629 = vmatprep.subr.bf16.mxu0 0
    %2630 = vmatpush1.bf16.msra.mxu0 0
    %2631 = vmatprep.subr.bf16.mxu0 0
    %2632 = vmatpush1.bf16.msra.mxu0 0
    %2633 = vmatprep.subr.bf16.mxu0 0
    %2634 = vmatpush1.bf16.msra.mxu0 0
    %2635 = vmatprep.mubr.bf16.mxu0 0
    %2636 = vmatmul.mubr.bf16.gmra.mrb[0].mxu0 %v2601
    %v2637 = vpop.f32.mrb[0].mxu0
    %v2638 = vadd.f32 0.0, %v2637
    %v2639 = vpop.f32.mrb[0].mxu0
    %v2640 = vpop.f32.mrb[0].mxu0
    %v2641 = vadd.f32 0.0, %v2640
    %v2642 = vpop.f32.mrb[0].mxu0
    %2643 = vdwg.mxu0
    %v2646 = vunpack.c.l.b16 %v2570
    %v2647 = vunpack.c.l.b16 %v2571
    %v2648 = vpack.c.b16 %v2647, %v2646
    %2649 = vrot.lane.b32.xlu0 %v2592, 111
    %v2650 = vpop.permute.xlu0 %2649
    %2651 = vrot.lane.b32.xlu0 %v2593, 111
    %v2652 = vpop.permute.xlu0 %2651
    %v2656 = vsel %vm48, %v2648, 0
    %2658 = vmatprep.subr.bf16.mxu0 0
    %2659 = vmatpush1.bf16.msra.mxu0 %v2650
    %2660 = vmatprep.subr.bf16.mxu0 0
    %2661 = vmatpush1.bf16.msra.mxu0 %v2652
    %2662 = vmatprep.subr.bf16.mxu0 0
    %2663 = vmatpush1.bf16.msra.mxu0 0
    %2664 = vmatprep.subr.bf16.mxu0 0
    %2665 = vmatpush1.bf16.msra.mxu0 0
    %2666 = vmatprep.subr.bf16.mxu0 0
    %2667 = vmatpush1.bf16.msra.mxu0 0
    %2668 = vmatprep.subr.bf16.mxu0 0
    %2669 = vmatpush1.bf16.msra.mxu0 0
    %2670 = vmatprep.subr.bf16.mxu0 0
    %2671 = vmatpush1.bf16.msra.mxu0 0
    %2672 = vmatprep.subr.bf16.mxu0 0
    %2673 = vmatpush1.bf16.msra.mxu0 0
    %2674 = vmatprep.subr.bf16.mxu0 0
    %2675 = vmatpush1.bf16.msra.mxu0 0
    %2676 = vmatprep.subr.bf16.mxu0 0
    %2677 = vmatpush1.bf16.msra.mxu0 0
    %2678 = vmatprep.subr.bf16.mxu0 0
    %2679 = vmatpush1.bf16.msra.mxu0 0
    %2680 = vmatprep.subr.bf16.mxu0 0
    %2681 = vmatpush1.bf16.msra.mxu0 0
    %2682 = vmatprep.subr.bf16.mxu0 0
    %2683 = vmatpush1.bf16.msra.mxu0 0
    %2684 = vmatprep.subr.bf16.mxu0 0
    %2685 = vmatpush1.bf16.msra.mxu0 0
    %2686 = vmatprep.subr.bf16.mxu0 0
    %2687 = vmatpush1.bf16.msra.mxu0 0
    %2688 = vmatprep.subr.bf16.mxu0 0
    %2689 = vmatpush1.bf16.msra.mxu0 0
    %2690 = vmatprep.mubr.bf16.mxu0 0
    %2691 = vmatmul.mubr.bf16.gmra.mrb[0].mxu0 %v2656
    %v2692 = vpop.f32.mrb[0].mxu0
    %v2693 = vadd.f32 %v2638, %v2692
    %v2694 = vpop.f32.mrb[0].mxu0
    %v2695 = vpop.f32.mrb[0].mxu0
    %v2696 = vadd.f32 %v2641, %v2695
    %v2697 = vpop.f32.mrb[0].mxu0
    %2698 = vdwg.mxu0
    %s2699 = scalar_lea.vmem %s1, 336
    %v2700 = vld [vmem:[%s2699] sm:$0xf]
    %v2701 = vld [vmem:[%s2699 + $0x4] sm:$0xf]
    %v2704 = vunpack.c.l.b16 %v2700
    %v2705 = vunpack.c.l.b16 %v2701
    %v2706 = vpack.c.b16 %v2705, %v2704
    %2707 = vrot.lane.b32.xlu0 %v2592, 107
    %v2708 = vpop.permute.xlu0 %2707
    %2709 = vrot.lane.b32.xlu0 %v2593, 107
    %v2710 = vpop.permute.xlu0 %2709
    %v2714 = vsel %vm48, %v2706, 0
    %2716 = vmatprep.subr.bf16.mxu0 0
    %2717 = vmatpush1.bf16.msra.mxu0 %v2708
    %2718 = vmatprep.subr.bf16.mxu0 0
    %2719 = vmatpush1.bf16.msra.mxu0 %v2710
    %2720 = vmatprep.subr.bf16.mxu0 0
    %2721 = vmatpush1.bf16.msra.mxu0 0
    %2722 = vmatprep.subr.bf16.mxu0 0
    %2723 = vmatpush1.bf16.msra.mxu0 0
    %2724 = vmatprep.subr.bf16.mxu0 0
    %2725 = vmatpush1.bf16.msra.mxu0 0
    %2726 = vmatprep.subr.bf16.mxu0 0
    %2727 = vmatpush1.bf16.msra.mxu0 0
    %2728 = vmatprep.subr.bf16.mxu0 0
    %2729 = vmatpush1.bf16.msra.mxu0 0
    %2730 = vmatprep.subr.bf16.mxu0 0
    %2731 = vmatpush1.bf16.msra.mxu0 0
    %2732 = vmatprep.subr.bf16.mxu0 0
    %2733 = vmatpush1.bf16.msra.mxu0 0
    %2734 = vmatprep.subr.bf16.mxu0 0
    %2735 = vmatpush1.bf16.msra.mxu0 0
    %2736 = vmatprep.subr.bf16.mxu0 0
    %2737 = vmatpush1.bf16.msra.mxu0 0
    %2738 = vmatprep.subr.bf16.mxu0 0
    %2739 = vmatpush1.bf16.msra.mxu0 0
    %2740 = vmatprep.subr.bf16.mxu0 0
    %2741 = vmatpush1.bf16.msra.mxu0 0
    %2742 = vmatprep.subr.bf16.mxu0 0
    %2743 = vmatpush1.bf16.msra.mxu0 0
    %2744 = vmatprep.subr.bf16.mxu0 0
    %2745 = vmatpush1.bf16.msra.mxu0 0
    %2746 = vmatprep.subr.bf16.mxu0 0
    %2747 = vmatpush1.bf16.msra.mxu0 0
    %2748 = vmatprep.mubr.bf16.mxu0 0
    %2749 = vmatmul.mubr.bf16.gmra.mrb[0].mxu0 %v2714
    %v2750 = vpop.f32.mrb[0].mxu0
    %v2751 = vadd.f32 0.0, %v2750
    %v2752 = vpop.f32.mrb[0].mxu0
    %v2753 = vpop.f32.mrb[0].mxu0
    %v2754 = vadd.f32 0.0, %v2753
    %v2755 = vpop.f32.mrb[0].mxu0
    %2756 = vdwg.mxu0
    %v2757 = vadd.f32 %v2693, %v2751
    %v2758 = vadd.f32 %v2696, %v2754
    %s2759 = scalar_lea.vmem %s1, 344
    %v2760 = vld [vmem:[%s2759] sm:$0xf]
    %v2761 = vld [vmem:[%s2759 + $0x4] sm:$0xf]
    %v2764 = vunpack.c.l.b16 %v2760
    %v2765 = vunpack.c.l.b16 %v2761
    %v2766 = vpack.c.b16 %v2765, %v2764
    %2767 = vrot.lane.b32.xlu0 %v2592, 106
    %v2768 = vpop.permute.xlu0 %2767
    %2769 = vrot.lane.b32.xlu0 %v2593, 106
    %v2770 = vpop.permute.xlu0 %2769
    %v2774 = vsel %vm48, %v2766, 0
    %2776 = vmatprep.subr.bf16.mxu0 0
    %2777 = vmatpush1.bf16.msra.mxu0 %v2768
    %2778 = vmatprep.subr.bf16.mxu0 0
    %2779 = vmatpush1.bf16.msra.mxu0 %v2770
    %2780 = vmatprep.subr.bf16.mxu0 0
    %2781 = vmatpush1.bf16.msra.mxu0 0
    %2782 = vmatprep.subr.bf16.mxu0 0
    %2783 = vmatpush1.bf16.msra.mxu0 0
    %2784 = vmatprep.subr.bf16.mxu0 0
    %2785 = vmatpush1.bf16.msra.mxu0 0
    %2786 = vmatprep.subr.bf16.mxu0 0
    %2787 = vmatpush1.bf16.msra.mxu0 0
    %2788 = vmatprep.subr.bf16.mxu0 0
    %2789 = vmatpush1.bf16.msra.mxu0 0
    %2790 = vmatprep.subr.bf16.mxu0 0
    %2791 = vmatpush1.bf16.msra.mxu0 0
    %2792 = vmatprep.subr.bf16.mxu0 0
    %2793 = vmatpush1.bf16.msra.mxu0 0
    %2794 = vmatprep.subr.bf16.mxu0 0
    %2795 = vmatpush1.bf16.msra.mxu0 0
    %2796 = vmatprep.subr.bf16.mxu0 0
    %2797 = vmatpush1.bf16.msra.mxu0 0
    %2798 = vmatprep.subr.bf16.mxu0 0
    %2799 = vmatpush1.bf16.msra.mxu0 0
    %2800 = vmatprep.subr.bf16.mxu0 0
    %2801 = vmatpush1.bf16.msra.mxu0 0
    %2802 = vmatprep.subr.bf16.mxu0 0
    %2803 = vmatpush1.bf16.msra.mxu0 0
    %2804 = vmatprep.subr.bf16.mxu0 0
    %2805 = vmatpush1.bf16.msra.mxu0 0
    %2806 = vmatprep.subr.bf16.mxu0 0
    %2807 = vmatpush1.bf16.msra.mxu0 0
    %2808 = vmatprep.mubr.bf16.mxu0 0
    %2809 = vmatmul.mubr.bf16.gmra.mrb[0].mxu0 %v2774
    %v2810 = vpop.f32.mrb[0].mxu0
    %v2811 = vadd.f32 0.0, %v2810
    %v2812 = vpop.f32.mrb[0].mxu0
    %v2813 = vpop.f32.mrb[0].mxu0
    %v2814 = vadd.f32 0.0, %v2813
    %v2815 = vpop.f32.mrb[0].mxu0
    %2816 = vdwg.mxu0
    %v2817 = vadd.f32 %v2757, %v2811
    %v2818 = vadd.f32 %v2758, %v2814
    %s2819 = scalar_lea.vmem %s1, 352
    %v2820 = vld [vmem:[%s2819] sm:$0xf]
    %v2821 = vld [vmem:[%s2819 + $0x4] sm:$0xf]
    %v2824 = vunpack.c.l.b16 %v2820
    %v2825 = vunpack.c.l.b16 %v2821
    %v2826 = vpack.c.b16 %v2825, %v2824
    %2827 = vrot.lane.b32.xlu0 %v2592, 95
    %v2828 = vpop.permute.xlu0 %2827
    %2829 = vrot.lane.b32.xlu0 %v2593, 95
    %v2830 = vpop.permute.xlu0 %2829
    %v2834 = vsel %vm48, %v2826, 0
    %2836 = vmatprep.subr.bf16.mxu0 0
    %2837 = vmatpush1.bf16.msra.mxu0 %v2828
    %2838 = vmatprep.subr.bf16.mxu0 0
    %2839 = vmatpush1.bf16.msra.mxu0 %v2830
    %2840 = vmatprep.subr.bf16.mxu0 0
    %2841 = vmatpush1.bf16.msra.mxu0 0
    %2842 = vmatprep.subr.bf16.mxu0 0
    %2843 = vmatpush1.bf16.msra.mxu0 0
    %2844 = vmatprep.subr.bf16.mxu0 0
    %2845 = vmatpush1.bf16.msra.mxu0 0
    %2846 = vmatprep.subr.bf16.mxu0 0
    %2847 = vmatpush1.bf16.msra.mxu0 0
    %2848 = vmatprep.subr.bf16.mxu0 0
    %2849 = vmatpush1.bf16.msra.mxu0 0
    %2850 = vmatprep.subr.bf16.mxu0 0
    %2851 = vmatpush1.bf16.msra.mxu0 0
    %2852 = vmatprep.subr.bf16.mxu0 0
    %2853 = vmatpush1.bf16.msra.mxu0 0
    %2854 = vmatprep.subr.bf16.mxu0 0
    %2855 = vmatpush1.bf16.msra.mxu0 0
    %2856 = vmatprep.subr.bf16.mxu0 0
    %2857 = vmatpush1.bf16.msra.mxu0 0
    %2858 = vmatprep.subr.bf16.mxu0 0
    %2859 = vmatpush1.bf16.msra.mxu0 0
    %2860 = vmatprep.subr.bf16.mxu0 0
    %2861 = vmatpush1.bf16.msra.mxu0 0
    %2862 = vmatprep.subr.bf16.mxu0 0
    %2863 = vmatpush1.bf16.msra.mxu0 0
    %2864 = vmatprep.subr.bf16.mxu0 0
    %2865 = vmatpush1.bf16.msra.mxu0 0
    %2866 = vmatprep.subr.bf16.mxu0 0
    %2867 = vmatpush1.bf16.msra.mxu0 0
    %2868 = vmatprep.mubr.bf16.mxu0 0
    %2869 = vmatmul.mubr.bf16.gmra.mrb[0].mxu0 %v2834
    %v2870 = vpop.f32.mrb[0].mxu0
    %v2871 = vadd.f32 0.0, %v2870
    %v2872 = vpop.f32.mrb[0].mxu0
    %v2873 = vpop.f32.mrb[0].mxu0
    %v2874 = vadd.f32 0.0, %v2873
    %v2875 = vpop.f32.mrb[0].mxu0
    %2876 = vdwg.mxu0
    %v2877 = vadd.f32 %v2817, %v2871
    %v2878 = vadd.f32 %v2818, %v2874
    %s2879 = scalar_lea.vmem %s1, 360
    %v2880 = vld [vmem:[%s2879] sm:$0xf]
    %v2881 = vld [vmem:[%s2879 + $0x4] sm:$0xf]
    %v2884 = vunpack.c.l.b16 %v2880
    %v2885 = vunpack.c.l.b16 %v2881
    %v2886 = vpack.c.b16 %v2885, %v2884
    %2887 = vrot.lane.b32.xlu0 %v2592, 94
    %v2888 = vpop.permute.xlu0 %2887
    %2889 = vrot.lane.b32.xlu0 %v2593, 94
    %v2890 = vpop.permute.xlu0 %2889
    %v2894 = vsel %vm48, %v2886, 0
    %2896 = vmatprep.subr.bf16.mxu0 0
    %2897 = vmatpush1.bf16.msra.mxu0 %v2888
    %2898 = vmatprep.subr.bf16.mxu0 0
    %2899 = vmatpush1.bf16.msra.mxu0 %v2890
    %2900 = vmatprep.subr.bf16.mxu0 0
    %2901 = vmatpush1.bf16.msra.mxu0 0
    %2902 = vmatprep.subr.bf16.mxu0 0
    %2903 = vmatpush1.bf16.msra.mxu0 0
    %2904 = vmatprep.subr.bf16.mxu0 0
    %2905 = vmatpush1.bf16.msra.mxu0 0
    %2906 = vmatprep.subr.bf16.mxu0 0
    %2907 = vmatpush1.bf16.msra.mxu0 0
    %2908 = vmatprep.subr.bf16.mxu0 0
    %2909 = vmatpush1.bf16.msra.mxu0 0
    %2910 = vmatprep.subr.bf16.mxu0 0
    %2911 = vmatpush1.bf16.msra.mxu0 0
    %2912 = vmatprep.subr.bf16.mxu0 0
    %2913 = vmatpush1.bf16.msra.mxu0 0
    %2914 = vmatprep.subr.bf16.mxu0 0
    %2915 = vmatpush1.bf16.msra.mxu0 0
    %2916 = vmatprep.subr.bf16.mxu0 0
    %2917 = vmatpush1.bf16.msra.mxu0 0
    %2918 = vmatprep.subr.bf16.mxu0 0
    %2919 = vmatpush1.bf16.msra.mxu0 0
    %2920 = vmatprep.subr.bf16.mxu0 0
    %2921 = vmatpush1.bf16.msra.mxu0 0
    %2922 = vmatprep.subr.bf16.mxu0 0
    %2923 = vmatpush1.bf16.msra.mxu0 0
    %2924 = vmatprep.subr.bf16.mxu0 0
    %2925 = vmatpush1.bf16.msra.mxu0 0
    %2926 = vmatprep.subr.bf16.mxu0 0
    %2927 = vmatpush1.bf16.msra.mxu0 0
    %2928 = vmatprep.mubr.bf16.mxu0 0
    %2929 = vmatmul.mubr.bf16.gmra.mrb[0].mxu0 %v2894
    %v2930 = vpop.f32.mrb[0].mxu0
    %v2931 = vadd.f32 0.0, %v2930
    %v2932 = vpop.f32.mrb[0].mxu0
    %v2933 = vpop.f32.mrb[0].mxu0
    %v2934 = vadd.f32 0.0, %v2933
    %v2935 = vpop.f32.mrb[0].mxu0
    %2936 = vdwg.mxu0
    %v2937 = vadd.f32 %v2877, %v2931
    %v2938 = vadd.f32 %v2878, %v2934
    %s2939 = scalar_lea.vmem %s1, 368
    %v2940 = vld [vmem:[%s2939] sm:$0xf]
    %v2941 = vld [vmem:[%s2939 + $0x4] sm:$0xf]
    %v2944 = vunpack.c.l.b16 %v2940
    %v2945 = vunpack.c.l.b16 %v2941
    %v2946 = vpack.c.b16 %v2945, %v2944
    %2947 = vrot.lane.b32.xlu0 %v2592, 91
    %v2948 = vpop.permute.xlu0 %2947
    %2949 = vrot.lane.b32.xlu0 %v2593, 91
    %v2950 = vpop.permute.xlu0 %2949
    %v2954 = vsel %vm48, %v2946, 0
    %2956 = vmatprep.subr.bf16.mxu0 0
    %2957 = vmatpush1.bf16.msra.mxu0 %v2948
    %2958 = vmatprep.subr.bf16.mxu0 0
    %2959 = vmatpush1.bf16.msra.mxu0 %v2950
    %2960 = vmatprep.subr.bf16.mxu0 0
    %2961 = vmatpush1.bf16.msra.mxu0 0
    %2962 = vmatprep.subr.bf16.mxu0 0
    %2963 = vmatpush1.bf16.msra.mxu0 0
    %2964 = vmatprep.subr.bf16.mxu0 0
    %2965 = vmatpush1.bf16.msra.mxu0 0
    %2966 = vmatprep.subr.bf16.mxu0 0
    %2967 = vmatpush1.bf16.msra.mxu0 0
    %2968 = vmatprep.subr.bf16.mxu0 0
    %2969 = vmatpush1.bf16.msra.mxu0 0
    %2970 = vmatprep.subr.bf16.mxu0 0
    %2971 = vmatpush1.bf16.msra.mxu0 0
    %2972 = vmatprep.subr.bf16.mxu0 0
    %2973 = vmatpush1.bf16.msra.mxu0 0
    %2974 = vmatprep.subr.bf16.mxu0 0
    %2975 = vmatpush1.bf16.msra.mxu0 0
    %2976 = vmatprep.subr.bf16.mxu0 0
    %2977 = vmatpush1.bf16.msra.mxu0 0
    %2978 = vmatprep.subr.bf16.mxu0 0
    %2979 = vmatpush1.bf16.msra.mxu0 0
    %2980 = vmatprep.subr.bf16.mxu0 0
    %2981 = vmatpush1.bf16.msra.mxu0 0
    %2982 = vmatprep.subr.bf16.mxu0 0
    %2983 = vmatpush1.bf16.msra.mxu0 0
    %2984 = vmatprep.subr.bf16.mxu0 0
    %2985 = vmatpush1.bf16.msra.mxu0 0
    %2986 = vmatprep.subr.bf16.mxu0 0
    %2987 = vmatpush1.bf16.msra.mxu0 0
    %2988 = vmatprep.mubr.bf16.mxu0 0
    %2989 = vmatmul.mubr.bf16.gmra.mrb[0].mxu0 %v2954
    %v2990 = vpop.f32.mrb[0].mxu0
    %v2991 = vadd.f32 0.0, %v2990
    %v2992 = vpop.f32.mrb[0].mxu0
    %v2993 = vpop.f32.mrb[0].mxu0
    %v2994 = vadd.f32 0.0, %v2993
    %v2995 = vpop.f32.mrb[0].mxu0
    %2996 = vdwg.mxu0
    %v2997 = vadd.f32 %v2937, %v2991
    %v2998 = vadd.f32 %v2938, %v2994
    %s2999 = scalar_lea.vmem %s1, 376
    %v3000 = vld [vmem:[%s2999] sm:$0xf]
    %v3001 = vld [vmem:[%s2999 + $0x4] sm:$0xf]
    %v3004 = vunpack.c.l.b16 %v3000
    %v3005 = vunpack.c.l.b16 %v3001
    %v3006 = vpack.c.b16 %v3005, %v3004
    %3007 = vrot.lane.b32.xlu0 %v2592, 90
    %v3008 = vpop.permute.xlu0 %3007
    %3009 = vrot.lane.b32.xlu0 %v2593, 90
    %v3010 = vpop.permute.xlu0 %3009
    %v3014 = vsel %vm48, %v3006, 0
    %3016 = vmatprep.subr.bf16.mxu0 0
    %3017 = vmatpush1.bf16.msra.mxu0 %v3008
    %3018 = vmatprep.subr.bf16.mxu0 0
    %3019 = vmatpush1.bf16.msra.mxu0 %v3010
    %3020 = vmatprep.subr.bf16.mxu0 0
    %3021 = vmatpush1.bf16.msra.mxu0 0
    %3022 = vmatprep.subr.bf16.mxu0 0
    %3023 = vmatpush1.bf16.msra.mxu0 0
    %3024 = vmatprep.subr.bf16.mxu0 0
    %3025 = vmatpush1.bf16.msra.mxu0 0
    %3026 = vmatprep.subr.bf16.mxu0 0
    %3027 = vmatpush1.bf16.msra.mxu0 0
    %3028 = vmatprep.subr.bf16.mxu0 0
    %3029 = vmatpush1.bf16.msra.mxu0 0
    %3030 = vmatprep.subr.bf16.mxu0 0
    %3031 = vmatpush1.bf16.msra.mxu0 0
    %3032 = vmatprep.subr.bf16.mxu0 0
    %3033 = vmatpush1.bf16.msra.mxu0 0
    %3034 = vmatprep.subr.bf16.mxu0 0
    %3035 = vmatpush1.bf16.msra.mxu0 0
    %3036 = vmatprep.subr.bf16.mxu0 0
    %3037 = vmatpush1.bf16.msra.mxu0 0
    %3038 = vmatprep.subr.bf16.mxu0 0
    %3039 = vmatpush1.bf16.msra.mxu0 0
    %3040 = vmatprep.subr.bf16.mxu0 0
    %3041 = vmatpush1.bf16.msra.mxu0 0
    %3042 = vmatprep.subr.bf16.mxu0 0
    %3043 = vmatpush1.bf16.msra.mxu0 0
    %3044 = vmatprep.subr.bf16.mxu0 0
    %3045 = vmatpush1.bf16.msra.mxu0 0
    %3046 = vmatprep.subr.bf16.mxu0 0
    %3047 = vmatpush1.bf16.msra.mxu0 0
    %3048 = vmatprep.mubr.bf16.mxu0 0
    %3049 = vmatmul.mubr.bf16.gmra.mrb[0].mxu0 %v3014
    %v3050 = vpop.f32.mrb[0].mxu0
    %v3051 = vadd.f32 0.0, %v3050
    %v3052 = vpop.f32.mrb[0].mxu0
    %v3053 = vpop.f32.mrb[0].mxu0
    %v3054 = vadd.f32 0.0, %v3053
    %v3055 = vpop.f32.mrb[0].mxu0
    %3056 = vdwg.mxu0
    %v3057 = vadd.f32 %v2997, %v3051
    %v3058 = vadd.f32 %v2998, %v3054
    %v3059 = vadd.f32 %v3057, %v507
    %v3060 = vadd.f32 %v3058, %v512
    %vm3061 = vcmp.ge.f32.partialorder %v3059, 0.0
    %vm3062 = vcmp.ge.f32.partialorder %v3060, 0.0
    %v3063 = vmul.f32 %v3059, 0.2
    %v3064 = vmul.f32 %v3060, 0.2
    %v3065 = vsel %vm3061, %v3059, %v3063
    %v3066 = vsel %vm3062, %v3060, %v3064
    %v3067 = vpack.c.bf16 %v3066, %v3065
    %v3069 = vunpack.c.l.b16 %v3067
    %v3070 = vunpack.c.h.b16 %v3067
    %v3071 = vpack.c.b16 %v3069, %v3069
    %v3072 = vpack.c.b16 %v3070, %v3070
    %s3075 = scalar_lea.vmem [#allocation2], 40
    %3076 = vst.msk [vmem:[%s3075] sm:$0xf] %vm530, %v3071
    %3077 = vst.msk [vmem:[%s3075 + $0x4] sm:$0xf] %vm530, %v3072
    %s3078 = scalar_lea.vmem %s1, 384
    %v3079 = vld [vmem:[%s3078] sm:$0xf]
    %v3080 = vld [vmem:[%s3078 + $0x4] sm:$0xf]
    %v3081 = vld [vmem:[%s0] sm:$0xf]
    %v3082 = vld [vmem:[%s0 + $0x4] sm:$0xf]
    %v3083 = vld [vmem:[%s0 + $0x8] sm:$0xf]
    %v3084 = vld [vmem:[%s0 + $0xc] sm:$0xf]
    %s3085 = scalar_lea.vmem %s1, 392
    %v3086 = vld [vmem:[%s3085] sm:$0xf]
    %v3087 = vld [vmem:[%s3085 + $0x4] sm:$0xf]
    %v3090 = vunpack.c.l.b16 %v3086
    %v3091 = vunpack.c.l.b16 %v3087
    %v3092 = vpack.c.b16 %v3091, %v3090
    %v3097 = vunpack.c.l.b16 %v3081
    %v3098 = vunpack.c.l.b16 %v3082
    %v3099 = vunpack.c.l.b16 %v3083
    %v3100 = vunpack.c.l.b16 %v3084
    %v3101 = vpack.c.b16 %v3098, %v3097
    %v3102 = vpack.c.b16 %v3100, %v3099
    %3103 = vrot.lane.b32.xlu0 %v3101, 107
    %v3104 = vpop.permute.xlu0 %3103
    %3105 = vrot.lane.b32.xlu0 %v3102, 107
    %v3106 = vpop.permute.xlu0 %3105
    %v3110 = vsel %vm48, %v3092, 0
    %3112 = vmatprep.subr.bf16.mxu0 0
    %3113 = vmatpush1.bf16.msra.mxu0 %v3104
    %3114 = vmatprep.subr.bf16.mxu0 0
    %3115 = vmatpush1.bf16.msra.mxu0 %v3106
    %3116 = vmatprep.subr.bf16.mxu0 0
    %3117 = vmatpush1.bf16.msra.mxu0 0
    %3118 = vmatprep.subr.bf16.mxu0 0
    %3119 = vmatpush1.bf16.msra.mxu0 0
    %3120 = vmatprep.subr.bf16.mxu0 0
    %3121 = vmatpush1.bf16.msra.mxu0 0
    %3122 = vmatprep.subr.bf16.mxu0 0
    %3123 = vmatpush1.bf16.msra.mxu0 0
    %3124 = vmatprep.subr.bf16.mxu0 0
    %3125 = vmatpush1.bf16.msra.mxu0 0
    %3126 = vmatprep.subr.bf16.mxu0 0
    %3127 = vmatpush1.bf16.msra.mxu0 0
    %3128 = vmatprep.subr.bf16.mxu0 0
    %3129 = vmatpush1.bf16.msra.mxu0 0
    %3130 = vmatprep.subr.bf16.mxu0 0
    %3131 = vmatpush1.bf16.msra.mxu0 0
    %3132 = vmatprep.subr.bf16.mxu0 0
    %3133 = vmatpush1.bf16.msra.mxu0 0
    %3134 = vmatprep.subr.bf16.mxu0 0
    %3135 = vmatpush1.bf16.msra.mxu0 0
    %3136 = vmatprep.subr.bf16.mxu0 0
    %3137 = vmatpush1.bf16.msra.mxu0 0
    %3138 = vmatprep.subr.bf16.mxu0 0
    %3139 = vmatpush1.bf16.msra.mxu0 0
    %3140 = vmatprep.subr.bf16.mxu0 0
    %3141 = vmatpush1.bf16.msra.mxu0 0
    %3142 = vmatprep.subr.bf16.mxu0 0
    %3143 = vmatpush1.bf16.msra.mxu0 0
    %3144 = vmatprep.mubr.bf16.mxu0 0
    %3145 = vmatmul.mubr.bf16.gmra.mrb[0].mxu0 %v3110
    %v3146 = vpop.f32.mrb[0].mxu0
    %v3147 = vadd.f32 0.0, %v3146
    %v3148 = vpop.f32.mrb[0].mxu0
    %v3149 = vpop.f32.mrb[0].mxu0
    %v3150 = vadd.f32 0.0, %v3149
    %v3151 = vpop.f32.mrb[0].mxu0
    %3152 = vdwg.mxu0
    %v3155 = vunpack.c.l.b16 %v3079
    %v3156 = vunpack.c.l.b16 %v3080
    %v3157 = vpack.c.b16 %v3156, %v3155
    %3158 = vrot.lane.b32.xlu0 %v3101, 108
    %v3159 = vpop.permute.xlu0 %3158
    %3160 = vrot.lane.b32.xlu0 %v3102, 108
    %v3161 = vpop.permute.xlu0 %3160
    %v3165 = vsel %vm48, %v3157, 0
    %3167 = vmatprep.subr.bf16.mxu0 0
    %3168 = vmatpush1.bf16.msra.mxu0 %v3159
    %3169 = vmatprep.subr.bf16.mxu0 0
    %3170 = vmatpush1.bf16.msra.mxu0 %v3161
    %3171 = vmatprep.subr.bf16.mxu0 0
    %3172 = vmatpush1.bf16.msra.mxu0 0
    %3173 = vmatprep.subr.bf16.mxu0 0
    %3174 = vmatpush1.bf16.msra.mxu0 0
    %3175 = vmatprep.subr.bf16.mxu0 0
    %3176 = vmatpush1.bf16.msra.mxu0 0
    %3177 = vmatprep.subr.bf16.mxu0 0
    %3178 = vmatpush1.bf16.msra.mxu0 0
    %3179 = vmatprep.subr.bf16.mxu0 0
    %3180 = vmatpush1.bf16.msra.mxu0 0
    %3181 = vmatprep.subr.bf16.mxu0 0
    %3182 = vmatpush1.bf16.msra.mxu0 0
    %3183 = vmatprep.subr.bf16.mxu0 0
    %3184 = vmatpush1.bf16.msra.mxu0 0
    %3185 = vmatprep.subr.bf16.mxu0 0
    %3186 = vmatpush1.bf16.msra.mxu0 0
    %3187 = vmatprep.subr.bf16.mxu0 0
    %3188 = vmatpush1.bf16.msra.mxu0 0
    %3189 = vmatprep.subr.bf16.mxu0 0
    %3190 = vmatpush1.bf16.msra.mxu0 0
    %3191 = vmatprep.subr.bf16.mxu0 0
    %3192 = vmatpush1.bf16.msra.mxu0 0
    %3193 = vmatprep.subr.bf16.mxu0 0
    %3194 = vmatpush1.bf16.msra.mxu0 0
    %3195 = vmatprep.subr.bf16.mxu0 0
    %3196 = vmatpush1.bf16.msra.mxu0 0
    %3197 = vmatprep.subr.bf16.mxu0 0
    %3198 = vmatpush1.bf16.msra.mxu0 0
    %3199 = vmatprep.mubr.bf16.mxu0 0
    %3200 = vmatmul.mubr.bf16.gmra.mrb[0].mxu0 %v3165
    %v3201 = vpop.f32.mrb[0].mxu0
    %v3202 = vadd.f32 %v3147, %v3201
    %v3203 = vpop.f32.mrb[0].mxu0
    %v3204 = vpop.f32.mrb[0].mxu0
    %v3205 = vadd.f32 %v3150, %v3204
    %v3206 = vpop.f32.mrb[0].mxu0
    %3207 = vdwg.mxu0
    %s3208 = scalar_lea.vmem %s1, 400
    %v3209 = vld [vmem:[%s3208] sm:$0xf]
    %v3210 = vld [vmem:[%s3208 + $0x4] sm:$0xf]
    %v3213 = vunpack.c.l.b16 %v3209
    %v3214 = vunpack.c.l.b16 %v3210
    %v3215 = vpack.c.b16 %v3214, %v3213
    %3216 = vrot.lane.b32.xlu0 %v3101, 104
    %v3217 = vpop.permute.xlu0 %3216
    %3218 = vrot.lane.b32.xlu0 %v3102, 104
    %v3219 = vpop.permute.xlu0 %3218
    %v3223 = vsel %vm48, %v3215, 0
    %3225 = vmatprep.subr.bf16.mxu0 0
    %3226 = vmatpush1.bf16.msra.mxu0 %v3217
    %3227 = vmatprep.subr.bf16.mxu0 0
    %3228 = vmatpush1.bf16.msra.mxu0 %v3219
    %3229 = vmatprep.subr.bf16.mxu0 0
    %3230 = vmatpush1.bf16.msra.mxu0 0
    %3231 = vmatprep.subr.bf16.mxu0 0
    %3232 = vmatpush1.bf16.msra.mxu0 0
    %3233 = vmatprep.subr.bf16.mxu0 0
    %3234 = vmatpush1.bf16.msra.mxu0 0
    %3235 = vmatprep.subr.bf16.mxu0 0
    %3236 = vmatpush1.bf16.msra.mxu0 0
    %3237 = vmatprep.subr.bf16.mxu0 0
    %3238 = vmatpush1.bf16.msra.mxu0 0
    %3239 = vmatprep.subr.bf16.mxu0 0
    %3240 = vmatpush1.bf16.msra.mxu0 0
    %3241 = vmatprep.subr.bf16.mxu0 0
    %3242 = vmatpush1.bf16.msra.mxu0 0
    %3243 = vmatprep.subr.bf16.mxu0 0
    %3244 = vmatpush1.bf16.msra.mxu0 0
    %3245 = vmatprep.subr.bf16.mxu0 0
    %3246 = vmatpush1.bf16.msra.mxu0 0
    %3247 = vmatprep.subr.bf16.mxu0 0
    %3248 = vmatpush1.bf16.msra.mxu0 0
    %3249 = vmatprep.subr.bf16.mxu0 0
    %3250 = vmatpush1.bf16.msra.mxu0 0
    %3251 = vmatprep.subr.bf16.mxu0 0
    %3252 = vmatpush1.bf16.msra.mxu0 0
    %3253 = vmatprep.subr.bf16.mxu0 0
    %3254 = vmatpush1.bf16.msra.mxu0 0
    %3255 = vmatprep.subr.bf16.mxu0 0
    %3256 = vmatpush1.bf16.msra.mxu0 0
    %3257 = vmatprep.mubr.bf16.mxu0 0
    %3258 = vmatmul.mubr.bf16.gmra.mrb[0].mxu0 %v3223
    %v3259 = vpop.f32.mrb[0].mxu0
    %v3260 = vadd.f32 0.0, %v3259
    %v3261 = vpop.f32.mrb[0].mxu0
    %v3262 = vpop.f32.mrb[0].mxu0
    %v3263 = vadd.f32 0.0, %v3262
    %v3264 = vpop.f32.mrb[0].mxu0
    %3265 = vdwg.mxu0
    %v3266 = vadd.f32 %v3202, %v3260
    %v3267 = vadd.f32 %v3205, %v3263
    %s3268 = scalar_lea.vmem %s1, 408
    %v3269 = vld [vmem:[%s3268] sm:$0xf]
    %v3270 = vld [vmem:[%s3268 + $0x4] sm:$0xf]
    %v3273 = vunpack.c.l.b16 %v3269
    %v3274 = vunpack.c.l.b16 %v3270
    %v3275 = vpack.c.b16 %v3274, %v3273
    %3276 = vrot.lane.b32.xlu0 %v3101, 103
    %v3277 = vpop.permute.xlu0 %3276
    %3278 = vrot.lane.b32.xlu0 %v3102, 103
    %v3279 = vpop.permute.xlu0 %3278
    %v3283 = vsel %vm48, %v3275, 0
    %3285 = vmatprep.subr.bf16.mxu0 0
    %3286 = vmatpush1.bf16.msra.mxu0 %v3277
    %3287 = vmatprep.subr.bf16.mxu0 0
    %3288 = vmatpush1.bf16.msra.mxu0 %v3279
    %3289 = vmatprep.subr.bf16.mxu0 0
    %3290 = vmatpush1.bf16.msra.mxu0 0
    %3291 = vmatprep.subr.bf16.mxu0 0
    %3292 = vmatpush1.bf16.msra.mxu0 0
    %3293 = vmatprep.subr.bf16.mxu0 0
    %3294 = vmatpush1.bf16.msra.mxu0 0
    %3295 = vmatprep.subr.bf16.mxu0 0
    %3296 = vmatpush1.bf16.msra.mxu0 0
    %3297 = vmatprep.subr.bf16.mxu0 0
    %3298 = vmatpush1.bf16.msra.mxu0 0
    %3299 = vmatprep.subr.bf16.mxu0 0
    %3300 = vmatpush1.bf16.msra.mxu0 0
    %3301 = vmatprep.subr.bf16.mxu0 0
    %3302 = vmatpush1.bf16.msra.mxu0 0
    %3303 = vmatprep.subr.bf16.mxu0 0
    %3304 = vmatpush1.bf16.msra.mxu0 0
    %3305 = vmatprep.subr.bf16.mxu0 0
    %3306 = vmatpush1.bf16.msra.mxu0 0
    %3307 = vmatprep.subr.bf16.mxu0 0
    %3308 = vmatpush1.bf16.msra.mxu0 0
    %3309 = vmatprep.subr.bf16.mxu0 0
    %3310 = vmatpush1.bf16.msra.mxu0 0
    %3311 = vmatprep.subr.bf16.mxu0 0
    %3312 = vmatpush1.bf16.msra.mxu0 0
    %3313 = vmatprep.subr.bf16.mxu0 0
    %3314 = vmatpush1.bf16.msra.mxu0 0
    %3315 = vmatprep.subr.bf16.mxu0 0
    %3316 = vmatpush1.bf16.msra.mxu0 0
    %3317 = vmatprep.mubr.bf16.mxu0 0
    %3318 = vmatmul.mubr.bf16.gmra.mrb[0].mxu0 %v3283
    %v3319 = vpop.f32.mrb[0].mxu0
    %v3320 = vadd.f32 0.0, %v3319
    %v3321 = vpop.f32.mrb[0].mxu0
    %v3322 = vpop.f32.mrb[0].mxu0
    %v3323 = vadd.f32 0.0, %v3322
    %v3324 = vpop.f32.mrb[0].mxu0
    %3325 = vdwg.mxu0
    %v3326 = vadd.f32 %v3266, %v3320
    %v3327 = vadd.f32 %v3267, %v3323
    %s3328 = scalar_lea.vmem %s1, 416
    %v3329 = vld [vmem:[%s3328] sm:$0xf]
    %v3330 = vld [vmem:[%s3328 + $0x4] sm:$0xf]
    %v3333 = vunpack.c.l.b16 %v3329
    %v3334 = vunpack.c.l.b16 %v3330
    %v3335 = vpack.c.b16 %v3334, %v3333
    %3336 = vrot.lane.b32.xlu0 %v3101, 92
    %v3337 = vpop.permute.xlu0 %3336
    %3338 = vrot.lane.b32.xlu0 %v3102, 92
    %v3339 = vpop.permute.xlu0 %3338
    %v3343 = vsel %vm48, %v3335, 0
    %3345 = vmatprep.subr.bf16.mxu0 0
    %3346 = vmatpush1.bf16.msra.mxu0 %v3337
    %3347 = vmatprep.subr.bf16.mxu0 0
    %3348 = vmatpush1.bf16.msra.mxu0 %v3339
    %3349 = vmatprep.subr.bf16.mxu0 0
    %3350 = vmatpush1.bf16.msra.mxu0 0
    %3351 = vmatprep.subr.bf16.mxu0 0
    %3352 = vmatpush1.bf16.msra.mxu0 0
    %3353 = vmatprep.subr.bf16.mxu0 0
    %3354 = vmatpush1.bf16.msra.mxu0 0
    %3355 = vmatprep.subr.bf16.mxu0 0
    %3356 = vmatpush1.bf16.msra.mxu0 0
    %3357 = vmatprep.subr.bf16.mxu0 0
    %3358 = vmatpush1.bf16.msra.mxu0 0
    %3359 = vmatprep.subr.bf16.mxu0 0
    %3360 = vmatpush1.bf16.msra.mxu0 0
    %3361 = vmatprep.subr.bf16.mxu0 0
    %3362 = vmatpush1.bf16.msra.mxu0 0
    %3363 = vmatprep.subr.bf16.mxu0 0
    %3364 = vmatpush1.bf16.msra.mxu0 0
    %3365 = vmatprep.subr.bf16.mxu0 0
    %3366 = vmatpush1.bf16.msra.mxu0 0
    %3367 = vmatprep.subr.bf16.mxu0 0
    %3368 = vmatpush1.bf16.msra.mxu0 0
    %3369 = vmatprep.subr.bf16.mxu0 0
    %3370 = vmatpush1.bf16.msra.mxu0 0
    %3371 = vmatprep.subr.bf16.mxu0 0
    %3372 = vmatpush1.bf16.msra.mxu0 0
    %3373 = vmatprep.subr.bf16.mxu0 0
    %3374 = vmatpush1.bf16.msra.mxu0 0
    %3375 = vmatprep.subr.bf16.mxu0 0
    %3376 = vmatpush1.bf16.msra.mxu0 0
    %3377 = vmatprep.mubr.bf16.mxu0 0
    %3378 = vmatmul.mubr.bf16.gmra.mrb[0].mxu0 %v3343
    %v3379 = vpop.f32.mrb[0].mxu0
    %v3380 = vadd.f32 0.0, %v3379
    %v3381 = vpop.f32.mrb[0].mxu0
    %v3382 = vpop.f32.mrb[0].mxu0
    %v3383 = vadd.f32 0.0, %v3382
    %v3384 = vpop.f32.mrb[0].mxu0
    %3385 = vdwg.mxu0
    %v3386 = vadd.f32 %v3326, %v3380
    %v3387 = vadd.f32 %v3327, %v3383
    %s3388 = scalar_lea.vmem %s1, 424
    %v3389 = vld [vmem:[%s3388] sm:$0xf]
    %v3390 = vld [vmem:[%s3388 + $0x4] sm:$0xf]
    %v3393 = vunpack.c.l.b16 %v3389
    %v3394 = vunpack.c.l.b16 %v3390
    %v3395 = vpack.c.b16 %v3394, %v3393
    %3396 = vrot.lane.b32.xlu0 %v3101, 91
    %v3397 = vpop.permute.xlu0 %3396
    %3398 = vrot.lane.b32.xlu0 %v3102, 91
    %v3399 = vpop.permute.xlu0 %3398
    %v3403 = vsel %vm48, %v3395, 0
    %3405 = vmatprep.subr.bf16.mxu0 0
    %3406 = vmatpush1.bf16.msra.mxu0 %v3397
    %3407 = vmatprep.subr.bf16.mxu0 0
    %3408 = vmatpush1.bf16.msra.mxu0 %v3399
    %3409 = vmatprep.subr.bf16.mxu0 0
    %3410 = vmatpush1.bf16.msra.mxu0 0
    %3411 = vmatprep.subr.bf16.mxu0 0
    %3412 = vmatpush1.bf16.msra.mxu0 0
    %3413 = vmatprep.subr.bf16.mxu0 0
    %3414 = vmatpush1.bf16.msra.mxu0 0
    %3415 = vmatprep.subr.bf16.mxu0 0
    %3416 = vmatpush1.bf16.msra.mxu0 0
    %3417 = vmatprep.subr.bf16.mxu0 0
    %3418 = vmatpush1.bf16.msra.mxu0 0
    %3419 = vmatprep.subr.bf16.mxu0 0
    %3420 = vmatpush1.bf16.msra.mxu0 0
    %3421 = vmatprep.subr.bf16.mxu0 0
    %3422 = vmatpush1.bf16.msra.mxu0 0
    %3423 = vmatprep.subr.bf16.mxu0 0
    %3424 = vmatpush1.bf16.msra.mxu0 0
    %3425 = vmatprep.subr.bf16.mxu0 0
    %3426 = vmatpush1.bf16.msra.mxu0 0
    %3427 = vmatprep.subr.bf16.mxu0 0
    %3428 = vmatpush1.bf16.msra.mxu0 0
    %3429 = vmatprep.subr.bf16.mxu0 0
    %3430 = vmatpush1.bf16.msra.mxu0 0
    %3431 = vmatprep.subr.bf16.mxu0 0
    %3432 = vmatpush1.bf16.msra.mxu0 0
    %3433 = vmatprep.subr.bf16.mxu0 0
    %3434 = vmatpush1.bf16.msra.mxu0 0
    %3435 = vmatprep.subr.bf16.mxu0 0
    %3436 = vmatpush1.bf16.msra.mxu0 0
    %3437 = vmatprep.mubr.bf16.mxu0 0
    %3438 = vmatmul.mubr.bf16.gmra.mrb[0].mxu0 %v3403
    %v3439 = vpop.f32.mrb[0].mxu0
    %v3440 = vadd.f32 0.0, %v3439
    %v3441 = vpop.f32.mrb[0].mxu0
    %v3442 = vpop.f32.mrb[0].mxu0
    %v3443 = vadd.f32 0.0, %v3442
    %v3444 = vpop.f32.mrb[0].mxu0
    %3445 = vdwg.mxu0
    %v3446 = vadd.f32 %v3386, %v3440
    %v3447 = vadd.f32 %v3387, %v3443
    %s3448 = scalar_lea.vmem %s1, 432
    %v3449 = vld [vmem:[%s3448] sm:$0xf]
    %v3450 = vld [vmem:[%s3448 + $0x4] sm:$0xf]
    %v3453 = vunpack.c.l.b16 %v3449
    %v3454 = vunpack.c.l.b16 %v3450
    %v3455 = vpack.c.b16 %v3454, %v3453
    %3456 = vrot.lane.b32.xlu0 %v3101, 88
    %v3457 = vpop.permute.xlu0 %3456
    %3458 = vrot.lane.b32.xlu0 %v3102, 88
    %v3459 = vpop.permute.xlu0 %3458
    %v3463 = vsel %vm48, %v3455, 0
    %3465 = vmatprep.subr.bf16.mxu0 0
    %3466 = vmatpush1.bf16.msra.mxu0 %v3457
    %3467 = vmatprep.subr.bf16.mxu0 0
    %3468 = vmatpush1.bf16.msra.mxu0 %v3459
    %3469 = vmatprep.subr.bf16.mxu0 0
    %3470 = vmatpush1.bf16.msra.mxu0 0
    %3471 = vmatprep.subr.bf16.mxu0 0
    %3472 = vmatpush1.bf16.msra.mxu0 0
    %3473 = vmatprep.subr.bf16.mxu0 0
    %3474 = vmatpush1.bf16.msra.mxu0 0
    %3475 = vmatprep.subr.bf16.mxu0 0
    %3476 = vmatpush1.bf16.msra.mxu0 0
    %3477 = vmatprep.subr.bf16.mxu0 0
    %3478 = vmatpush1.bf16.msra.mxu0 0
    %3479 = vmatprep.subr.bf16.mxu0 0
    %3480 = vmatpush1.bf16.msra.mxu0 0
    %3481 = vmatprep.subr.bf16.mxu0 0
    %3482 = vmatpush1.bf16.msra.mxu0 0
    %3483 = vmatprep.subr.bf16.mxu0 0
    %3484 = vmatpush1.bf16.msra.mxu0 0
    %3485 = vmatprep.subr.bf16.mxu0 0
    %3486 = vmatpush1.bf16.msra.mxu0 0
    %3487 = vmatprep.subr.bf16.mxu0 0
    %3488 = vmatpush1.bf16.msra.mxu0 0
    %3489 = vmatprep.subr.bf16.mxu0 0
    %3490 = vmatpush1.bf16.msra.mxu0 0
    %3491 = vmatprep.subr.bf16.mxu0 0
    %3492 = vmatpush1.bf16.msra.mxu0 0
    %3493 = vmatprep.subr.bf16.mxu0 0
    %3494 = vmatpush1.bf16.msra.mxu0 0
    %3495 = vmatprep.subr.bf16.mxu0 0
    %3496 = vmatpush1.bf16.msra.mxu0 0
    %3497 = vmatprep.mubr.bf16.mxu0 0
    %3498 = vmatmul.mubr.bf16.gmra.mrb[0].mxu0 %v3463
    %v3499 = vpop.f32.mrb[0].mxu0
    %v3500 = vadd.f32 0.0, %v3499
    %v3501 = vpop.f32.mrb[0].mxu0
    %v3502 = vpop.f32.mrb[0].mxu0
    %v3503 = vadd.f32 0.0, %v3502
    %v3504 = vpop.f32.mrb[0].mxu0
    %3505 = vdwg.mxu0
    %v3506 = vadd.f32 %v3446, %v3500
    %v3507 = vadd.f32 %v3447, %v3503
    %s3508 = scalar_lea.vmem %s1, 440
    %v3509 = vld [vmem:[%s3508] sm:$0xf]
    %v3510 = vld [vmem:[%s3508 + $0x4] sm:$0xf]
    %v3513 = vunpack.c.l.b16 %v3509
    %v3514 = vunpack.c.l.b16 %v3510
    %v3515 = vpack.c.b16 %v3514, %v3513
    %3516 = vrot.lane.b32.xlu0 %v3101, 87
    %v3517 = vpop.permute.xlu0 %3516
    %3518 = vrot.lane.b32.xlu0 %v3102, 87
    %v3519 = vpop.permute.xlu0 %3518
    %v3523 = vsel %vm48, %v3515, 0
    %3525 = vmatprep.subr.bf16.mxu0 0
    %3526 = vmatpush1.bf16.msra.mxu0 %v3517
    %3527 = vmatprep.subr.bf16.mxu0 0
    %3528 = vmatpush1.bf16.msra.mxu0 %v3519
    %3529 = vmatprep.subr.bf16.mxu0 0
    %3530 = vmatpush1.bf16.msra.mxu0 0
    %3531 = vmatprep.subr.bf16.mxu0 0
    %3532 = vmatpush1.bf16.msra.mxu0 0
    %3533 = vmatprep.subr.bf16.mxu0 0
    %3534 = vmatpush1.bf16.msra.mxu0 0
    %3535 = vmatprep.subr.bf16.mxu0 0
    %3536 = vmatpush1.bf16.msra.mxu0 0
    %3537 = vmatprep.subr.bf16.mxu0 0
    %3538 = vmatpush1.bf16.msra.mxu0 0
    %3539 = vmatprep.subr.bf16.mxu0 0
    %3540 = vmatpush1.bf16.msra.mxu0 0
    %3541 = vmatprep.subr.bf16.mxu0 0
    %3542 = vmatpush1.bf16.msra.mxu0 0
    %3543 = vmatprep.subr.bf16.mxu0 0
    %3544 = vmatpush1.bf16.msra.mxu0 0
    %3545 = vmatprep.subr.bf16.mxu0 0
    %3546 = vmatpush1.bf16.msra.mxu0 0
    %3547 = vmatprep.subr.bf16.mxu0 0
    %3548 = vmatpush1.bf16.msra.mxu0 0
    %3549 = vmatprep.subr.bf16.mxu0 0
    %3550 = vmatpush1.bf16.msra.mxu0 0
    %3551 = vmatprep.subr.bf16.mxu0 0
    %3552 = vmatpush1.bf16.msra.mxu0 0
    %3553 = vmatprep.subr.bf16.mxu0 0
    %3554 = vmatpush1.bf16.msra.mxu0 0
    %3555 = vmatprep.subr.bf16.mxu0 0
    %3556 = vmatpush1.bf16.msra.mxu0 0
    %3557 = vmatprep.mubr.bf16.mxu0 0
    %3558 = vmatmul.mubr.bf16.gmra.mrb[0].mxu0 %v3523
    %v3559 = vpop.f32.mrb[0].mxu0
    %v3560 = vadd.f32 0.0, %v3559
    %v3561 = vpop.f32.mrb[0].mxu0
    %v3562 = vpop.f32.mrb[0].mxu0
    %v3563 = vadd.f32 0.0, %v3562
    %v3564 = vpop.f32.mrb[0].mxu0
    %3565 = vdwg.mxu0
    %v3566 = vadd.f32 %v3506, %v3560
    %v3567 = vadd.f32 %v3507, %v3563
    %v3568 = vadd.f32 %v3566, %v507
    %v3569 = vadd.f32 %v3567, %v512
    %vm3570 = vcmp.ge.f32.partialorder %v3568, 0.0
    %vm3571 = vcmp.ge.f32.partialorder %v3569, 0.0
    %v3572 = vmul.f32 %v3568, 0.2
    %v3573 = vmul.f32 %v3569, 0.2
    %v3574 = vsel %vm3570, %v3568, %v3572
    %v3575 = vsel %vm3571, %v3569, %v3573
    %v3576 = vpack.c.bf16 %v3575, %v3574
    %v3578 = vunpack.c.l.b16 %v3576
    %v3579 = vunpack.c.h.b16 %v3576
    %v3580 = vpack.c.b16 %v3578, %v3578
    %v3581 = vpack.c.b16 %v3579, %v3579
    %s3584 = scalar_lea.vmem [#allocation2], 48
    %3585 = vst.msk [vmem:[%s3584] sm:$0xf] %vm530, %v3580
    %3586 = vst.msk [vmem:[%s3584 + $0x4] sm:$0xf] %vm530, %v3581
    %s3587 = scalar_lea.vmem %s1, 448
    %v3588 = vld [vmem:[%s3587] sm:$0xf]
    %v3589 = vld [vmem:[%s3587 + $0x4] sm:$0xf]
    %v3590 = vld [vmem:[%s0] sm:$0xf]
    %v3591 = vld [vmem:[%s0 + $0x4] sm:$0xf]
    %v3592 = vld [vmem:[%s0 + $0x8] sm:$0xf]
    %v3593 = vld [vmem:[%s0 + $0xc] sm:$0xf]
    %s3594 = scalar_lea.vmem %s1, 456
    %v3595 = vld [vmem:[%s3594] sm:$0xf]
    %v3596 = vld [vmem:[%s3594 + $0x4] sm:$0xf]
    %v3599 = vunpack.c.l.b16 %v3595
    %v3600 = vunpack.c.l.b16 %v3596
    %v3601 = vpack.c.b16 %v3600, %v3599
    %v3606 = vunpack.c.l.b16 %v3590
    %v3607 = vunpack.c.l.b16 %v3591
    %v3608 = vunpack.c.l.b16 %v3592
    %v3609 = vunpack.c.l.b16 %v3593
    %v3610 = vpack.c.b16 %v3607, %v3606
    %v3611 = vpack.c.b16 %v3609, %v3608
    %3612 = vrot.lane.b32.xlu0 %v3610, 106
    %v3613 = vpop.permute.xlu0 %3612
    %3614 = vrot.lane.b32.xlu0 %v3611, 106
    %v3615 = vpop.permute.xlu0 %3614
    %v3619 = vsel %vm48, %v3601, 0
    %3621 = vmatprep.subr.bf16.mxu0 0
    %3622 = vmatpush1.bf16.msra.mxu0 %v3613
    %3623 = vmatprep.subr.bf16.mxu0 0
    %3624 = vmatpush1.bf16.msra.mxu0 %v3615
    %3625 = vmatprep.subr.bf16.mxu0 0
    %3626 = vmatpush1.bf16.msra.mxu0 0
    %3627 = vmatprep.subr.bf16.mxu0 0
    %3628 = vmatpush1.bf16.msra.mxu0 0
    %3629 = vmatprep.subr.bf16.mxu0 0
    %3630 = vmatpush1.bf16.msra.mxu0 0
    %3631 = vmatprep.subr.bf16.mxu0 0
    %3632 = vmatpush1.bf16.msra.mxu0 0
    %3633 = vmatprep.subr.bf16.mxu0 0
    %3634 = vmatpush1.bf16.msra.mxu0 0
    %3635 = vmatprep.subr.bf16.mxu0 0
    %3636 = vmatpush1.bf16.msra.mxu0 0
    %3637 = vmatprep.subr.bf16.mxu0 0
    %3638 = vmatpush1.bf16.msra.mxu0 0
    %3639 = vmatprep.subr.bf16.mxu0 0
    %3640 = vmatpush1.bf16.msra.mxu0 0
    %3641 = vmatprep.subr.bf16.mxu0 0
    %3642 = vmatpush1.bf16.msra.mxu0 0
    %3643 = vmatprep.subr.bf16.mxu0 0
    %3644 = vmatpush1.bf16.msra.mxu0 0
    %3645 = vmatprep.subr.bf16.mxu0 0
    %3646 = vmatpush1.bf16.msra.mxu0 0
    %3647 = vmatprep.subr.bf16.mxu0 0
    %3648 = vmatpush1.bf16.msra.mxu0 0
    %3649 = vmatprep.subr.bf16.mxu0 0
    %3650 = vmatpush1.bf16.msra.mxu0 0
    %3651 = vmatprep.subr.bf16.mxu0 0
    %3652 = vmatpush1.bf16.msra.mxu0 0
    %3653 = vmatprep.mubr.bf16.mxu0 0
    %3654 = vmatmul.mubr.bf16.gmra.mrb[0].mxu0 %v3619
    %v3655 = vpop.f32.mrb[0].mxu0
    %v3656 = vadd.f32 0.0, %v3655
    %v3657 = vpop.f32.mrb[0].mxu0
    %v3658 = vpop.f32.mrb[0].mxu0
    %v3659 = vadd.f32 0.0, %v3658
    %v3660 = vpop.f32.mrb[0].mxu0
    %3661 = vdwg.mxu0
    %v3664 = vunpack.c.l.b16 %v3588
    %v3665 = vunpack.c.l.b16 %v3589
    %v3666 = vpack.c.b16 %v3665, %v3664
    %3667 = vrot.lane.b32.xlu0 %v3610, 107
    %v3668 = vpop.permute.xlu0 %3667
    %3669 = vrot.lane.b32.xlu0 %v3611, 107
    %v3670 = vpop.permute.xlu0 %3669
    %v3674 = vsel %vm48, %v3666, 0
    %3676 = vmatprep.subr.bf16.mxu0 0
    %3677 = vmatpush1.bf16.msra.mxu0 %v3668
    %3678 = vmatprep.subr.bf16.mxu0 0
    %3679 = vmatpush1.bf16.msra.mxu0 %v3670
    %3680 = vmatprep.subr.bf16.mxu0 0
    %3681 = vmatpush1.bf16.msra.mxu0 0
    %3682 = vmatprep.subr.bf16.mxu0 0
    %3683 = vmatpush1.bf16.msra.mxu0 0
    %3684 = vmatprep.subr.bf16.mxu0 0
    %3685 = vmatpush1.bf16.msra.mxu0 0
    %3686 = vmatprep.subr.bf16.mxu0 0
    %3687 = vmatpush1.bf16.msra.mxu0 0
    %3688 = vmatprep.subr.bf16.mxu0 0
    %3689 = vmatpush1.bf16.msra.mxu0 0
    %3690 = vmatprep.subr.bf16.mxu0 0
    %3691 = vmatpush1.bf16.msra.mxu0 0
    %3692 = vmatprep.subr.bf16.mxu0 0
    %3693 = vmatpush1.bf16.msra.mxu0 0
    %3694 = vmatprep.subr.bf16.mxu0 0
    %3695 = vmatpush1.bf16.msra.mxu0 0
    %3696 = vmatprep.subr.bf16.mxu0 0
    %3697 = vmatpush1.bf16.msra.mxu0 0
    %3698 = vmatprep.subr.bf16.mxu0 0
    %3699 = vmatpush1.bf16.msra.mxu0 0
    %3700 = vmatprep.subr.bf16.mxu0 0
    %3701 = vmatpush1.bf16.msra.mxu0 0
    %3702 = vmatprep.subr.bf16.mxu0 0
    %3703 = vmatpush1.bf16.msra.mxu0 0
    %3704 = vmatprep.subr.bf16.mxu0 0
    %3705 = vmatpush1.bf16.msra.mxu0 0
    %3706 = vmatprep.subr.bf16.mxu0 0
    %3707 = vmatpush1.bf16.msra.mxu0 0
    %3708 = vmatprep.mubr.bf16.mxu0 0
    %3709 = vmatmul.mubr.bf16.gmra.mrb[0].mxu0 %v3674
    %v3710 = vpop.f32.mrb[0].mxu0
    %v3711 = vadd.f32 %v3656, %v3710
    %v3712 = vpop.f32.mrb[0].mxu0
    %v3713 = vpop.f32.mrb[0].mxu0
    %v3714 = vadd.f32 %v3659, %v3713
    %v3715 = vpop.f32.mrb[0].mxu0
    %3716 = vdwg.mxu0
    %s3717 = scalar_lea.vmem %s1, 464
    %v3718 = vld [vmem:[%s3717] sm:$0xf]
    %v3719 = vld [vmem:[%s3717 + $0x4] sm:$0xf]
    %v3722 = vunpack.c.l.b16 %v3718
    %v3723 = vunpack.c.l.b16 %v3719
    %v3724 = vpack.c.b16 %v3723, %v3722
    %3725 = vrot.lane.b32.xlu0 %v3610, 103
    %v3726 = vpop.permute.xlu0 %3725
    %3727 = vrot.lane.b32.xlu0 %v3611, 103
    %v3728 = vpop.permute.xlu0 %3727
    %v3732 = vsel %vm48, %v3724, 0
    %3734 = vmatprep.subr.bf16.mxu0 0
    %3735 = vmatpush1.bf16.msra.mxu0 %v3726
    %3736 = vmatprep.subr.bf16.mxu0 0
    %3737 = vmatpush1.bf16.msra.mxu0 %v3728
    %3738 = vmatprep.subr.bf16.mxu0 0
    %3739 = vmatpush1.bf16.msra.mxu0 0
    %3740 = vmatprep.subr.bf16.mxu0 0
    %3741 = vmatpush1.bf16.msra.mxu0 0
    %3742 = vmatprep.subr.bf16.mxu0 0
    %3743 = vmatpush1.bf16.msra.mxu0 0
    %3744 = vmatprep.subr.bf16.mxu0 0
    %3745 = vmatpush1.bf16.msra.mxu0 0
    %3746 = vmatprep.subr.bf16.mxu0 0
    %3747 = vmatpush1.bf16.msra.mxu0 0
    %3748 = vmatprep.subr.bf16.mxu0 0
    %3749 = vmatpush1.bf16.msra.mxu0 0
    %3750 = vmatprep.subr.bf16.mxu0 0
    %3751 = vmatpush1.bf16.msra.mxu0 0
    %3752 = vmatprep.subr.bf16.mxu0 0
    %3753 = vmatpush1.bf16.msra.mxu0 0
    %3754 = vmatprep.subr.bf16.mxu0 0
    %3755 = vmatpush1.bf16.msra.mxu0 0
    %3756 = vmatprep.subr.bf16.mxu0 0
    %3757 = vmatpush1.bf16.msra.mxu0 0
    %3758 = vmatprep.subr.bf16.mxu0 0
    %3759 = vmatpush1.bf16.msra.mxu0 0
    %3760 = vmatprep.subr.bf16.mxu0 0
    %3761 = vmatpush1.bf16.msra.mxu0 0
    %3762 = vmatprep.subr.bf16.mxu0 0
    %3763 = vmatpush1.bf16.msra.mxu0 0
    %3764 = vmatprep.subr.bf16.mxu0 0
    %3765 = vmatpush1.bf16.msra.mxu0 0
    %3766 = vmatprep.mubr.bf16.mxu0 0
    %3767 = vmatmul.mubr.bf16.gmra.mrb[0].mxu0 %v3732
    %v3768 = vpop.f32.mrb[0].mxu0
    %v3769 = vadd.f32 0.0, %v3768
    %v3770 = vpop.f32.mrb[0].mxu0
    %v3771 = vpop.f32.mrb[0].mxu0
    %v3772 = vadd.f32 0.0, %v3771
    %v3773 = vpop.f32.mrb[0].mxu0
    %3774 = vdwg.mxu0
    %v3775 = vadd.f32 %v3711, %v3769
    %v3776 = vadd.f32 %v3714, %v3772
    %s3777 = scalar_lea.vmem %s1, 472
    %v3778 = vld [vmem:[%s3777] sm:$0xf]
    %v3779 = vld [vmem:[%s3777 + $0x4] sm:$0xf]
    %v3782 = vunpack.c.l.b16 %v3778
    %v3783 = vunpack.c.l.b16 %v3779
    %v3784 = vpack.c.b16 %v3783, %v3782
    %3785 = vrot.lane.b32.xlu0 %v3610, 102
    %v3786 = vpop.permute.xlu0 %3785
    %3787 = vrot.lane.b32.xlu0 %v3611, 102
    %v3788 = vpop.permute.xlu0 %3787
    %v3792 = vsel %vm48, %v3784, 0
    %3794 = vmatprep.subr.bf16.mxu0 0
    %3795 = vmatpush1.bf16.msra.mxu0 %v3786
    %3796 = vmatprep.subr.bf16.mxu0 0
    %3797 = vmatpush1.bf16.msra.mxu0 %v3788
    %3798 = vmatprep.subr.bf16.mxu0 0
    %3799 = vmatpush1.bf16.msra.mxu0 0
    %3800 = vmatprep.subr.bf16.mxu0 0
    %3801 = vmatpush1.bf16.msra.mxu0 0
    %3802 = vmatprep.subr.bf16.mxu0 0
    %3803 = vmatpush1.bf16.msra.mxu0 0
    %3804 = vmatprep.subr.bf16.mxu0 0
    %3805 = vmatpush1.bf16.msra.mxu0 0
    %3806 = vmatprep.subr.bf16.mxu0 0
    %3807 = vmatpush1.bf16.msra.mxu0 0
    %3808 = vmatprep.subr.bf16.mxu0 0
    %3809 = vmatpush1.bf16.msra.mxu0 0
    %3810 = vmatprep.subr.bf16.mxu0 0
    %3811 = vmatpush1.bf16.msra.mxu0 0
    %3812 = vmatprep.subr.bf16.mxu0 0
    %3813 = vmatpush1.bf16.msra.mxu0 0
    %3814 = vmatprep.subr.bf16.mxu0 0
    %3815 = vmatpush1.bf16.msra.mxu0 0
    %3816 = vmatprep.subr.bf16.mxu0 0
    %3817 = vmatpush1.bf16.msra.mxu0 0
    %3818 = vmatprep.subr.bf16.mxu0 0
    %3819 = vmatpush1.bf16.msra.mxu0 0
    %3820 = vmatprep.subr.bf16.mxu0 0
    %3821 = vmatpush1.bf16.msra.mxu0 0
    %3822 = vmatprep.subr.bf16.mxu0 0
    %3823 = vmatpush1.bf16.msra.mxu0 0
    %3824 = vmatprep.subr.bf16.mxu0 0
    %3825 = vmatpush1.bf16.msra.mxu0 0
    %3826 = vmatprep.mubr.bf16.mxu0 0
    %3827 = vmatmul.mubr.bf16.gmra.mrb[0].mxu0 %v3792
    %v3828 = vpop.f32.mrb[0].mxu0
    %v3829 = vadd.f32 0.0, %v3828
    %v3830 = vpop.f32.mrb[0].mxu0
    %v3831 = vpop.f32.mrb[0].mxu0
    %v3832 = vadd.f32 0.0, %v3831
    %v3833 = vpop.f32.mrb[0].mxu0
    %3834 = vdwg.mxu0
    %v3835 = vadd.f32 %v3775, %v3829
    %v3836 = vadd.f32 %v3776, %v3832
    %s3837 = scalar_lea.vmem %s1, 480
    %v3838 = vld [vmem:[%s3837] sm:$0xf]
    %v3839 = vld [vmem:[%s3837 + $0x4] sm:$0xf]
    %v3842 = vunpack.c.l.b16 %v3838
    %v3843 = vunpack.c.l.b16 %v3839
    %v3844 = vpack.c.b16 %v3843, %v3842
    %3845 = vrot.lane.b32.xlu0 %v3610, 91
    %v3846 = vpop.permute.xlu0 %3845
    %3847 = vrot.lane.b32.xlu0 %v3611, 91
    %v3848 = vpop.permute.xlu0 %3847
    %v3852 = vsel %vm48, %v3844, 0
    %3854 = vmatprep.subr.bf16.mxu0 0
    %3855 = vmatpush1.bf16.msra.mxu0 %v3846
    %3856 = vmatprep.subr.bf16.mxu0 0
    %3857 = vmatpush1.bf16.msra.mxu0 %v3848
    %3858 = vmatprep.subr.bf16.mxu0 0
    %3859 = vmatpush1.bf16.msra.mxu0 0
    %3860 = vmatprep.subr.bf16.mxu0 0
    %3861 = vmatpush1.bf16.msra.mxu0 0
    %3862 = vmatprep.subr.bf16.mxu0 0
    %3863 = vmatpush1.bf16.msra.mxu0 0
    %3864 = vmatprep.subr.bf16.mxu0 0
    %3865 = vmatpush1.bf16.msra.mxu0 0
    %3866 = vmatprep.subr.bf16.mxu0 0
    %3867 = vmatpush1.bf16.msra.mxu0 0
    %3868 = vmatprep.subr.bf16.mxu0 0
    %3869 = vmatpush1.bf16.msra.mxu0 0
    %3870 = vmatprep.subr.bf16.mxu0 0
    %3871 = vmatpush1.bf16.msra.mxu0 0
    %3872 = vmatprep.subr.bf16.mxu0 0
    %3873 = vmatpush1.bf16.msra.mxu0 0
    %3874 = vmatprep.subr.bf16.mxu0 0
    %3875 = vmatpush1.bf16.msra.mxu0 0
    %3876 = vmatprep.subr.bf16.mxu0 0
    %3877 = vmatpush1.bf16.msra.mxu0 0
    %3878 = vmatprep.subr.bf16.mxu0 0
    %3879 = vmatpush1.bf16.msra.mxu0 0
    %3880 = vmatprep.subr.bf16.mxu0 0
    %3881 = vmatpush1.bf16.msra.mxu0 0
    %3882 = vmatprep.subr.bf16.mxu0 0
    %3883 = vmatpush1.bf16.msra.mxu0 0
    %3884 = vmatprep.subr.bf16.mxu0 0
    %3885 = vmatpush1.bf16.msra.mxu0 0
    %3886 = vmatprep.mubr.bf16.mxu0 0
    %3887 = vmatmul.mubr.bf16.gmra.mrb[0].mxu0 %v3852
    %v3888 = vpop.f32.mrb[0].mxu0
    %v3889 = vadd.f32 0.0, %v3888
    %v3890 = vpop.f32.mrb[0].mxu0
    %v3891 = vpop.f32.mrb[0].mxu0
    %v3892 = vadd.f32 0.0, %v3891
    %v3893 = vpop.f32.mrb[0].mxu0
    %3894 = vdwg.mxu0
    %v3895 = vadd.f32 %v3835, %v3889
    %v3896 = vadd.f32 %v3836, %v3892
    %s3897 = scalar_lea.vmem %s1, 488
    %v3898 = vld [vmem:[%s3897] sm:$0xf]
    %v3899 = vld [vmem:[%s3897 + $0x4] sm:$0xf]
    %v3902 = vunpack.c.l.b16 %v3898
    %v3903 = vunpack.c.l.b16 %v3899
    %v3904 = vpack.c.b16 %v3903, %v3902
    %3905 = vrot.lane.b32.xlu0 %v3610, 90
    %v3906 = vpop.permute.xlu0 %3905
    %3907 = vrot.lane.b32.xlu0 %v3611, 90
    %v3908 = vpop.permute.xlu0 %3907
    %v3912 = vsel %vm48, %v3904, 0
    %3914 = vmatprep.subr.bf16.mxu0 0
    %3915 = vmatpush1.bf16.msra.mxu0 %v3906
    %3916 = vmatprep.subr.bf16.mxu0 0
    %3917 = vmatpush1.bf16.msra.mxu0 %v3908
    %3918 = vmatprep.subr.bf16.mxu0 0
    %3919 = vmatpush1.bf16.msra.mxu0 0
    %3920 = vmatprep.subr.bf16.mxu0 0
    %3921 = vmatpush1.bf16.msra.mxu0 0
    %3922 = vmatprep.subr.bf16.mxu0 0
    %3923 = vmatpush1.bf16.msra.mxu0 0
    %3924 = vmatprep.subr.bf16.mxu0 0
    %3925 = vmatpush1.bf16.msra.mxu0 0
    %3926 = vmatprep.subr.bf16.mxu0 0
    %3927 = vmatpush1.bf16.msra.mxu0 0
    %3928 = vmatprep.subr.bf16.mxu0 0
    %3929 = vmatpush1.bf16.msra.mxu0 0
    %3930 = vmatprep.subr.bf16.mxu0 0
    %3931 = vmatpush1.bf16.msra.mxu0 0
    %3932 = vmatprep.subr.bf16.mxu0 0
    %3933 = vmatpush1.bf16.msra.mxu0 0
    %3934 = vmatprep.subr.bf16.mxu0 0
    %3935 = vmatpush1.bf16.msra.mxu0 0
    %3936 = vmatprep.subr.bf16.mxu0 0
    %3937 = vmatpush1.bf16.msra.mxu0 0
    %3938 = vmatprep.subr.bf16.mxu0 0
    %3939 = vmatpush1.bf16.msra.mxu0 0
    %3940 = vmatprep.subr.bf16.mxu0 0
    %3941 = vmatpush1.bf16.msra.mxu0 0
    %3942 = vmatprep.subr.bf16.mxu0 0
    %3943 = vmatpush1.bf16.msra.mxu0 0
    %3944 = vmatprep.subr.bf16.mxu0 0
    %3945 = vmatpush1.bf16.msra.mxu0 0
    %3946 = vmatprep.mubr.bf16.mxu0 0
    %3947 = vmatmul.mubr.bf16.gmra.mrb[0].mxu0 %v3912
    %v3948 = vpop.f32.mrb[0].mxu0
    %v3949 = vadd.f32 0.0, %v3948
    %v3950 = vpop.f32.mrb[0].mxu0
    %v3951 = vpop.f32.mrb[0].mxu0
    %v3952 = vadd.f32 0.0, %v3951
    %v3953 = vpop.f32.mrb[0].mxu0
    %3954 = vdwg.mxu0
    %v3955 = vadd.f32 %v3895, %v3949
    %v3956 = vadd.f32 %v3896, %v3952
    %s3957 = scalar_lea.vmem %s1, 496
    %v3958 = vld [vmem:[%s3957] sm:$0xf]
    %v3959 = vld [vmem:[%s3957 + $0x4] sm:$0xf]
    %v3962 = vunpack.c.l.b16 %v3958
    %v3963 = vunpack.c.l.b16 %v3959
    %v3964 = vpack.c.b16 %v3963, %v3962
    %3965 = vrot.lane.b32.xlu0 %v3610, 87
    %v3966 = vpop.permute.xlu0 %3965
    %3967 = vrot.lane.b32.xlu0 %v3611, 87
    %v3968 = vpop.permute.xlu0 %3967
    %v3972 = vsel %vm48, %v3964, 0
    %3974 = vmatprep.subr.bf16.mxu0 0
    %3975 = vmatpush1.bf16.msra.mxu0 %v3966
    %3976 = vmatprep.subr.bf16.mxu0 0
    %3977 = vmatpush1.bf16.msra.mxu0 %v3968
    %3978 = vmatprep.subr.bf16.mxu0 0
    %3979 = vmatpush1.bf16.msra.mxu0 0
    %3980 = vmatprep.subr.bf16.mxu0 0
    %3981 = vmatpush1.bf16.msra.mxu0 0
    %3982 = vmatprep.subr.bf16.mxu0 0
    %3983 = vmatpush1.bf16.msra.mxu0 0
    %3984 = vmatprep.subr.bf16.mxu0 0
    %3985 = vmatpush1.bf16.msra.mxu0 0
    %3986 = vmatprep.subr.bf16.mxu0 0
    %3987 = vmatpush1.bf16.msra.mxu0 0
    %3988 = vmatprep.subr.bf16.mxu0 0
    %3989 = vmatpush1.bf16.msra.mxu0 0
    %3990 = vmatprep.subr.bf16.mxu0 0
    %3991 = vmatpush1.bf16.msra.mxu0 0
    %3992 = vmatprep.subr.bf16.mxu0 0
    %3993 = vmatpush1.bf16.msra.mxu0 0
    %3994 = vmatprep.subr.bf16.mxu0 0
    %3995 = vmatpush1.bf16.msra.mxu0 0
    %3996 = vmatprep.subr.bf16.mxu0 0
    %3997 = vmatpush1.bf16.msra.mxu0 0
    %3998 = vmatprep.subr.bf16.mxu0 0
    %3999 = vmatpush1.bf16.msra.mxu0 0
    %4000 = vmatprep.subr.bf16.mxu0 0
    %4001 = vmatpush1.bf16.msra.mxu0 0
    %4002 = vmatprep.subr.bf16.mxu0 0
    %4003 = vmatpush1.bf16.msra.mxu0 0
    %4004 = vmatprep.subr.bf16.mxu0 0
    %4005 = vmatpush1.bf16.msra.mxu0 0
    %4006 = vmatprep.mubr.bf16.mxu0 0
    %4007 = vmatmul.mubr.bf16.gmra.mrb[0].mxu0 %v3972
    %v4008 = vpop.f32.mrb[0].mxu0
    %v4009 = vadd.f32 0.0, %v4008
    %v4010 = vpop.f32.mrb[0].mxu0
    %v4011 = vpop.f32.mrb[0].mxu0
    %v4012 = vadd.f32 0.0, %v4011
    %v4013 = vpop.f32.mrb[0].mxu0
    %4014 = vdwg.mxu0
    %v4015 = vadd.f32 %v3955, %v4009
    %v4016 = vadd.f32 %v3956, %v4012
    %s4017 = scalar_lea.vmem %s1, 504
    %v4018 = vld [vmem:[%s4017] sm:$0xf]
    %v4019 = vld [vmem:[%s4017 + $0x4] sm:$0xf]
    %v4022 = vunpack.c.l.b16 %v4018
    %v4023 = vunpack.c.l.b16 %v4019
    %v4024 = vpack.c.b16 %v4023, %v4022
    %4025 = vrot.lane.b32.xlu0 %v3610, 86
    %v4026 = vpop.permute.xlu0 %4025
    %4027 = vrot.lane.b32.xlu0 %v3611, 86
    %v4028 = vpop.permute.xlu0 %4027
    %v4032 = vsel %vm48, %v4024, 0
    %4034 = vmatprep.subr.bf16.mxu0 0
    %4035 = vmatpush1.bf16.msra.mxu0 %v4026
    %4036 = vmatprep.subr.bf16.mxu0 0
    %4037 = vmatpush1.bf16.msra.mxu0 %v4028
    %4038 = vmatprep.subr.bf16.mxu0 0
    %4039 = vmatpush1.bf16.msra.mxu0 0
    %4040 = vmatprep.subr.bf16.mxu0 0
    %4041 = vmatpush1.bf16.msra.mxu0 0
    %4042 = vmatprep.subr.bf16.mxu0 0
    %4043 = vmatpush1.bf16.msra.mxu0 0
    %4044 = vmatprep.subr.bf16.mxu0 0
    %4045 = vmatpush1.bf16.msra.mxu0 0
    %4046 = vmatprep.subr.bf16.mxu0 0
    %4047 = vmatpush1.bf16.msra.mxu0 0
    %4048 = vmatprep.subr.bf16.mxu0 0
    %4049 = vmatpush1.bf16.msra.mxu0 0
    %4050 = vmatprep.subr.bf16.mxu0 0
    %4051 = vmatpush1.bf16.msra.mxu0 0
    %4052 = vmatprep.subr.bf16.mxu0 0
    %4053 = vmatpush1.bf16.msra.mxu0 0
    %4054 = vmatprep.subr.bf16.mxu0 0
    %4055 = vmatpush1.bf16.msra.mxu0 0
    %4056 = vmatprep.subr.bf16.mxu0 0
    %4057 = vmatpush1.bf16.msra.mxu0 0
    %4058 = vmatprep.subr.bf16.mxu0 0
    %4059 = vmatpush1.bf16.msra.mxu0 0
    %4060 = vmatprep.subr.bf16.mxu0 0
    %4061 = vmatpush1.bf16.msra.mxu0 0
    %4062 = vmatprep.subr.bf16.mxu0 0
    %4063 = vmatpush1.bf16.msra.mxu0 0
    %4064 = vmatprep.subr.bf16.mxu0 0
    %4065 = vmatpush1.bf16.msra.mxu0 0
    %4066 = vmatprep.mubr.bf16.mxu0 0
    %4067 = vmatmul.mubr.bf16.gmra.mrb[0].mxu0 %v4032
    %v4068 = vpop.f32.mrb[0].mxu0
    %v4069 = vadd.f32 0.0, %v4068
    %v4070 = vpop.f32.mrb[0].mxu0
    %v4071 = vpop.f32.mrb[0].mxu0
    %v4072 = vadd.f32 0.0, %v4071
    %v4073 = vpop.f32.mrb[0].mxu0
    %4074 = vdwg.mxu0
    %v4075 = vadd.f32 %v4015, %v4069
    %v4076 = vadd.f32 %v4016, %v4072
    %v4077 = vadd.f32 %v4075, %v507
    %v4078 = vadd.f32 %v4076, %v512
    %vm4079 = vcmp.ge.f32.partialorder %v4077, 0.0
    %vm4080 = vcmp.ge.f32.partialorder %v4078, 0.0
    %v4081 = vmul.f32 %v4077, 0.2
    %v4082 = vmul.f32 %v4078, 0.2
    %v4083 = vsel %vm4079, %v4077, %v4081
    %v4084 = vsel %vm4080, %v4078, %v4082
    %v4085 = vpack.c.bf16 %v4084, %v4083
    %v4087 = vunpack.c.l.b16 %v4085
    %v4088 = vunpack.c.h.b16 %v4085
    %v4089 = vpack.c.b16 %v4087, %v4087
    %v4090 = vpack.c.b16 %v4088, %v4088
    %s4093 = scalar_lea.vmem [#allocation2], 56
    %4094 = vst.msk [vmem:[%s4093] sm:$0xf] %vm530, %v4089
    %4095 = vst.msk [vmem:[%s4093 + $0x4] sm:$0xf] %vm530, %v4090
    // Predicated region
    $region14: #{tpu_custom_call.1} parent=1 // pred_check
      _
    $region15: #{tpu_custom_call.1} parent=1 // pred_check_branch
      %4097 = sbr.rel (0) target = $region17
    $region16: #{tpu_custom_call.1} parent=1 // pred_region
      %s4099 = ssub.s32 1024, 1024
      %4100 = vsyncadd [#allocation3], %s4099
      %s4101 = sshll.u32 [#allocation2], 4
      %s4102 = int_to_ptr.vmem [resolvable:$true] %s4101
      %4107 = dma.vmem_to_hbm [thread:$0]  %s4102, 1024, %s3, [#allocation3], 64, 64, 4
    $region17: #{tpu_custom_call.1} parent=1 // pred_fallthru
      _
    // Predicated region
    $region18: #{tpu_custom_call.1} parent=1 // pred_check
      _
    $region19: #{tpu_custom_call.1} parent=1 // pred_check_branch
      %4109 = sbr.rel (0) target = $region21
    $region20: #{tpu_custom_call.1} parent=1 // pred_region
      %4110 = dma.done [#allocation3], 1024
    $region21: #{tpu_custom_call.1} parent=1 // pred_fallthru
      _
    %4111 = vsyncpa [#allocation3], 1

</llo_original>
